<compile_context>
chip_gen: v7x
topology: tpu7x:2x2x1
jax: 0.10.0
libtpu: 0.0.40
codegen_flags: <defaults>
</compile_context>

<pallas_src>
import math
import functools

import jax
import jax.numpy as jnp
from jax.experimental import pallas as pl
from jax.experimental.pallas import tpu as pltpu


# rows of the packed per-layer vector slab (shape (L, 9, D), f32)
VEC_BO_SELF, VEC_BO_CROSS, VEC_B2 = 0, 1, 2
VEC_G1, VEC_BE1, VEC_G2, VEC_BE2, VEC_G3, VEC_BE3 = 3, 4, 5, 6, 7, 8


# ---------------------------------------------------------------------------
# math shared by the Pallas kernel and the pure-JAX reference
# ---------------------------------------------------------------------------
def _layer_norm(x, gamma, beta, eps=1e-5):
    mean = jnp.mean(x, axis=-1, keepdims=True)
    var = jnp.mean(jnp.square(x - mean), axis=-1, keepdims=True)
    return (x - mean) * jax.lax.rsqrt(var + eps) * gamma + beta


def _mha(x_q, x_kv, w, bo, *, causal, num_heads, head_dim, use_pl_recip):
    """Multi-head attention.  w: (D, 4D) bf16 with columns [Wq | Wk | Wv | Wout]."""
    B, Sq, D = x_q.shape
    Sk = x_kv.shape[1]
    H, hd = num_heads, head_dim
    scale = 1.0 / math.sqrt(hd)

    xq2 = x_q.reshape(B * Sq, D).astype(jnp.bfloat16)
    wqkv = w[:, : 3 * D]
    wo = w[:, 3 * D:]

    if x_q is x_kv:
        # self-attention: ONE fused (B*S, D) x (D, 3D) projection
        qkv = jnp.dot(xq2, wqkv, preferred_element_type=jnp.float32)
        q = qkv[:, :D]
        k = qkv[:, D:2 * D]
        v = qkv[:, 2 * D:]
    else:
        # cross-attention: Q from decoder rows, fused K|V from encoder rows
        xk2 = x_kv.reshape(B * Sk, D).astype(jnp.bfloat16)
        q = jnp.dot(xq2, wqkv[:, :D], preferred_element_type=jnp.float32)
        kv = jnp.dot(xk2, wqkv[:, D:], preferred_element_type=jnp.float32)
        k = kv[:, :D]
        v = kv[:, D:]

    q = q.reshape(B, Sq, D).astype(jnp.bfloat16)
    k = k.reshape(B, Sk, D).astype(jnp.bfloat16)
    v = v.reshape(B, Sk, D).astype(jnp.bfloat16)

    # causal mask built once (hoisted out of the per-head loop); additive -1e30
    if causal:
        row = jax.lax.broadcasted_iota(jnp.int32, (Sq, Sk), 0)
        col = jax.lax.broadcasted_iota(jnp.int32, (Sq, Sk), 1)
        neg_mask = jnp.where(col > row, -1e30, 0.0).astype(jnp.float32)

    # per-head score / value contractions (intrinsically head_dim-narrow).
    head_outs = []
    for h in range(H):
        sl = slice(h * hd, (h + 1) * hd)
        s = jnp.einsum('bqd,bkd->bqk', q[..., sl], k[..., sl],
                       preferred_element_type=jnp.float32) * scale
        if causal:
            s = s + neg_mask
        s = s - jnp.max(s, axis=-1, keepdims=True)
        p = jnp.exp(s)
        denom = jnp.sum(p, axis=-1, keepdims=True)
        if use_pl_recip:
            p = p * pl.reciprocal(denom, approx=True)
        else:
            p = p / denom
        head_outs.append(
            jnp.einsum('bqk,bkd->bqd', p.astype(jnp.bfloat16), v[..., sl],
                       preferred_element_type=jnp.float32))

    # lane-concat head outputs (overlaps MXU) + ONE K=D output projection
    o = jnp.concatenate(head_outs, axis=-1).astype(jnp.bfloat16)
    out = jnp.dot(o.reshape(B * Sq, D), wo,
                  preferred_element_type=jnp.float32) + bo
    return out.reshape(B, Sq, D)


def _block_math(x, enc, attn_w, w1, w2, b1, vec, *, num_heads, head_dim,
                use_pl_recip):
    """One DecoderBlock forward.  x: (B,Sd,D) f32, enc: (B,Se,D) bf16."""
    B, Sd, D = x.shape

    def row(i):                      # (1, D) f32 vector from the packed slab
        return vec[i:i + 1]

    # masked multi-head self-attention + residual + layer norm 1
    attn = _mha(x, x, attn_w[0], row(VEC_BO_SELF), causal=True,
                num_heads=num_heads, head_dim=head_dim,
                use_pl_recip=use_pl_recip)
    x = _layer_norm(attn + x, row(VEC_G1), row(VEC_BE1))

    # cross attention (query = x, key/value = encoder) + residual + LN2
    attn = _mha(x, enc, attn_w[1], row(VEC_BO_CROSS), causal=False,
                num_heads=num_heads, head_dim=head_dim,
                use_pl_recip=use_pl_recip)
    x = _layer_norm(attn + x, row(VEC_G2), row(VEC_BE2))

    # feed-forward (flattened rows, full-width matmuls) + residual + LN3
    x2 = x.reshape(B * Sd, D).astype(jnp.bfloat16)
    h = jnp.maximum(
        jnp.dot(x2, w1, preferred_element_type=jnp.float32) + b1, 0.0)
    ff = (jnp.dot(h.astype(jnp.bfloat16), w2,
                  preferred_element_type=jnp.float32) + row(VEC_B2))
    x = _layer_norm(ff.reshape(B, Sd, D) + x, row(VEC_G3), row(VEC_BE3))
    return x


# ---------------------------------------------------------------------------
# Pallas kernel: full decoder stack, grid = (batch_tiles, layers)
# ---------------------------------------------------------------------------
def decoder_stack_kernel(dec_ref, enc_ref, attn_w_ref, w1_ref, w2_ref,
                         b1_ref, vec_ref, out_ref, x_scr,
                         *, num_heads, head_dim):
    layer = pl.program_id(1)

    @pl.when(layer == 0)
    def _():
        x_scr[...] = dec_ref[...].astype(jnp.float32)

    x = x_scr[...]                       # resident f32 activation
    enc = enc_ref[...]                   # bf16, consumed directly by matmuls

    attn_w = attn_w_ref[0]               # (2, D, 4D) bf16
    w1 = w1_ref[0]                       # (D, F) bf16
    w2 = w2_ref[0]                       # (F, D) bf16
    b1 = b1_ref[0]                       # (1, F) f32
    vec = vec_ref[0]                     # (9, D) f32

    y = _block_math(x, enc, attn_w, w1, w2, b1, vec,
                    num_heads=num_heads, head_dim=head_dim, use_pl_recip=True)
    x_scr[...] = y

    @pl.when(layer == pl.num_programs(1) - 1)
    def _():
        out_ref[...] = y.astype(out_ref.dtype)


def decoder_forward(dec, enc, params, *, num_heads, head_dim, batch_tile=None):
    B, Sd, D = dec.shape
    _, Se, _ = enc.shape
    attn_w, w1, w2, b1, vec = (params["attn_w"], params["w1"], params["w2"],
                               params["b1"], params["vec"])
    L = attn_w.shape[0]
    F = w1.shape[-1]
    H, hd = num_heads, head_dim
    if batch_tile is None:
        batch_tile = B
    assert B % batch_tile == 0

    dec_bf = dec.astype(jnp.bfloat16)
    enc_bf = enc.astype(jnp.bfloat16)

    # rough cost estimate (helps XLA schedule around the fused multi-layer call)
    per_layer_flops = (
        2 * B * Sd * D * (3 * D)            # self qkv projection
        + 2 * B * H * Sd * Sd * hd * 2      # self scores + pv
        + 2 * B * Sd * D * D                # self out projection
        + 2 * B * Sd * D * D                # cross q projection
        + 2 * B * Se * D * (2 * D)          # cross k|v projection
        + 2 * B * H * Sd * Se * hd * 2      # cross scores + pv
        + 2 * B * Sd * D * D                # cross out projection
        + 2 * B * Sd * D * F * 2            # feed-forward
    )
    arrays = (dec_bf, enc_bf, attn_w, w1, w2, b1, vec)
    cost = pl.CostEstimate(
        flops=L * per_layer_flops,
        transcendentals=L * B * H * Sd * (Sd + Se),
        bytes_accessed=(B * Sd * D * 4
                        + sum(a.size * a.dtype.itemsize for a in arrays)))

    kernel = functools.partial(decoder_stack_kernel,
                               num_heads=num_heads, head_dim=head_dim)
    return pl.pallas_call(
        kernel,
        out_shape=jax.ShapeDtypeStruct((B, Sd, D), dec.dtype),
        grid=(B // batch_tile, L),
        in_specs=[
            pl.BlockSpec((batch_tile, Sd, D), lambda b, l: (b, 0, 0)),     # dec
            pl.BlockSpec((batch_tile, Se, D), lambda b, l: (b, 0, 0)),     # enc
            pl.BlockSpec((1, 2, D, 4 * D), lambda b, l: (l, 0, 0, 0)),     # attn_w
            pl.BlockSpec((1, D, F), lambda b, l: (l, 0, 0)),               # w1
            pl.BlockSpec((1, F, D), lambda b, l: (l, 0, 0)),               # w2
            pl.BlockSpec((1, 1, F), lambda b, l: (l, 0, 0)),               # b1
            pl.BlockSpec((1, 9, D), lambda b, l: (l, 0, 0)),               # vec slab
        ],
        out_specs=pl.BlockSpec((batch_tile, Sd, D), lambda b, l: (b, 0, 0)),
        scratch_shapes=[pltpu.VMEM((batch_tile, Sd, D), jnp.float32)],
        compiler_params=pltpu.CompilerParams(
            dimension_semantics=("parallel", "arbitrary"),
            vmem_limit_bytes=32 * 1024 * 1024),
        cost_estimate=cost,
    )(dec_bf, enc_bf, attn_w, w1, w2, b1, vec)


# ---------------------------------------------------------------------------
# pure-JAX reference (same math / same bf16 weights, exact division, no Pallas)
# ---------------------------------------------------------------------------
def decoder_reference(dec, enc, params, *, num_heads, head_dim):
    L = params["attn_w"].shape[0]
    x = dec.astype(jnp.bfloat16).astype(jnp.float32)   # match kernel input cast
    enc_bf = enc.astype(jnp.bfloat16)
    for l in range(L):
        x = _block_math(x, enc_bf, params["attn_w"][l], params["w1"][l],
                        params["w2"][l], params["b1"][l], params["vec"][l],
                        num_heads=num_heads, head_dim=head_dim,
                        use_pl_recip=False)
    return x.astype(dec.dtype)


# ---------------------------------------------------------------------------
# deterministic parameter initialization (packed / fused layout)
#   attn_w[l, 0] = [Wq|Wk|Wv|Wout] of the masked self-attention (columns per head)
#   attn_w[l, 1] = [Wq|Wk|Wv|Wout] of the cross-attention
#   vec rows: bo_self, bo_cross, b2, g1, be1, g2, be2, g3, be3
# ---------------------------------------------------------------------------
def init_stacked_params(key, num_blocks, model_dim, expansion_dim):
    D, F, L = model_dim, expansion_dim, num_blocks
    keys = jax.random.split(key, 7)

    def bf16_rand(k, shape):
        return (jax.random.normal(k, shape, jnp.float32) * 0.05).astype(jnp.bfloat16)

    attn_w = bf16_rand(keys[0], (L, 2, D, 4 * D))
    w1 = bf16_rand(keys[1], (L, D, F))
    w2 = bf16_rand(keys[2], (L, F, D))
    b1 = jax.random.normal(keys[3], (L, 1, F), jnp.float32) * 0.05

    vec = jnp.zeros((L, 9, D), jnp.float32)
    vec = vec.at[:, VEC_BO_SELF].set(
        jax.random.normal(keys[4], (L, D), jnp.float32) * 0.05)
    vec = vec.at[:, VEC_BO_CROSS].set(
        jax.random.normal(keys[5], (L, D), jnp.float32) * 0.05)
    vec = vec.at[:, VEC_B2].set(
        jax.random.normal(keys[6], (L, D), jnp.float32) * 0.05)
    vec = vec.at[:, VEC_G1].set(1.0)    # LayerNorm gammas = 1, betas = 0
    vec = vec.at[:, VEC_G2].set(1.0)
    vec = vec.at[:, VEC_G3].set(1.0)
    return {"attn_w": attn_w, "w1": w1, "w2": w2, "b1": b1, "vec": vec}


# ---------------------------------------------------------------------------
if __name__ == "__main__":
    B, DEC_S, ENC_S = 2, 8, 8
    MODEL_DIM, NUM_HEADS, EXPANSION_DIM, NUM_BLOCKS = 128, 4, 256, 2
    HEAD_DIM = MODEL_DIM // NUM_HEADS

    key = jax.random.PRNGKey(0)
    k_dec, k_enc, k_par = jax.random.split(key, 3)
    decoder_input = jax.random.normal(k_dec, (B, DEC_S, MODEL_DIM), jnp.float32)
    encoder_output = jax.random.normal(k_enc, (B, ENC_S, MODEL_DIM), jnp.float32)

    params = init_stacked_params(k_par, NUM_BLOCKS, MODEL_DIM, EXPANSION_DIM)

    out = decoder_forward(decoder_input, encoder_output, params,
                          num_heads=NUM_HEADS, head_dim=HEAD_DIM,
                          batch_tile=1)      # exercises the parallel batch axis
    out = jax.block_until_ready(out)

    ref = decoder_reference(decoder_input, encoder_output, params,
                            num_heads=NUM_HEADS, head_dim=HEAD_DIM)
    ref = jax.block_until_ready(ref)

    assert out.shape == (B, DEC_S, MODEL_DIM)
    # tolerance absorbs the approx-reciprocal softmax denominator in the kernel
    assert jnp.allclose(out, ref, atol=2e-2, rtol=2e-2), "mismatch vs reference"
    print("KERNEL_OK")
</pallas_src>

<mosaic_0001>
module attributes {stable_mosaic.version = 11 : i64} {
  func.func @decoder_stack_kernel(%arg0: i32, %arg1: i32, %arg2: memref<1x8x128xbf16, #tpu.memory_space<vmem>>, %arg3: memref<1x8x128xbf16, #tpu.memory_space<vmem>>, %arg4: memref<1x2x128x512xbf16, #tpu.memory_space<vmem>>, %arg5: memref<1x128x256xbf16, #tpu.memory_space<vmem>>, %arg6: memref<1x256x128xbf16, #tpu.memory_space<vmem>>, %arg7: memref<1x1x256xf32, #tpu.memory_space<vmem>>, %arg8: memref<1x9x128xf32, #tpu.memory_space<vmem>>, %arg9: memref<1x8x128xf32, #tpu.memory_space<vmem>>, %arg10: memref<1x8x128xf32, #tpu.memory_space<vmem>>) attributes {dimension_semantics = [#tpu.dimension_semantics<parallel>, #tpu.dimension_semantics<arbitrary>], iteration_bounds = array<i64: 2, 2>, scalar_prefetch = 0 : i64, scratch_operands = 1 : i64, tpu.core_type = #tpu.core_type<tc>, window_params = [{transform_indices = @transform_0, window_bounds = array<i64: 1, 8, 128>}, {transform_indices = @transform_1, window_bounds = array<i64: 1, 8, 128>}, {transform_indices = @transform_2, window_bounds = array<i64: 1, 2, 128, 512>}, {transform_indices = @transform_3, window_bounds = array<i64: 1, 128, 256>}, {transform_indices = @transform_4, window_bounds = array<i64: 1, 256, 128>}, {transform_indices = @transform_5, window_bounds = array<i64: 1, 1, 256>}, {transform_indices = @transform_6, window_bounds = array<i64: 1, 9, 128>}, {transform_indices = @transform_7, window_bounds = array<i64: 1, 8, 128>}]} {
    %c0_i32 = arith.constant 0 : i32
    %0 = arith.cmpi eq, %arg1, %c0_i32 : i32
    %1 = arith.extui %0 : i1 to i32
    %c0_i32_0 = arith.constant 0 : i32
    %2 = arith.cmpi ne, %1, %c0_i32_0 : i32
    scf.if %2 {
      %c0_90 = arith.constant 0 : index
      %c0_91 = arith.constant 0 : index
      %c0_92 = arith.constant 0 : index
      %322 = vector.load %arg2[%c0_90, %c0_91, %c0_92] : memref<1x8x128xbf16, #tpu.memory_space<vmem>>, vector<1x8x128xbf16>
      %323 = arith.extf %322 : vector<1x8x128xbf16> to vector<1x8x128xf32>
      %c0_93 = arith.constant 0 : index
      %c0_94 = arith.constant 0 : index
      %c0_95 = arith.constant 0 : index
      %324 = vector.load %arg10[%c0_93, %c0_94, %c0_95] : memref<1x8x128xf32, #tpu.memory_space<vmem>>, vector<1x8x128xf32>
      tpu.vector_store %arg10[%c0_93, %c0_94, %c0_95], %323 {strides = array<i32>} : memref<1x8x128xf32, #tpu.memory_space<vmem>>, vector<1x8x128xf32>,
    } else {
    }
    %c0 = arith.constant 0 : index
    %c0_1 = arith.constant 0 : index
    %c0_2 = arith.constant 0 : index
    %3 = vector.load %arg10[%c0, %c0_1, %c0_2] : memref<1x8x128xf32, #tpu.memory_space<vmem>>, vector<1x8x128xf32>
    %c0_3 = arith.constant 0 : index
    %c0_4 = arith.constant 0 : index
    %c0_5 = arith.constant 0 : index
    %4 = vector.load %arg3[%c0_3, %c0_4, %c0_5] : memref<1x8x128xbf16, #tpu.memory_space<vmem>>, vector<1x8x128xbf16>
    %c0_6 = arith.constant 0 : index
    %c0_7 = arith.constant 0 : index
    %c0_8 = arith.constant 0 : index
    %c0_9 = arith.constant 0 : index
    %5 = vector.load %arg4[%c0_6, %c0_7, %c0_8, %c0_9] : memref<1x2x128x512xbf16, #tpu.memory_space<vmem>>, vector<1x2x128x512xbf16>
    %6 = vector.shape_cast %5 : vector<1x2x128x512xbf16> to vector<2x128x512xbf16>
    %c0_10 = arith.constant 0 : index
    %c0_11 = arith.constant 0 : index
    %c0_12 = arith.constant 0 : index
    %7 = vector.load %arg5[%c0_10, %c0_11, %c0_12] : memref<1x128x256xbf16, #tpu.memory_space<vmem>>, vector<1x128x256xbf16>
    %8 = vector.shape_cast %7 : vector<1x128x256xbf16> to vector<128x256xbf16>
    %c0_13 = arith.constant 0 : index
    %c0_14 = arith.constant 0 : index
    %c0_15 = arith.constant 0 : index
    %9 = vector.load %arg6[%c0_13, %c0_14, %c0_15] : memref<1x256x128xbf16, #tpu.memory_space<vmem>>, vector<1x256x128xbf16>
    %10 = vector.shape_cast %9 : vector<1x256x128xbf16> to vector<256x128xbf16>
    %c0_16 = arith.constant 0 : index
    %c0_17 = arith.constant 0 : index
    %c0_18 = arith.constant 0 : index
    %11 = vector.load %arg7[%c0_16, %c0_17, %c0_18] : memref<1x1x256xf32, #tpu.memory_space<vmem>>, vector<1x1x256xf32>
    %12 = vector.shape_cast %11 : vector<1x1x256xf32> to vector<1x256xf32>
    %c0_19 = arith.constant 0 : index
    %c0_20 = arith.constant 0 : index
    %c0_21 = arith.constant 0 : index
    %13 = vector.load %arg8[%c0_19, %c0_20, %c0_21] : memref<1x9x128xf32, #tpu.memory_space<vmem>>, vector<1x9x128xf32>
    %14 = vector.shape_cast %13 : vector<1x9x128xf32> to vector<9x128xf32>
    %15 = vector.extract_strided_slice %6 {offsets = [0, 0, 0], sizes = [1, 128, 512], strides = [1, 1, 1]} : vector<2x128x512xbf16> to vector<1x128x512xbf16>
    %16 = vector.shape_cast %15 : vector<1x128x512xbf16> to vector<128x512xbf16>
    %17 = vector.extract_strided_slice %14 {offsets = [0, 0], sizes = [1, 128], strides = [1, 1]} : vector<9x128xf32> to vector<1x128xf32>
    %18 = vector.shape_cast %3 : vector<1x8x128xf32> to vector<8x128xf32>
    %19 = arith.truncf %18 : vector<8x128xf32> to vector<8x128xbf16>
    %20 = vector.extract_strided_slice %16 {offsets = [0, 0], sizes = [128, 384], strides = [1, 1]} : vector<128x512xbf16> to vector<128x384xbf16>
    %21 = vector.extract_strided_slice %16 {offsets = [0, 384], sizes = [128, 128], strides = [1, 1]} : vector<128x512xbf16> to vector<128x128xbf16>
    %cst = arith.constant dense<0.000000e+00> : vector<8x384xf32>
    %22 = tpu.matmul %19, %20, %cst {dimension_numbers = #tpu.dot_dimension_numbers<[1], [0], [0], [1], [0, 0, 1, 1], [], []>} : vector<8x128xbf16>, vector<128x384xbf16>, vector<8x384xf32> -> vector<8x384xf32>
    %23 = vector.extract_strided_slice %22 {offsets = [0, 0], sizes = [8, 128], strides = [1, 1]} : vector<8x384xf32> to vector<8x128xf32>
    %24 = vector.extract_strided_slice %22 {offsets = [0, 128], sizes = [8, 128], strides = [1, 1]} : vector<8x384xf32> to vector<8x128xf32>
    %25 = vector.extract_strided_slice %22 {offsets = [0, 256], sizes = [8, 128], strides = [1, 1]} : vector<8x384xf32> to vector<8x128xf32>
    %26 = vector.shape_cast %23 : vector<8x128xf32> to vector<1x8x128xf32>
    %27 = arith.truncf %26 : vector<1x8x128xf32> to vector<1x8x128xbf16>
    %28 = vector.shape_cast %24 : vector<8x128xf32> to vector<1x8x128xf32>
    %29 = arith.truncf %28 : vector<1x8x128xf32> to vector<1x8x128xbf16>
    %30 = vector.shape_cast %25 : vector<8x128xf32> to vector<1x8x128xf32>
    %31 = arith.truncf %30 : vector<1x8x128xf32> to vector<1x8x128xbf16>
    %32 = tpu.iota {dimensions = array<i32: 0>} : vector<8x8xi32>
    %33 = tpu.iota {dimensions = array<i32: 1>} : vector<8x8xi32>
    %34 = arith.cmpi sgt, %33, %32 : vector<8x8xi32>
    %cst_22 = arith.constant -1.000000e+30 : f32
    %cst_23 = arith.constant 0.000000e+00 : f32
    %35 = vector.broadcast %cst_22 : f32 to vector<8x8xf32>
    %36 = vector.broadcast %cst_23 : f32 to vector<8x8xf32>
    %37 = arith.select %34, %35, %36 : vector<8x8xi1>, vector<8x8xf32>
    %38 = vector.extract_strided_slice %27 {offsets = [0, 0, 0], sizes = [1, 8, 32], strides = [1, 1, 1]} : vector<1x8x128xbf16> to vector<1x8x32xbf16>
    %39 = vector.extract_strided_slice %29 {offsets = [0, 0, 0], sizes = [1, 8, 32], strides = [1, 1, 1]} : vector<1x8x128xbf16> to vector<1x8x32xbf16>
    "tpu.trace_start"() <{level = 10 : i32, message = "bqd,bkd->bqk"}> : () -> ()
    %cst_24 = arith.constant dense<0.000000e+00> : vector<1x8x8xf32>
    %40 = tpu.matmul %38, %39, %cst_24 {dimension_numbers = #tpu.dot_dimension_numbers<[2], [2], [1], [1], [0, 0, 0, 1, 1, 1], [0], [0]>} : vector<1x8x32xbf16>, vector<1x8x32xbf16>, vector<1x8x8xf32> -> vector<1x8x8xf32>
    "tpu.trace_stop"() : () -> ()
    %cst_25 = arith.constant 0.176776692 : f32
    %41 = vector.broadcast %cst_25 : f32 to vector<1x8x8xf32>
    %42 = arith.mulf %40, %41 : vector<1x8x8xf32>
    %43 = vector.shape_cast %37 : vector<8x8xf32> to vector<1x8x8xf32>
    %44 = arith.addf %42, %43 : vector<1x8x8xf32>
    %cst_26 = arith.constant dense<0xFF800000> : vector<1x8xf32>
    %45 = vector.multi_reduction <maximumf>, %44, %cst_26 [2] : vector<1x8x8xf32> to vector<1x8xf32>
    %46 = vector.shape_cast %45 : vector<1x8xf32> to vector<1x8x1xf32>
    %47 = vector.broadcast %46 : vector<1x8x1xf32> to vector<1x8x8xf32>
    %48 = arith.subf %44, %47 : vector<1x8x8xf32>
    %49 = math.exp %48 : vector<1x8x8xf32>
    %cst_27 = arith.constant dense<0.000000e+00> : vector<1x8xf32>
    %50 = vector.multi_reduction <add>, %49, %cst_27 [2] : vector<1x8x8xf32> to vector<1x8xf32>
    %51 = vector.shape_cast %50 : vector<1x8xf32> to vector<1x8x1xf32>
    %52 = tpu.reciprocal %51 {approx = true} : vector<1x8x1xf32> -> vector<1x8x1xf32>
    %53 = vector.broadcast %52 : vector<1x8x1xf32> to vector<1x8x8xf32>
    %54 = arith.mulf %49, %53 : vector<1x8x8xf32>
    %55 = arith.truncf %54 : vector<1x8x8xf32> to vector<1x8x8xbf16>
    %56 = vector.extract_strided_slice %31 {offsets = [0, 0, 0], sizes = [1, 8, 32], strides = [1, 1, 1]} : vector<1x8x128xbf16> to vector<1x8x32xbf16>
    "tpu.trace_start"() <{level = 10 : i32, message = "bqk,bkd->bqd"}> : () -> ()
    %cst_28 = arith.constant dense<0.000000e+00> : vector<1x8x32xf32>
    %57 = tpu.matmul %55, %56, %cst_28 {dimension_numbers = #tpu.dot_dimension_numbers<[2], [1], [1], [2], [0, 0, 0, 1, 1, 2], [0], [0]>} : vector<1x8x8xbf16>, vector<1x8x32xbf16>, vector<1x8x32xf32> -> vector<1x8x32xf32>
    "tpu.trace_stop"() : () -> ()
    %58 = vector.extract_strided_slice %27 {offsets = [0, 0, 32], sizes = [1, 8, 32], strides = [1, 1, 1]} : vector<1x8x128xbf16> to vector<1x8x32xbf16>
    %59 = vector.extract_strided_slice %29 {offsets = [0, 0, 32], sizes = [1, 8, 32], strides = [1, 1, 1]} : vector<1x8x128xbf16> to vector<1x8x32xbf16>
    "tpu.trace_start"() <{level = 10 : i32, message = "bqd,bkd->bqk"}> : () -> ()
    %cst_29 = arith.constant dense<0.000000e+00> : vector<1x8x8xf32>
    %60 = tpu.matmul %58, %59, %cst_29 {dimension_numbers = #tpu.dot_dimension_numbers<[2], [2], [1], [1], [0, 0, 0, 1, 1, 1], [0], [0]>} : vector<1x8x32xbf16>, vector<1x8x32xbf16>, vector<1x8x8xf32> -> vector<1x8x8xf32>
    "tpu.trace_stop"() : () -> ()
    %cst_30 = arith.constant 0.176776692 : f32
    %61 = vector.broadcast %cst_30 : f32 to vector<1x8x8xf32>
    %62 = arith.mulf %60, %61 : vector<1x8x8xf32>
    %63 = vector.shape_cast %37 : vector<8x8xf32> to vector<1x8x8xf32>
    %64 = arith.addf %62, %63 : vector<1x8x8xf32>
    %cst_31 = arith.constant dense<0xFF800000> : vector<1x8xf32>
    %65 = vector.multi_reduction <maximumf>, %64, %cst_31 [2] : vector<1x8x8xf32> to vector<1x8xf32>
    %66 = vector.shape_cast %65 : vector<1x8xf32> to vector<1x8x1xf32>
    %67 = vector.broadcast %66 : vector<1x8x1xf32> to vector<1x8x8xf32>
    %68 = arith.subf %64, %67 : vector<1x8x8xf32>
    %69 = math.exp %68 : vector<1x8x8xf32>
    %cst_32 = arith.constant dense<0.000000e+00> : vector<1x8xf32>
    %70 = vector.multi_reduction <add>, %69, %cst_32 [2] : vector<1x8x8xf32> to vector<1x8xf32>
    %71 = vector.shape_cast %70 : vector<1x8xf32> to vector<1x8x1xf32>
    %72 = tpu.reciprocal %71 {approx = true} : vector<1x8x1xf32> -> vector<1x8x1xf32>
    %73 = vector.broadcast %72 : vector<1x8x1xf32> to vector<1x8x8xf32>
    %74 = arith.mulf %69, %73 : vector<1x8x8xf32>
    %75 = arith.truncf %74 : vector<1x8x8xf32> to vector<1x8x8xbf16>
    %76 = vector.extract_strided_slice %31 {offsets = [0, 0, 32], sizes = [1, 8, 32], strides = [1, 1, 1]} : vector<1x8x128xbf16> to vector<1x8x32xbf16>
    "tpu.trace_start"() <{level = 10 : i32, message = "bqk,bkd->bqd"}> : () -> ()
    %cst_33 = arith.constant dense<0.000000e+00> : vector<1x8x32xf32>
    %77 = tpu.matmul %75, %76, %cst_33 {dimension_numbers = #tpu.dot_dimension_numbers<[2], [1], [1], [2], [0, 0, 0, 1, 1, 2], [0], [0]>} : vector<1x8x8xbf16>, vector<1x8x32xbf16>, vector<1x8x32xf32> -> vector<1x8x32xf32>
    "tpu.trace_stop"() : () -> ()
    %78 = vector.extract_strided_slice %27 {offsets = [0, 0, 64], sizes = [1, 8, 32], strides = [1, 1, 1]} : vector<1x8x128xbf16> to vector<1x8x32xbf16>
    %79 = vector.extract_strided_slice %29 {offsets = [0, 0, 64], sizes = [1, 8, 32], strides = [1, 1, 1]} : vector<1x8x128xbf16> to vector<1x8x32xbf16>
    "tpu.trace_start"() <{level = 10 : i32, message = "bqd,bkd->bqk"}> : () -> ()
    %cst_34 = arith.constant dense<0.000000e+00> : vector<1x8x8xf32>
    %80 = tpu.matmul %78, %79, %cst_34 {dimension_numbers = #tpu.dot_dimension_numbers<[2], [2], [1], [1], [0, 0, 0, 1, 1, 1], [0], [0]>} : vector<1x8x32xbf16>, vector<1x8x32xbf16>, vector<1x8x8xf32> -> vector<1x8x8xf32>
    "tpu.trace_stop"() : () -> ()
    %cst_35 = arith.constant 0.176776692 : f32
    %81 = vector.broadcast %cst_35 : f32 to vector<1x8x8xf32>
    %82 = arith.mulf %80, %81 : vector<1x8x8xf32>
    %83 = vector.shape_cast %37 : vector<8x8xf32> to vector<1x8x8xf32>
    %84 = arith.addf %82, %83 : vector<1x8x8xf32>
    %cst_36 = arith.constant dense<0xFF800000> : vector<1x8xf32>
    %85 = vector.multi_reduction <maximumf>, %84, %cst_36 [2] : vector<1x8x8xf32> to vector<1x8xf32>
    %86 = vector.shape_cast %85 : vector<1x8xf32> to vector<1x8x1xf32>
    %87 = vector.broadcast %86 : vector<1x8x1xf32> to vector<1x8x8xf32>
    %88 = arith.subf %84, %87 : vector<1x8x8xf32>
    %89 = math.exp %88 : vector<1x8x8xf32>
    %cst_37 = arith.constant dense<0.000000e+00> : vector<1x8xf32>
    %90 = vector.multi_reduction <add>, %89, %cst_37 [2] : vector<1x8x8xf32> to vector<1x8xf32>
    %91 = vector.shape_cast %90 : vector<1x8xf32> to vector<1x8x1xf32>
    %92 = tpu.reciprocal %91 {approx = true} : vector<1x8x1xf32> -> vector<1x8x1xf32>
    %93 = vector.broadcast %92 : vector<1x8x1xf32> to vector<1x8x8xf32>
    %94 = arith.mulf %89, %93 : vector<1x8x8xf32>
    %95 = arith.truncf %94 : vector<1x8x8xf32> to vector<1x8x8xbf16>
    %96 = vector.extract_strided_slice %31 {offsets = [0, 0, 64], sizes = [1, 8, 32], strides = [1, 1, 1]} : vector<1x8x128xbf16> to vector<1x8x32xbf16>
    "tpu.trace_start"() <{level = 10 : i32, message = "bqk,bkd->bqd"}> : () -> ()
    %cst_38 = arith.constant dense<0.000000e+00> : vector<1x8x32xf32>
    %97 = tpu.matmul %95, %96, %cst_38 {dimension_numbers = #tpu.dot_dimension_numbers<[2], [1], [1], [2], [0, 0, 0, 1, 1, 2], [0], [0]>} : vector<1x8x8xbf16>, vector<1x8x32xbf16>, vector<1x8x32xf32> -> vector<1x8x32xf32>
    "tpu.trace_stop"() : () -> ()
    %98 = vector.extract_strided_slice %27 {offsets = [0, 0, 96], sizes = [1, 8, 32], strides = [1, 1, 1]} : vector<1x8x128xbf16> to vector<1x8x32xbf16>
    %99 = vector.extract_strided_slice %29 {offsets = [0, 0, 96], sizes = [1, 8, 32], strides = [1, 1, 1]} : vector<1x8x128xbf16> to vector<1x8x32xbf16>
    "tpu.trace_start"() <{level = 10 : i32, message = "bqd,bkd->bqk"}> : () -> ()
    %cst_39 = arith.constant dense<0.000000e+00> : vector<1x8x8xf32>
    %100 = tpu.matmul %98, %99, %cst_39 {dimension_numbers = #tpu.dot_dimension_numbers<[2], [2], [1], [1], [0, 0, 0, 1, 1, 1], [0], [0]>} : vector<1x8x32xbf16>, vector<1x8x32xbf16>, vector<1x8x8xf32> -> vector<1x8x8xf32>
    "tpu.trace_stop"() : () -> ()
    %cst_40 = arith.constant 0.176776692 : f32
    %101 = vector.broadcast %cst_40 : f32 to vector<1x8x8xf32>
    %102 = arith.mulf %100, %101 : vector<1x8x8xf32>
    %103 = vector.shape_cast %37 : vector<8x8xf32> to vector<1x8x8xf32>
    %104 = arith.addf %102, %103 : vector<1x8x8xf32>
    %cst_41 = arith.constant dense<0xFF800000> : vector<1x8xf32>
    %105 = vector.multi_reduction <maximumf>, %104, %cst_41 [2] : vector<1x8x8xf32> to vector<1x8xf32>
    %106 = vector.shape_cast %105 : vector<1x8xf32> to vector<1x8x1xf32>
    %107 = vector.broadcast %106 : vector<1x8x1xf32> to vector<1x8x8xf32>
    %108 = arith.subf %104, %107 : vector<1x8x8xf32>
    %109 = math.exp %108 : vector<1x8x8xf32>
    %cst_42 = arith.constant dense<0.000000e+00> : vector<1x8xf32>
    %110 = vector.multi_reduction <add>, %109, %cst_42 [2] : vector<1x8x8xf32> to vector<1x8xf32>
    %111 = vector.shape_cast %110 : vector<1x8xf32> to vector<1x8x1xf32>
    %112 = tpu.reciprocal %111 {approx = true} : vector<1x8x1xf32> -> vector<1x8x1xf32>
    %113 = vector.broadcast %112 : vector<1x8x1xf32> to vector<1x8x8xf32>
    %114 = arith.mulf %109, %113 : vector<1x8x8xf32>
    %115 = arith.truncf %114 : vector<1x8x8xf32> to vector<1x8x8xbf16>
    %116 = vector.extract_strided_slice %31 {offsets = [0, 0, 96], sizes = [1, 8, 32], strides = [1, 1, 1]} : vector<1x8x128xbf16> to vector<1x8x32xbf16>
    "tpu.trace_start"() <{level = 10 : i32, message = "bqk,bkd->bqd"}> : () -> ()
    %cst_43 = arith.constant dense<0.000000e+00> : vector<1x8x32xf32>
    %117 = tpu.matmul %115, %116, %cst_43 {dimension_numbers = #tpu.dot_dimension_numbers<[2], [1], [1], [2], [0, 0, 0, 1, 1, 2], [0], [0]>} : vector<1x8x8xbf16>, vector<1x8x32xbf16>, vector<1x8x32xf32> -> vector<1x8x32xf32>
    "tpu.trace_stop"() : () -> ()
    %118 = tpu.concatenate %57, %77, %97, %117 in 2 : vector<1x8x32xf32>, vector<1x8x32xf32>, vector<1x8x32xf32>, vector<1x8x32xf32> -> vector<1x8x128xf32>
    %119 = arith.truncf %118 : vector<1x8x128xf32> to vector<1x8x128xbf16>
    %120 = vector.shape_cast %119 : vector<1x8x128xbf16> to vector<8x128xbf16>
    %cst_44 = arith.constant dense<0.000000e+00> : vector<8x128xf32>
    %121 = tpu.matmul %120, %21, %cst_44 {dimension_numbers = #tpu.dot_dimension_numbers<[1], [0], [0], [1], [0, 0, 1, 1], [], []>} : vector<8x128xbf16>, vector<128x128xbf16>, vector<8x128xf32> -> vector<8x128xf32>
    %122 = vector.broadcast %17 : vector<1x128xf32> to vector<8x128xf32>
    %123 = arith.addf %121, %122 : vector<8x128xf32>
    %124 = vector.shape_cast %123 : vector<8x128xf32> to vector<1x8x128xf32>
    %125 = arith.addf %124, %3 : vector<1x8x128xf32>
    %126 = vector.extract_strided_slice %14 {offsets = [3, 0], sizes = [1, 128], strides = [1, 1]} : vector<9x128xf32> to vector<1x128xf32>
    %127 = vector.extract_strided_slice %14 {offsets = [4, 0], sizes = [1, 128], strides = [1, 1]} : vector<9x128xf32> to vector<1x128xf32>
    %cst_45 = arith.constant dense<0.000000e+00> : vector<1x8xf32>
    %128 = vector.multi_reduction <add>, %125, %cst_45 [2] : vector<1x8x128xf32> to vector<1x8xf32>
    %129 = vector.shape_cast %128 : vector<1x8xf32> to vector<1x8x1xf32>
    %cst_46 = arith.constant 1.280000e+02 : f32
    %130 = vector.broadcast %cst_46 : f32 to vector<1x8x1xf32>
    %131 = arith.divf %129, %130 : vector<1x8x1xf32>
    %132 = vector.broadcast %131 : vector<1x8x1xf32> to vector<1x8x128xf32>
    %133 = arith.subf %125, %132 : vector<1x8x128xf32>
    %134 = arith.mulf %133, %133 : vector<1x8x128xf32>
    %cst_47 = arith.constant dense<0.000000e+00> : vector<1x8xf32>
    %135 = vector.multi_reduction <add>, %134, %cst_47 [2] : vector<1x8x128xf32> to vector<1x8xf32>
    %136 = vector.shape_cast %135 : vector<1x8xf32> to vector<1x8x1xf32>
    %cst_48 = arith.constant 1.280000e+02 : f32
    %137 = vector.broadcast %cst_48 : f32 to vector<1x8x1xf32>
    %138 = arith.divf %136, %137 : vector<1x8x1xf32>
    %139 = vector.broadcast %131 : vector<1x8x1xf32> to vector<1x8x128xf32>
    %140 = arith.subf %125, %139 : vector<1x8x128xf32>
    %cst_49 = arith.constant 9.99999974E-6 : f32
    %141 = vector.broadcast %cst_49 : f32 to vector<1x8x1xf32>
    %142 = arith.addf %138, %141 : vector<1x8x1xf32>
    %143 = math.rsqrt %142 : vector<1x8x1xf32>
    %144 = vector.broadcast %143 : vector<1x8x1xf32> to vector<1x8x128xf32>
    %145 = arith.mulf %140, %144 : vector<1x8x128xf32>
    %146 = vector.shape_cast %126 : vector<1x128xf32> to vector<1x1x128xf32>
    %147 = vector.broadcast %146 : vector<1x1x128xf32> to vector<1x8x128xf32>
    %148 = arith.mulf %145, %147 : vector<1x8x128xf32>
    %149 = vector.shape_cast %127 : vector<1x128xf32> to vector<1x1x128xf32>
    %150 = vector.broadcast %149 : vector<1x1x128xf32> to vector<1x8x128xf32>
    %151 = arith.addf %148, %150 : vector<1x8x128xf32>
    %152 = vector.extract_strided_slice %6 {offsets = [1, 0, 0], sizes = [1, 128, 512], strides = [1, 1, 1]} : vector<2x128x512xbf16> to vector<1x128x512xbf16>
    %153 = vector.shape_cast %152 : vector<1x128x512xbf16> to vector<128x512xbf16>
    %154 = vector.extract_strided_slice %14 {offsets = [1, 0], sizes = [1, 128], strides = [1, 1]} : vector<9x128xf32> to vector<1x128xf32>
    %155 = vector.shape_cast %151 : vector<1x8x128xf32> to vector<8x128xf32>
    %156 = arith.truncf %155 : vector<8x128xf32> to vector<8x128xbf16>
    %157 = vector.extract_strided_slice %153 {offsets = [0, 0], sizes = [128, 384], strides = [1, 1]} : vector<128x512xbf16> to vector<128x384xbf16>
    %158 = vector.extract_strided_slice %153 {offsets = [0, 384], sizes = [128, 128], strides = [1, 1]} : vector<128x512xbf16> to vector<128x128xbf16>
    %159 = vector.shape_cast %4 : vector<1x8x128xbf16> to vector<8x128xbf16>
    %160 = vector.extract_strided_slice %157 {offsets = [0, 0], sizes = [128, 128], strides = [1, 1]} : vector<128x384xbf16> to vector<128x128xbf16>
    %cst_50 = arith.constant dense<0.000000e+00> : vector<8x128xf32>
    %161 = tpu.matmul %156, %160, %cst_50 {dimension_numbers = #tpu.dot_dimension_numbers<[1], [0], [0], [1], [0, 0, 1, 1], [], []>} : vector<8x128xbf16>, vector<128x128xbf16>, vector<8x128xf32> -> vector<8x128xf32>
    %162 = vector.extract_strided_slice %157 {offsets = [0, 128], sizes = [128, 256], strides = [1, 1]} : vector<128x384xbf16> to vector<128x256xbf16>
    %cst_51 = arith.constant dense<0.000000e+00> : vector<8x256xf32>
    %163 = tpu.matmul %159, %162, %cst_51 {dimension_numbers = #tpu.dot_dimension_numbers<[1], [0], [0], [1], [0, 0, 1, 1], [], []>} : vector<8x128xbf16>, vector<128x256xbf16>, vector<8x256xf32> -> vector<8x256xf32>
    %164 = vector.extract_strided_slice %163 {offsets = [0, 0], sizes = [8, 128], strides = [1, 1]} : vector<8x256xf32> to vector<8x128xf32>
    %165 = vector.extract_strided_slice %163 {offsets = [0, 128], sizes = [8, 128], strides = [1, 1]} : vector<8x256xf32> to vector<8x128xf32>
    %166 = vector.shape_cast %161 : vector<8x128xf32> to vector<1x8x128xf32>
    %167 = arith.truncf %166 : vector<1x8x128xf32> to vector<1x8x128xbf16>
    %168 = vector.shape_cast %164 : vector<8x128xf32> to vector<1x8x128xf32>
    %169 = arith.truncf %168 : vector<1x8x128xf32> to vector<1x8x128xbf16>
    %170 = vector.shape_cast %165 : vector<8x128xf32> to vector<1x8x128xf32>
    %171 = arith.truncf %170 : vector<1x8x128xf32> to vector<1x8x128xbf16>
    %172 = vector.extract_strided_slice %167 {offsets = [0, 0, 0], sizes = [1, 8, 32], strides = [1, 1, 1]} : vector<1x8x128xbf16> to vector<1x8x32xbf16>
    %173 = vector.extract_strided_slice %169 {offsets = [0, 0, 0], sizes = [1, 8, 32], strides = [1, 1, 1]} : vector<1x8x128xbf16> to vector<1x8x32xbf16>
    "tpu.trace_start"() <{level = 10 : i32, message = "bqd,bkd->bqk"}> : () -> ()
    %cst_52 = arith.constant dense<0.000000e+00> : vector<1x8x8xf32>
    %174 = tpu.matmul %172, %173, %cst_52 {dimension_numbers = #tpu.dot_dimension_numbers<[2], [2], [1], [1], [0, 0, 0, 1, 1, 1], [0], [0]>} : vector<1x8x32xbf16>, vector<1x8x32xbf16>, vector<1x8x8xf32> -> vector<1x8x8xf32>
    "tpu.trace_stop"() : () -> ()
    %cst_53 = arith.constant 0.176776692 : f32
    %175 = vector.broadcast %cst_53 : f32 to vector<1x8x8xf32>
    %176 = arith.mulf %174, %175 : vector<1x8x8xf32>
    %cst_54 = arith.constant dense<0xFF800000> : vector<1x8xf32>
    %177 = vector.multi_reduction <maximumf>, %176, %cst_54 [2] : vector<1x8x8xf32> to vector<1x8xf32>
    %178 = vector.shape_cast %177 : vector<1x8xf32> to vector<1x8x1xf32>
    %179 = vector.broadcast %178 : vector<1x8x1xf32> to vector<1x8x8xf32>
    %180 = arith.subf %176, %179 : vector<1x8x8xf32>
    %181 = math.exp %180 : vector<1x8x8xf32>
    %cst_55 = arith.constant dense<0.000000e+00> : vector<1x8xf32>
    %182 = vector.multi_reduction <add>, %181, %cst_55 [2] : vector<1x8x8xf32> to vector<1x8xf32>
    %183 = vector.shape_cast %182 : vector<1x8xf32> to vector<1x8x1xf32>
    %184 = tpu.reciprocal %183 {approx = true} : vector<1x8x1xf32> -> vector<1x8x1xf32>
    %185 = vector.broadcast %184 : vector<1x8x1xf32> to vector<1x8x8xf32>
    %186 = arith.mulf %181, %185 : vector<1x8x8xf32>
    %187 = arith.truncf %186 : vector<1x8x8xf32> to vector<1x8x8xbf16>
    %188 = vector.extract_strided_slice %171 {offsets = [0, 0, 0], sizes = [1, 8, 32], strides = [1, 1, 1]} : vector<1x8x128xbf16> to vector<1x8x32xbf16>
    "tpu.trace_start"() <{level = 10 : i32, message = "bqk,bkd->bqd"}> : () -> ()
    %cst_56 = arith.constant dense<0.000000e+00> : vector<1x8x32xf32>
    %189 = tpu.matmul %187, %188, %cst_56 {dimension_numbers = #tpu.dot_dimension_numbers<[2], [1], [1], [2], [0, 0, 0, 1, 1, 2], [0], [0]>} : vector<1x8x8xbf16>, vector<1x8x32xbf16>, vector<1x8x32xf32> -> vector<1x8x32xf32>
    "tpu.trace_stop"() : () -> ()
    %190 = vector.extract_strided_slice %167 {offsets = [0, 0, 32], sizes = [1, 8, 32], strides = [1, 1, 1]} : vector<1x8x128xbf16> to vector<1x8x32xbf16>
    %191 = vector.extract_strided_slice %169 {offsets = [0, 0, 32], sizes = [1, 8, 32], strides = [1, 1, 1]} : vector<1x8x128xbf16> to vector<1x8x32xbf16>
    "tpu.trace_start"() <{level = 10 : i32, message = "bqd,bkd->bqk"}> : () -> ()
    %cst_57 = arith.constant dense<0.000000e+00> : vector<1x8x8xf32>
    %192 = tpu.matmul %190, %191, %cst_57 {dimension_numbers = #tpu.dot_dimension_numbers<[2], [2], [1], [1], [0, 0, 0, 1, 1, 1], [0], [0]>} : vector<1x8x32xbf16>, vector<1x8x32xbf16>, vector<1x8x8xf32> -> vector<1x8x8xf32>
    "tpu.trace_stop"() : () -> ()
    %cst_58 = arith.constant 0.176776692 : f32
    %193 = vector.broadcast %cst_58 : f32 to vector<1x8x8xf32>
    %194 = arith.mulf %192, %193 : vector<1x8x8xf32>
    %cst_59 = arith.constant dense<0xFF800000> : vector<1x8xf32>
    %195 = vector.multi_reduction <maximumf>, %194, %cst_59 [2] : vector<1x8x8xf32> to vector<1x8xf32>
    %196 = vector.shape_cast %195 : vector<1x8xf32> to vector<1x8x1xf32>
    %197 = vector.broadcast %196 : vector<1x8x1xf32> to vector<1x8x8xf32>
    %198 = arith.subf %194, %197 : vector<1x8x8xf32>
    %199 = math.exp %198 : vector<1x8x8xf32>
    %cst_60 = arith.constant dense<0.000000e+00> : vector<1x8xf32>
    %200 = vector.multi_reduction <add>, %199, %cst_60 [2] : vector<1x8x8xf32> to vector<1x8xf32>
    %201 = vector.shape_cast %200 : vector<1x8xf32> to vector<1x8x1xf32>
    %202 = tpu.reciprocal %201 {approx = true} : vector<1x8x1xf32> -> vector<1x8x1xf32>
    %203 = vector.broadcast %202 : vector<1x8x1xf32> to vector<1x8x8xf32>
    %204 = arith.mulf %199, %203 : vector<1x8x8xf32>
    %205 = arith.truncf %204 : vector<1x8x8xf32> to vector<1x8x8xbf16>
    %206 = vector.extract_strided_slice %171 {offsets = [0, 0, 32], sizes = [1, 8, 32], strides = [1, 1, 1]} : vector<1x8x128xbf16> to vector<1x8x32xbf16>
    "tpu.trace_start"() <{level = 10 : i32, message = "bqk,bkd->bqd"}> : () -> ()
    %cst_61 = arith.constant dense<0.000000e+00> : vector<1x8x32xf32>
    %207 = tpu.matmul %205, %206, %cst_61 {dimension_numbers = #tpu.dot_dimension_numbers<[2], [1], [1], [2], [0, 0, 0, 1, 1, 2], [0], [0]>} : vector<1x8x8xbf16>, vector<1x8x32xbf16>, vector<1x8x32xf32> -> vector<1x8x32xf32>
    "tpu.trace_stop"() : () -> ()
    %208 = vector.extract_strided_slice %167 {offsets = [0, 0, 64], sizes = [1, 8, 32], strides = [1, 1, 1]} : vector<1x8x128xbf16> to vector<1x8x32xbf16>
    %209 = vector.extract_strided_slice %169 {offsets = [0, 0, 64], sizes = [1, 8, 32], strides = [1, 1, 1]} : vector<1x8x128xbf16> to vector<1x8x32xbf16>
    "tpu.trace_start"() <{level = 10 : i32, message = "bqd,bkd->bqk"}> : () -> ()
    %cst_62 = arith.constant dense<0.000000e+00> : vector<1x8x8xf32>
    %210 = tpu.matmul %208, %209, %cst_62 {dimension_numbers = #tpu.dot_dimension_numbers<[2], [2], [1], [1], [0, 0, 0, 1, 1, 1], [0], [0]>} : vector<1x8x32xbf16>, vector<1x8x32xbf16>, vector<1x8x8xf32> -> vector<1x8x8xf32>
    "tpu.trace_stop"() : () -> ()
    %cst_63 = arith.constant 0.176776692 : f32
    %211 = vector.broadcast %cst_63 : f32 to vector<1x8x8xf32>
    %212 = arith.mulf %210, %211 : vector<1x8x8xf32>
    %cst_64 = arith.constant dense<0xFF800000> : vector<1x8xf32>
    %213 = vector.multi_reduction <maximumf>, %212, %cst_64 [2] : vector<1x8x8xf32> to vector<1x8xf32>
    %214 = vector.shape_cast %213 : vector<1x8xf32> to vector<1x8x1xf32>
    %215 = vector.broadcast %214 : vector<1x8x1xf32> to vector<1x8x8xf32>
    %216 = arith.subf %212, %215 : vector<1x8x8xf32>
    %217 = math.exp %216 : vector<1x8x8xf32>
    %cst_65 = arith.constant dense<0.000000e+00> : vector<1x8xf32>
    %218 = vector.multi_reduction <add>, %217, %cst_65 [2] : vector<1x8x8xf32> to vector<1x8xf32>
    %219 = vector.shape_cast %218 : vector<1x8xf32> to vector<1x8x1xf32>
    %220 = tpu.reciprocal %219 {approx = true} : vector<1x8x1xf32> -> vector<1x8x1xf32>
    %221 = vector.broadcast %220 : vector<1x8x1xf32> to vector<1x8x8xf32>
    %222 = arith.mulf %217, %221 : vector<1x8x8xf32>
    %223 = arith.truncf %222 : vector<1x8x8xf32> to vector<1x8x8xbf16>
    %224 = vector.extract_strided_slice %171 {offsets = [0, 0, 64], sizes = [1, 8, 32], strides = [1, 1, 1]} : vector<1x8x128xbf16> to vector<1x8x32xbf16>
    "tpu.trace_start"() <{level = 10 : i32, message = "bqk,bkd->bqd"}> : () -> ()
    %cst_66 = arith.constant dense<0.000000e+00> : vector<1x8x32xf32>
    %225 = tpu.matmul %223, %224, %cst_66 {dimension_numbers = #tpu.dot_dimension_numbers<[2], [1], [1], [2], [0, 0, 0, 1, 1, 2], [0], [0]>} : vector<1x8x8xbf16>, vector<1x8x32xbf16>, vector<1x8x32xf32> -> vector<1x8x32xf32>
    "tpu.trace_stop"() : () -> ()
    %226 = vector.extract_strided_slice %167 {offsets = [0, 0, 96], sizes = [1, 8, 32], strides = [1, 1, 1]} : vector<1x8x128xbf16> to vector<1x8x32xbf16>
    %227 = vector.extract_strided_slice %169 {offsets = [0, 0, 96], sizes = [1, 8, 32], strides = [1, 1, 1]} : vector<1x8x128xbf16> to vector<1x8x32xbf16>
    "tpu.trace_start"() <{level = 10 : i32, message = "bqd,bkd->bqk"}> : () -> ()
    %cst_67 = arith.constant dense<0.000000e+00> : vector<1x8x8xf32>
    %228 = tpu.matmul %226, %227, %cst_67 {dimension_numbers = #tpu.dot_dimension_numbers<[2], [2], [1], [1], [0, 0, 0, 1, 1, 1], [0], [0]>} : vector<1x8x32xbf16>, vector<1x8x32xbf16>, vector<1x8x8xf32> -> vector<1x8x8xf32>
    "tpu.trace_stop"() : () -> ()
    %cst_68 = arith.constant 0.176776692 : f32
    %229 = vector.broadcast %cst_68 : f32 to vector<1x8x8xf32>
    %230 = arith.mulf %228, %229 : vector<1x8x8xf32>
    %cst_69 = arith.constant dense<0xFF800000> : vector<1x8xf32>
    %231 = vector.multi_reduction <maximumf>, %230, %cst_69 [2] : vector<1x8x8xf32> to vector<1x8xf32>
    %232 = vector.shape_cast %231 : vector<1x8xf32> to vector<1x8x1xf32>
    %233 = vector.broadcast %232 : vector<1x8x1xf32> to vector<1x8x8xf32>
    %234 = arith.subf %230, %233 : vector<1x8x8xf32>
    %235 = math.exp %234 : vector<1x8x8xf32>
    %cst_70 = arith.constant dense<0.000000e+00> : vector<1x8xf32>
    %236 = vector.multi_reduction <add>, %235, %cst_70 [2] : vector<1x8x8xf32> to vector<1x8xf32>
    %237 = vector.shape_cast %236 : vector<1x8xf32> to vector<1x8x1xf32>
    %238 = tpu.reciprocal %237 {approx = true} : vector<1x8x1xf32> -> vector<1x8x1xf32>
    %239 = vector.broadcast %238 : vector<1x8x1xf32> to vector<1x8x8xf32>
    %240 = arith.mulf %235, %239 : vector<1x8x8xf32>
    %241 = arith.truncf %240 : vector<1x8x8xf32> to vector<1x8x8xbf16>
    %242 = vector.extract_strided_slice %171 {offsets = [0, 0, 96], sizes = [1, 8, 32], strides = [1, 1, 1]} : vector<1x8x128xbf16> to vector<1x8x32xbf16>
    "tpu.trace_start"() <{level = 10 : i32, message = "bqk,bkd->bqd"}> : () -> ()
    %cst_71 = arith.constant dense<0.000000e+00> : vector<1x8x32xf32>
    %243 = tpu.matmul %241, %242, %cst_71 {dimension_numbers = #tpu.dot_dimension_numbers<[2], [1], [1], [2], [0, 0, 0, 1, 1, 2], [0], [0]>} : vector<1x8x8xbf16>, vector<1x8x32xbf16>, vector<1x8x32xf32> -> vector<1x8x32xf32>
    "tpu.trace_stop"() : () -> ()
    %244 = tpu.concatenate %189, %207, %225, %243 in 2 : vector<1x8x32xf32>, vector<1x8x32xf32>, vector<1x8x32xf32>, vector<1x8x32xf32> -> vector<1x8x128xf32>
    %245 = arith.truncf %244 : vector<1x8x128xf32> to vector<1x8x128xbf16>
    %246 = vector.shape_cast %245 : vector<1x8x128xbf16> to vector<8x128xbf16>
    %cst_72 = arith.constant dense<0.000000e+00> : vector<8x128xf32>
    %247 = tpu.matmul %246, %158, %cst_72 {dimension_numbers = #tpu.dot_dimension_numbers<[1], [0], [0], [1], [0, 0, 1, 1], [], []>} : vector<8x128xbf16>, vector<128x128xbf16>, vector<8x128xf32> -> vector<8x128xf32>
    %248 = vector.broadcast %154 : vector<1x128xf32> to vector<8x128xf32>
    %249 = arith.addf %247, %248 : vector<8x128xf32>
    %250 = vector.shape_cast %249 : vector<8x128xf32> to vector<1x8x128xf32>
    %251 = arith.addf %250, %151 : vector<1x8x128xf32>
    %252 = vector.extract_strided_slice %14 {offsets = [5, 0], sizes = [1, 128], strides = [1, 1]} : vector<9x128xf32> to vector<1x128xf32>
    %253 = vector.extract_strided_slice %14 {offsets = [6, 0], sizes = [1, 128], strides = [1, 1]} : vector<9x128xf32> to vector<1x128xf32>
    %cst_73 = arith.constant dense<0.000000e+00> : vector<1x8xf32>
    %254 = vector.multi_reduction <add>, %251, %cst_73 [2] : vector<1x8x128xf32> to vector<1x8xf32>
    %255 = vector.shape_cast %254 : vector<1x8xf32> to vector<1x8x1xf32>
    %cst_74 = arith.constant 1.280000e+02 : f32
    %256 = vector.broadcast %cst_74 : f32 to vector<1x8x1xf32>
    %257 = arith.divf %255, %256 : vector<1x8x1xf32>
    %258 = vector.broadcast %257 : vector<1x8x1xf32> to vector<1x8x128xf32>
    %259 = arith.subf %251, %258 : vector<1x8x128xf32>
    %260 = arith.mulf %259, %259 : vector<1x8x128xf32>
    %cst_75 = arith.constant dense<0.000000e+00> : vector<1x8xf32>
    %261 = vector.multi_reduction <add>, %260, %cst_75 [2] : vector<1x8x128xf32> to vector<1x8xf32>
    %262 = vector.shape_cast %261 : vector<1x8xf32> to vector<1x8x1xf32>
    %cst_76 = arith.constant 1.280000e+02 : f32
    %263 = vector.broadcast %cst_76 : f32 to vector<1x8x1xf32>
    %264 = arith.divf %262, %263 : vector<1x8x1xf32>
    %265 = vector.broadcast %257 : vector<1x8x1xf32> to vector<1x8x128xf32>
    %266 = arith.subf %251, %265 : vector<1x8x128xf32>
    %cst_77 = arith.constant 9.99999974E-6 : f32
    %267 = vector.broadcast %cst_77 : f32 to vector<1x8x1xf32>
    %268 = arith.addf %264, %267 : vector<1x8x1xf32>
    %269 = math.rsqrt %268 : vector<1x8x1xf32>
    %270 = vector.broadcast %269 : vector<1x8x1xf32> to vector<1x8x128xf32>
    %271 = arith.mulf %266, %270 : vector<1x8x128xf32>
    %272 = vector.shape_cast %252 : vector<1x128xf32> to vector<1x1x128xf32>
    %273 = vector.broadcast %272 : vector<1x1x128xf32> to vector<1x8x128xf32>
    %274 = arith.mulf %271, %273 : vector<1x8x128xf32>
    %275 = vector.shape_cast %253 : vector<1x128xf32> to vector<1x1x128xf32>
    %276 = vector.broadcast %275 : vector<1x1x128xf32> to vector<1x8x128xf32>
    %277 = arith.addf %274, %276 : vector<1x8x128xf32>
    %278 = vector.shape_cast %277 : vector<1x8x128xf32> to vector<8x128xf32>
    %279 = arith.truncf %278 : vector<8x128xf32> to vector<8x128xbf16>
    %cst_78 = arith.constant dense<0.000000e+00> : vector<8x256xf32>
    %280 = tpu.matmul %279, %8, %cst_78 {dimension_numbers = #tpu.dot_dimension_numbers<[1], [0], [0], [1], [0, 0, 1, 1], [], []>} : vector<8x128xbf16>, vector<128x256xbf16>, vector<8x256xf32> -> vector<8x256xf32>
    %281 = vector.broadcast %12 : vector<1x256xf32> to vector<8x256xf32>
    %282 = arith.addf %280, %281 : vector<8x256xf32>
    %cst_79 = arith.constant 0.000000e+00 : f32
    %283 = vector.broadcast %cst_79 : f32 to vector<8x256xf32>
    %284 = arith.maximumf %282, %283 : vector<8x256xf32>
    %285 = arith.truncf %284 : vector<8x256xf32> to vector<8x256xbf16>
    %cst_80 = arith.constant dense<0.000000e+00> : vector<8x128xf32>
    %286 = tpu.matmul %285, %10, %cst_80 {dimension_numbers = #tpu.dot_dimension_numbers<[1], [0], [0], [1], [0, 0, 1, 1], [], []>} : vector<8x256xbf16>, vector<256x128xbf16>, vector<8x128xf32> -> vector<8x128xf32>
    %287 = vector.extract_strided_slice %14 {offsets = [2, 0], sizes = [1, 128], strides = [1, 1]} : vector<9x128xf32> to vector<1x128xf32>
    %288 = vector.broadcast %287 : vector<1x128xf32> to vector<8x128xf32>
    %289 = arith.addf %286, %288 : vector<8x128xf32>
    %290 = vector.shape_cast %289 : vector<8x128xf32> to vector<1x8x128xf32>
    %291 = arith.addf %290, %277 : vector<1x8x128xf32>
    %292 = vector.extract_strided_slice %14 {offsets = [7, 0], sizes = [1, 128], strides = [1, 1]} : vector<9x128xf32> to vector<1x128xf32>
    %293 = vector.extract_strided_slice %14 {offsets = [8, 0], sizes = [1, 128], strides = [1, 1]} : vector<9x128xf32> to vector<1x128xf32>
    %cst_81 = arith.constant dense<0.000000e+00> : vector<1x8xf32>
    %294 = vector.multi_reduction <add>, %291, %cst_81 [2] : vector<1x8x128xf32> to vector<1x8xf32>
    %295 = vector.shape_cast %294 : vector<1x8xf32> to vector<1x8x1xf32>
    %cst_82 = arith.constant 1.280000e+02 : f32
    %296 = vector.broadcast %cst_82 : f32 to vector<1x8x1xf32>
    %297 = arith.divf %295, %296 : vector<1x8x1xf32>
    %298 = vector.broadcast %297 : vector<1x8x1xf32> to vector<1x8x128xf32>
    %299 = arith.subf %291, %298 : vector<1x8x128xf32>
    %300 = arith.mulf %299, %299 : vector<1x8x128xf32>
    %cst_83 = arith.constant dense<0.000000e+00> : vector<1x8xf32>
    %301 = vector.multi_reduction <add>, %300, %cst_83 [2] : vector<1x8x128xf32> to vector<1x8xf32>
    %302 = vector.shape_cast %301 : vector<1x8xf32> to vector<1x8x1xf32>
    %cst_84 = arith.constant 1.280000e+02 : f32
    %303 = vector.broadcast %cst_84 : f32 to vector<1x8x1xf32>
    %304 = arith.divf %302, %303 : vector<1x8x1xf32>
    %305 = vector.broadcast %297 : vector<1x8x1xf32> to vector<1x8x128xf32>
    %306 = arith.subf %291, %305 : vector<1x8x128xf32>
    %cst_85 = arith.constant 9.99999974E-6 : f32
    %307 = vector.broadcast %cst_85 : f32 to vector<1x8x1xf32>
    %308 = arith.addf %304, %307 : vector<1x8x1xf32>
    %309 = math.rsqrt %308 : vector<1x8x1xf32>
    %310 = vector.broadcast %309 : vector<1x8x1xf32> to vector<1x8x128xf32>
    %311 = arith.mulf %306, %310 : vector<1x8x128xf32>
    %312 = vector.shape_cast %292 : vector<1x128xf32> to vector<1x1x128xf32>
    %313 = vector.broadcast %312 : vector<1x1x128xf32> to vector<1x8x128xf32>
    %314 = arith.mulf %311, %313 : vector<1x8x128xf32>
    %315 = vector.shape_cast %293 : vector<1x128xf32> to vector<1x1x128xf32>
    %316 = vector.broadcast %315 : vector<1x1x128xf32> to vector<1x8x128xf32>
    %317 = arith.addf %314, %316 : vector<1x8x128xf32>
    %c0_86 = arith.constant 0 : index
    %c0_87 = arith.constant 0 : index
    %c0_88 = arith.constant 0 : index
    %318 = vector.load %arg10[%c0_86, %c0_87, %c0_88] : memref<1x8x128xf32, #tpu.memory_space<vmem>>, vector<1x8x128xf32>
    tpu.vector_store %arg10[%c0_86, %c0_87, %c0_88], %317 {strides = array<i32>} : memref<1x8x128xf32, #tpu.memory_space<vmem>>, vector<1x8x128xf32>,
    %c1_i32 = arith.constant 1 : i32
    %319 = arith.cmpi eq, %arg1, %c1_i32 : i32
    %320 = arith.extui %319 : i1 to i32
    %c0_i32_89 = arith.constant 0 : i32
    %321 = arith.cmpi ne, %320, %c0_i32_89 : i32
    scf.if %321 {
      %c0_90 = arith.constant 0 : index
      %c0_91 = arith.constant 0 : index
      %c0_92 = arith.constant 0 : index
      %322 = vector.load %arg9[%c0_90, %c0_91, %c0_92] : memref<1x8x128xf32, #tpu.memory_space<vmem>>, vector<1x8x128xf32>
      tpu.vector_store %arg9[%c0_90, %c0_91, %c0_92], %317 {strides = array<i32>} : memref<1x8x128xf32, #tpu.memory_space<vmem>>, vector<1x8x128xf32>,
    } else {
    }
    return
  }
  func.func @transform_0(%arg0: i32, %arg1: i32) -> (i32, i32, i32) {
    %c0_i32 = arith.constant 0 : i32
    %c0_i32_0 = arith.constant 0 : i32
    %c0_i32_1 = arith.constant 0 : i32
    return %arg0, %c0_i32, %c0_i32_0 : i32, i32, i32
  }
  func.func @transform_1(%arg0: i32, %arg1: i32) -> (i32, i32, i32) {
    %c0_i32 = arith.constant 0 : i32
    %c0_i32_0 = arith.constant 0 : i32
    %c0_i32_1 = arith.constant 0 : i32
    return %arg0, %c0_i32, %c0_i32_0 : i32, i32, i32
  }
  func.func @transform_2(%arg0: i32, %arg1: i32) -> (i32, i32, i32, i32) {
    %c0_i32 = arith.constant 0 : i32
    %c0_i32_0 = arith.constant 0 : i32
    %c0_i32_1 = arith.constant 0 : i32
    %c0_i32_2 = arith.constant 0 : i32
    return %arg1, %c0_i32, %c0_i32_0, %c0_i32_1 : i32, i32, i32, i32
  }
  func.func @transform_3(%arg0: i32, %arg1: i32) -> (i32, i32, i32) {
    %c0_i32 = arith.constant 0 : i32
    %c0_i32_0 = arith.constant 0 : i32
    %c0_i32_1 = arith.constant 0 : i32
    return %arg1, %c0_i32, %c0_i32_0 : i32, i32, i32
  }
  func.func @transform_4(%arg0: i32, %arg1: i32) -> (i32, i32, i32) {
    %c0_i32 = arith.constant 0 : i32
    %c0_i32_0 = arith.constant 0 : i32
    %c0_i32_1 = arith.constant 0 : i32
    return %arg1, %c0_i32, %c0_i32_0 : i32, i32, i32
  }
  func.func @transform_5(%arg0: i32, %arg1: i32) -> (i32, i32, i32) {
    %c0_i32 = arith.constant 0 : i32
    %c0_i32_0 = arith.constant 0 : i32
    %c0_i32_1 = arith.constant 0 : i32
    return %arg1, %c0_i32, %c0_i32_0 : i32, i32, i32
  }
  func.func @transform_6(%arg0: i32, %arg1: i32) -> (i32, i32, i32) {
    %c0_i32 = arith.constant 0 : i32
    %c0_i32_0 = arith.constant 0 : i32
    %c0_i32_1 = arith.constant 0 : i32
    return %arg1, %c0_i32, %c0_i32_0 : i32, i32, i32
  }
  func.func @transform_7(%arg0: i32, %arg1: i32) -> (i32, i32, i32) {
    %c0_i32 = arith.constant 0 : i32
    %c0_i32_0 = arith.constant 0 : i32
    %c0_i32_1 = arith.constant 0 : i32
    return %arg0, %c0_i32, %c0_i32_0 : i32, i32, i32
  }
}

</mosaic_0001>

<llo_original>
// kernel: tpu_custom_call.1
$region0: #{tpu_custom_call.1}
  #allocation0 [shape = 'u32[]', space=smem, size = 0x4, offset = 0x4, fixed_abs, tag = 'smem constant byte address 0x4 - core index']
  #allocation1 [shape = 'u32[144,128]{1,0:T(1,128)}', space=vmem, size = 0x12000, scoped, tag = 'internal scratch']
  #allocation2 [shape = 'f32[1,8,128]{2,1,0:T(8,128)}', space=vmem, size = 0x1000, scoped, tag = 'scratch operand']
  %s0 = inlined_call_operand.vmem [shape: bf16[2,8,128], index: 0, kind: input, shape index: {}]
  %s1 = inlined_call_operand.vmem [shape: bf16[2,8,128], index: 1, kind: input, shape index: {}]
  %s2 = inlined_call_operand.hbm [shape: bf16[2,2,128,512], index: 2, kind: input, shape index: {}]
  %s3 = inlined_call_operand.hbm [shape: bf16[2,128,256], index: 3, kind: input, shape index: {}]
  %s4 = inlined_call_operand.hbm [shape: bf16[2,256,128], index: 4, kind: input, shape index: {}]
  %s5 = inlined_call_operand.vmem [shape: f32[2,1,256], index: 5, kind: input, shape index: {}]
  %s6 = inlined_call_operand.vmem [shape: f32[2,9,128], index: 6, kind: input, shape index: {}]
  %s7 = inlined_call_operand.hbm [shape: f32[2,8,128], index: 7, kind: output, shape index: {}]
  %s8 = sld [smem:[#allocation0]]
  $region81: #{tpu_custom_call.1} parent=0
    _
  %s10 = ssub.s32 1, %s8
  %s11 = scalar_select 0, %s10, %s8
  $region1: #{tpu_custom_call.1} parent=0
    #allocation3 [shape = 'u8[524288]{0}', space=vmem, size = 0x80000, scoped, tag = 'input window, operand 2']
    #allocation4 [shape = 's32[2]{0}', space=sflag, size = 0x8, scoped, tag = 'scoped memory for tpu_custom_call.1']
    #allocation5 [shape = 's32[2]{0}', space=sflag, size = 0x8, scoped, tag = 'scoped memory for tpu_custom_call.1']
    #allocation6 [shape = 'u8[131072]{0}', space=vmem, size = 0x20000, scoped, tag = 'input window, operand 3']
    #allocation7 [shape = 's32[2]{0}', space=sflag, size = 0x8, scoped, tag = 'scoped memory for tpu_custom_call.1']
    #allocation8 [shape = 'u8[131072]{0}', space=vmem, size = 0x20000, scoped, tag = 'input window, operand 4']
    #allocation9 [shape = 'u8[8192]{0}', space=vmem, size = 0x2000, scoped, tag = 'output window, operand 0']
    %12 = vsyncpa [#allocation4], 0
    %s13 = scalar_lea.sflag [#allocation4], 1
    %14 = vsyncpa %s13, 0
    %15 = vsyncpa [#allocation7], 0
    %s16 = scalar_lea.sflag [#allocation7], 1
    %17 = vsyncpa %s16, 0
    %18 = vsyncpa [#allocation5], 0
    %s19 = scalar_lea.sflag [#allocation5], 1
    %20 = vsyncpa %s19, 0
    loop: start=0, step=1, limit=6
    $region2: #{tpu_custom_call.1} parent=1 // loop_pre_header
      _
    $region3: #{tpu_custom_call.1} parent=1 // loop_header
      %s22 = sphi 0, %s26
      %p23 = scmp.ge.s32.totalorder %s22, 6
      %s29 = sphi 0, %s41
      %s30 = sphi 0, %s37
      %s31 = sphi 0, %s29
      %s32 = sphi 0, %s30
      %s33 = sphi 0, %s31
      %s34 = sphi 0, %s32
      %s44 = sphi 0, %s46
      %s47 = sphi 0, %s44
      %s48 = sphi 0, %s47
      %s64 = sphi 0, %s48
      %s70 = sphi 0, %s72
      %s73 = sphi 0, %s70
      %s74 = sphi 0, %s73
      %s90 = sphi 0, %s74
      %s96 = sphi 0, %s98
      %s99 = sphi 0, %s96
      %s100 = sphi 0, %s99
      %s116 = sphi 0, %s100
      %s122 = sphi 0, %s124
      %s125 = sphi 0, %s122
      %s126 = sphi 0, %s125
      %s142 = sphi 0, %s126
      %s148 = sphi 0, %s150
      %s151 = sphi 0, %s148
      %s152 = sphi 0, %s151
      %s168 = sphi 0, %s152
      %s174 = sphi 0, %s176
      %s177 = sphi 0, %s174
      %s178 = sphi 0, %s177
      %s194 = sphi 0, %s178
      %s200 = sphi 0, %s202
      %s203 = sphi 0, %s200
      %s204 = sphi 0, %s203
      %s220 = sphi 0, %s204
      %s226 = sphi 0, %s228
      %s229 = sphi 0, %s226
      %s230 = sphi 0, %s229
      %s246 = sphi 0, %s230
    $region4: #{tpu_custom_call.1} parent=1 // loop_header_branch
      %25 = sbr.rel (%p23) target = $region8
    $region5: #{tpu_custom_call.1} parent=1 // loop_body
      %s27 = ssub.s32 %s22, 1
      %s28 = ssub.s32 %s22, 2
      %s35 = sadd.s32 1, %s30
      %p36 = scmp.ge.s32.totalorder %s35, 2
      %s37 = scalar_select %p36, 0, %s35
      %s38 = sadd.s32 1, %s29
      %s39 = scalar_select %p36, %s38, %s29
      %p40 = scmp.ge.s32.totalorder %s39, 2
      %s41 = scalar_select %p40, 0, %s39
      %s42 = ssub.s32 %s29, %s41
      %p43 = scmp.eq.s32.totalorder %s42, 0
      %s45 = sadd.s32 %s44, 1
      %s46 = scalar_select %p43, %s44, %s45
      %p49 = pneg %p43
      %p50 = scmp.eq.s32.totalorder %s22, 3
      %p51 = por %p49, %p50
      %p52 = scmp.ne.s32.totalorder %s44, %s47
      %p53 = scmp.eq.s32.totalorder %s22, 0
      %p54 = por %p52, %p53
      %p55 = scmp.ne.s32.totalorder %s44, %s47
      %p56 = scmp.eq.s32.totalorder %s27, 3
      %p57 = por %p55, %p56
      %p58 = scmp.ne.s32.totalorder %s47, %s48
      %p59 = scmp.eq.s32.totalorder %s27, 0
      %p60 = por %p58, %p59
      %p61 = scmp.ne.s32.totalorder %s47, %s48
      %p62 = scmp.eq.s32.totalorder %s28, 3
      %p63 = por %p61, %p62
      %p65 = scmp.ne.s32.totalorder %s48, %s64
      %p66 = scmp.eq.s32.totalorder %s28, 0
      %p67 = por %p65, %p66
      %s68 = ssub.s32 %s29, %s41
      %p69 = scmp.eq.s32.totalorder %s68, 0
      %s71 = sadd.s32 %s70, 1
      %s72 = scalar_select %p69, %s70, %s71
      %p75 = pneg %p69
      %p76 = scmp.eq.s32.totalorder %s22, 3
      %p77 = por %p75, %p76
      %p78 = scmp.ne.s32.totalorder %s70, %s73
      %p79 = scmp.eq.s32.totalorder %s22, 0
      %p80 = por %p78, %p79
      %p81 = scmp.ne.s32.totalorder %s70, %s73
      %p82 = scmp.eq.s32.totalorder %s27, 3
      %p83 = por %p81, %p82
      %p84 = scmp.ne.s32.totalorder %s73, %s74
      %p85 = scmp.eq.s32.totalorder %s27, 0
      %p86 = por %p84, %p85
      %p87 = scmp.ne.s32.totalorder %s73, %s74
      %p88 = scmp.eq.s32.totalorder %s28, 3
      %p89 = por %p87, %p88
      %p91 = scmp.ne.s32.totalorder %s74, %s90
      %p92 = scmp.eq.s32.totalorder %s28, 0
      %p93 = por %p91, %p92
      %s94 = ssub.s32 %s30, %s37
      %p95 = scmp.eq.s32.totalorder %s94, 0
      %s97 = sadd.s32 %s96, 1
      %s98 = scalar_select %p95, %s96, %s97
      %p101 = pneg %p95
      %p102 = scmp.eq.s32.totalorder %s22, 3
      %p103 = por %p101, %p102
      %p104 = scmp.ne.s32.totalorder %s96, %s99
      %p105 = scmp.eq.s32.totalorder %s22, 0
      %p106 = por %p104, %p105
      %p107 = scmp.ne.s32.totalorder %s96, %s99
      %p108 = scmp.eq.s32.totalorder %s27, 3
      %p109 = por %p107, %p108
      %p110 = scmp.ne.s32.totalorder %s99, %s100
      %p111 = scmp.eq.s32.totalorder %s27, 0
      %p112 = por %p110, %p111
      %p113 = scmp.ne.s32.totalorder %s99, %s100
      %p114 = scmp.eq.s32.totalorder %s28, 3
      %p115 = por %p113, %p114
      %p117 = scmp.ne.s32.totalorder %s100, %s116
      %p118 = scmp.eq.s32.totalorder %s28, 0
      %p119 = por %p117, %p118
      %s120 = ssub.s32 %s30, %s37
      %p121 = scmp.eq.s32.totalorder %s120, 0
      %s123 = sadd.s32 %s122, 1
      %s124 = scalar_select %p121, %s122, %s123
      %p127 = pneg %p121
      %p128 = scmp.eq.s32.totalorder %s22, 3
      %p129 = por %p127, %p128
      %p130 = scmp.ne.s32.totalorder %s122, %s125
      %p131 = scmp.eq.s32.totalorder %s22, 0
      %p132 = por %p130, %p131
      %p133 = scmp.ne.s32.totalorder %s122, %s125
      %p134 = scmp.eq.s32.totalorder %s27, 3
      %p135 = por %p133, %p134
      %p136 = scmp.ne.s32.totalorder %s125, %s126
      %p137 = scmp.eq.s32.totalorder %s27, 0
      %p138 = por %p136, %p137
      %p139 = scmp.ne.s32.totalorder %s125, %s126
      %p140 = scmp.eq.s32.totalorder %s28, 3
      %p141 = por %p139, %p140
      %p143 = scmp.ne.s32.totalorder %s126, %s142
      %p144 = scmp.eq.s32.totalorder %s28, 0
      %p145 = por %p143, %p144
      %s146 = ssub.s32 %s30, %s37
      %p147 = scmp.eq.s32.totalorder %s146, 0
      %s149 = sadd.s32 %s148, 1
      %s150 = scalar_select %p147, %s148, %s149
      %p153 = pneg %p147
      %p154 = scmp.eq.s32.totalorder %s22, 3
      %p155 = por %p153, %p154
      %p156 = scmp.ne.s32.totalorder %s148, %s151
      %p157 = scmp.eq.s32.totalorder %s22, 0
      %p158 = por %p156, %p157
      %p159 = scmp.ne.s32.totalorder %s148, %s151
      %p160 = scmp.eq.s32.totalorder %s27, 3
      %p161 = por %p159, %p160
      %p162 = scmp.ne.s32.totalorder %s151, %s152
      %p163 = scmp.eq.s32.totalorder %s27, 0
      %p164 = por %p162, %p163
      %p165 = scmp.ne.s32.totalorder %s151, %s152
      %p166 = scmp.eq.s32.totalorder %s28, 3
      %p167 = por %p165, %p166
      %p169 = scmp.ne.s32.totalorder %s152, %s168
      %p170 = scmp.eq.s32.totalorder %s28, 0
      %p171 = por %p169, %p170
      %s172 = ssub.s32 %s30, %s37
      %p173 = scmp.eq.s32.totalorder %s172, 0
      %s175 = sadd.s32 %s174, 1
      %s176 = scalar_select %p173, %s174, %s175
      %p179 = pneg %p173
      %p180 = scmp.eq.s32.totalorder %s22, 3
      %p181 = por %p179, %p180
      %p182 = scmp.ne.s32.totalorder %s174, %s177
      %p183 = scmp.eq.s32.totalorder %s22, 0
      %p184 = por %p182, %p183
      %p185 = scmp.ne.s32.totalorder %s174, %s177
      %p186 = scmp.eq.s32.totalorder %s27, 3
      %p187 = por %p185, %p186
      %p188 = scmp.ne.s32.totalorder %s177, %s178
      %p189 = scmp.eq.s32.totalorder %s27, 0
      %p190 = por %p188, %p189
      %p191 = scmp.ne.s32.totalorder %s177, %s178
      %p192 = scmp.eq.s32.totalorder %s28, 3
      %p193 = por %p191, %p192
      %p195 = scmp.ne.s32.totalorder %s178, %s194
      %p196 = scmp.eq.s32.totalorder %s28, 0
      %p197 = por %p195, %p196
      %s198 = ssub.s32 %s30, %s37
      %p199 = scmp.eq.s32.totalorder %s198, 0
      %s201 = sadd.s32 %s200, 1
      %s202 = scalar_select %p199, %s200, %s201
      %p205 = pneg %p199
      %p206 = scmp.eq.s32.totalorder %s22, 3
      %p207 = por %p205, %p206
      %p208 = scmp.ne.s32.totalorder %s200, %s203
      %p209 = scmp.eq.s32.totalorder %s22, 0
      %p210 = por %p208, %p209
      %p211 = scmp.ne.s32.totalorder %s200, %s203
      %p212 = scmp.eq.s32.totalorder %s27, 3
      %p213 = por %p211, %p212
      %p214 = scmp.ne.s32.totalorder %s203, %s204
      %p215 = scmp.eq.s32.totalorder %s27, 0
      %p216 = por %p214, %p215
      %p217 = scmp.ne.s32.totalorder %s203, %s204
      %p218 = scmp.eq.s32.totalorder %s28, 3
      %p219 = por %p217, %p218
      %p221 = scmp.ne.s32.totalorder %s204, %s220
      %p222 = scmp.eq.s32.totalorder %s28, 0
      %p223 = por %p221, %p222
      %s224 = ssub.s32 %s29, %s41
      %p225 = scmp.eq.s32.totalorder %s224, 0
      %s227 = sadd.s32 %s226, 1
      %s228 = scalar_select %p225, %s226, %s227
      %p231 = pneg %p225
      %p232 = scmp.eq.s32.totalorder %s22, 3
      %p233 = por %p231, %p232
      %p234 = scmp.ne.s32.totalorder %s226, %s229
      %p235 = scmp.eq.s32.totalorder %s22, 0
      %p236 = por %p234, %p235
      %p237 = scmp.ne.s32.totalorder %s226, %s229
      %p238 = scmp.eq.s32.totalorder %s27, 3
      %p239 = por %p237, %p238
      %p240 = scmp.ne.s32.totalorder %s229, %s230
      %p241 = scmp.eq.s32.totalorder %s27, 0
      %p242 = por %p240, %p241
      %p243 = scmp.ne.s32.totalorder %s229, %s230
      %p244 = scmp.eq.s32.totalorder %s28, 3
      %p245 = por %p243, %p244
      %p247 = scmp.ne.s32.totalorder %s230, %s246
      %p248 = scmp.eq.s32.totalorder %s28, 0
      %p249 = por %p247, %p248
      %p250 = scmp.le.s32.totalorder 1, %s22
      %p251 = scmp.lt.s32.totalorder %s22, 5
      %p252 = pnand %p250, %p251
      %p253 = pneg %p252
      // Predicated region
      $region9: #{tpu_custom_call.1} parent=5 // pred_check
        _
      $region10: #{tpu_custom_call.1} parent=5 // pred_check_branch
        %255 = sbr.rel (%p252) target = $region12
      $region11: #{tpu_custom_call.1} parent=5 // pred_region
        %s256 = ssub.s32 %s22, 1
      $region12: #{tpu_custom_call.1} parent=5 // pred_fallthru
        _
      %p257 = scmp.lt.s32.totalorder %s22, 4
      // Predicated region
      $region13: #{tpu_custom_call.1} parent=5 // pred_check
        %p258 = pneg %p257
      $region14: #{tpu_custom_call.1} parent=5 // pred_check_branch
        %260 = sbr.rel (%p258) target = $region16
      $region15: #{tpu_custom_call.1} parent=5 // pred_region
        // Predicated region
        $region17: #{tpu_custom_call.1} parent=15 // pred_check
          %p261 = pneg %p54
        $region18: #{tpu_custom_call.1} parent=15 // pred_check_branch
          %263 = sbr.rel (%p261) target = $region20
        $region19: #{tpu_custom_call.1} parent=15 // pred_region
          %p264 = scmp.lt.s32.totalorder %s29, 1
          %s265 = scalar_select %p264, %s29, 1
          %s266 = smul.addr %s265, 4
          %s267 = scalar_lea.vmem %s0, %s266
        $region20: #{tpu_custom_call.1} parent=15 // pred_fallthru
          _
        // Predicated region
        $region21: #{tpu_custom_call.1} parent=15 // pred_check
          %p268 = pneg %p80
        $region22: #{tpu_custom_call.1} parent=15 // pred_check_branch
          %270 = sbr.rel (%p268) target = $region24
        $region23: #{tpu_custom_call.1} parent=15 // pred_region
          %p271 = scmp.lt.s32.totalorder %s29, 1
          %s272 = scalar_select %p271, %s29, 1
          %s273 = smul.addr %s272, 4
          %s274 = scalar_lea.vmem %s1, %s273
        $region24: #{tpu_custom_call.1} parent=15 // pred_fallthru
          _
        // Predicated region
        $region25: #{tpu_custom_call.1} parent=15 // pred_check
          %p275 = pneg %p106
        $region26: #{tpu_custom_call.1} parent=15 // pred_check_branch
          %277 = sbr.rel (%p275) target = $region28
        $region27: #{tpu_custom_call.1} parent=15 // pred_region
          %s278 = sand.u32 %s96, 1
          %s279 = scalar_lea.sflag [#allocation4], %s278
          %s280 = sand.u32 %s96, 1
          %s281 = smul.addr %s280, 512
          %s282 = scalar_lea.vmem [#allocation3], %s281
          %s284 = ssub.s32 8192, 8192
          %285 = vsyncadd %s279, %s284
          %s286 = smul.addr %s30, 128
          %s287 = smul.addr %s286, 64
          %s288 = scalar_lea.hbm %s2, %s287
          %s289 = sshll.u32 %s282, 4
          %s290 = int_to_ptr.vmem [resolvable:$true] %s289
          %295 = dma.hbm_to_vmem [thread:$0]  %s288, 8192, %s290, %s279, 256, 256, 16
        $region28: #{tpu_custom_call.1} parent=15 // pred_fallthru
          _
        // Predicated region
        $region29: #{tpu_custom_call.1} parent=15 // pred_check
          %p296 = pneg %p132
        $region30: #{tpu_custom_call.1} parent=15 // pred_check_branch
          %298 = sbr.rel (%p296) target = $region32
        $region31: #{tpu_custom_call.1} parent=15 // pred_region
          %s299 = sand.u32 %s22, 1
          %s300 = scalar_lea.sflag [#allocation7], %s299
          %s301 = sand.u32 %s122, 1
          %s302 = smul.addr %s301, 128
          %s303 = scalar_lea.vmem [#allocation6], %s302
          %s305 = ssub.s32 2048, 2048
          %306 = vsyncadd %s300, %s305
          %s307 = smul.addr %s30, 32
          %s308 = smul.addr %s307, 64
          %s309 = scalar_lea.hbm %s3, %s308
          %s310 = sshll.u32 %s303, 4
          %s311 = int_to_ptr.vmem [resolvable:$true] %s310
          %316 = dma.hbm_to_vmem [thread:$0]  %s309, 2048, %s311, %s300, 128, 128, 8
        $region32: #{tpu_custom_call.1} parent=15 // pred_fallthru
          _
        // Predicated region
        $region33: #{tpu_custom_call.1} parent=15 // pred_check
          %p317 = pneg %p158
        $region34: #{tpu_custom_call.1} parent=15 // pred_check_branch
          %319 = sbr.rel (%p317) target = $region36
        $region35: #{tpu_custom_call.1} parent=15 // pred_region
          %s320 = sand.u32 %s22, 1
          %s321 = scalar_lea.sflag [#allocation7], %s320
          %s322 = sand.u32 %s148, 1
          %s323 = smul.addr %s322, 128
          %s324 = scalar_lea.vmem [#allocation8], %s323
          %s326 = ssub.s32 2048, 2048
          %327 = vsyncadd %s321, %s326
          %s328 = smul.addr %s30, 32
          %s329 = smul.addr %s328, 64
          %s330 = scalar_lea.hbm %s4, %s329
          %s331 = sshll.u32 %s324, 4
          %s332 = int_to_ptr.vmem [resolvable:$true] %s331
          %337 = dma.hbm_to_vmem [thread:$0]  %s330, 2048, %s332, %s321, 64, 64, 4
        $region36: #{tpu_custom_call.1} parent=15 // pred_fallthru
          _
        // Predicated region
        $region37: #{tpu_custom_call.1} parent=15 // pred_check
          %p338 = pneg %p184
        $region38: #{tpu_custom_call.1} parent=15 // pred_check_branch
          %340 = sbr.rel (%p338) target = $region40
        $region39: #{tpu_custom_call.1} parent=15 // pred_region
          %p341 = scmp.lt.s32.totalorder %s30, 1
          %s342 = scalar_select %p341, %s30, 1
          %s343 = smul.addr %s342, 2
          %s344 = scalar_lea.vmem %s5, %s343
        $region40: #{tpu_custom_call.1} parent=15 // pred_fallthru
          _
        // Predicated region
        $region41: #{tpu_custom_call.1} parent=15 // pred_check
          %p345 = pneg %p210
        $region42: #{tpu_custom_call.1} parent=15 // pred_check_branch
          %347 = sbr.rel (%p345) target = $region44
        $region43: #{tpu_custom_call.1} parent=15 // pred_region
          %p348 = scmp.lt.s32.totalorder %s30, 1
          %s349 = scalar_select %p348, %s30, 1
          %s350 = smul.addr %s349, 2
          %s351 = smul.addr %s350, 8
          %s352 = scalar_lea.vmem %s6, %s351
        $region44: #{tpu_custom_call.1} parent=15 // pred_fallthru
          _
      $region16: #{tpu_custom_call.1} parent=5 // pred_fallthru
        _
      %p353 = scmp.le.s32.totalorder 1, %s22
      %p354 = scmp.lt.s32.totalorder %s22, 5
      %p355 = pnand %p353, %p354
      %p356 = pneg %p355
      // Predicated region
      $region45: #{tpu_custom_call.1} parent=5 // pred_check
        _
      $region46: #{tpu_custom_call.1} parent=5 // pred_check_branch
        %358 = sbr.rel (%p355) target = $region48
      $region47: #{tpu_custom_call.1} parent=5 // pred_region
        %s359 = ssub.s32 %s22, 1
        %s360 = sand.u32 %s99, 1
        %s361 = scalar_lea.sflag [#allocation4], %s360
        %s362 = sand.u32 %s99, 1
        %s363 = smul.addr %s362, 512
        %s364 = scalar_lea.vmem [#allocation3], %s363
        // Predicated region
        $region49: #{tpu_custom_call.1} parent=47 // pred_check
          %p365 = pneg %p112
        $region50: #{tpu_custom_call.1} parent=47 // pred_check_branch
          %367 = sbr.rel (%p365) target = $region52
        $region51: #{tpu_custom_call.1} parent=47 // pred_region
          %368 = dma.done %s361, 8192
        $region52: #{tpu_custom_call.1} parent=47 // pred_fallthru
          _
        %s369 = sand.u32 %s27, 1
        %s370 = scalar_lea.sflag [#allocation7], %s369
        %s371 = sand.u32 %s125, 1
        %s372 = smul.addr %s371, 128
        %s373 = scalar_lea.vmem [#allocation6], %s372
        // Predicated region
        $region53: #{tpu_custom_call.1} parent=47 // pred_check
          %p374 = pneg %p138
        $region54: #{tpu_custom_call.1} parent=47 // pred_check_branch
          %376 = sbr.rel (%p374) target = $region56
        $region55: #{tpu_custom_call.1} parent=47 // pred_region
          %377 = dma.done %s370, 2048
        $region56: #{tpu_custom_call.1} parent=47 // pred_fallthru
          _
        %s378 = sand.u32 %s27, 1
        %s379 = scalar_lea.sflag [#allocation7], %s378
        %s380 = sand.u32 %s151, 1
        %s381 = smul.addr %s380, 128
        %s382 = scalar_lea.vmem [#allocation8], %s381
        // Predicated region
        $region57: #{tpu_custom_call.1} parent=47 // pred_check
          %p383 = pneg %p164
        $region58: #{tpu_custom_call.1} parent=47 // pred_check_branch
          %385 = sbr.rel (%p383) target = $region60
        $region59: #{tpu_custom_call.1} parent=47 // pred_region
          %386 = dma.done %s379, 2048
        $region60: #{tpu_custom_call.1} parent=47 // pred_fallthru
          _
        %p387 = scmp.lt.s32.totalorder %s31, 1
        %s388 = scalar_select %p387, %s31, 1
        %s389 = smul.addr %s388, 4
        %s390 = scalar_lea.vmem %s0, %s389
        %p391 = pneg %p60
        %p392 = pneg %p57
        %p393 = scmp.lt.s32.totalorder %s31, 1
        %s394 = scalar_select %p393, %s31, 1
        %s395 = smul.addr %s394, 4
        %s396 = scalar_lea.vmem %s1, %s395
        %p397 = pneg %p86
        %p398 = pneg %p83
        %s399 = sand.u32 %s99, 1
        %s400 = scalar_lea.sflag [#allocation4], %s399
        %s401 = sand.u32 %s99, 1
        %s402 = smul.addr %s401, 512
        %s403 = scalar_lea.vmem [#allocation3], %s402
        %p404 = pneg %p112
        %p405 = pneg %p109
        %s406 = sand.u32 %s27, 1
        %s407 = scalar_lea.sflag [#allocation7], %s406
        %s408 = sand.u32 %s125, 1
        %s409 = smul.addr %s408, 128
        %s410 = scalar_lea.vmem [#allocation6], %s409
        %p411 = pneg %p138
        %p412 = pneg %p135
        %s413 = sand.u32 %s27, 1
        %s414 = scalar_lea.sflag [#allocation7], %s413
        %s415 = sand.u32 %s151, 1
        %s416 = smul.addr %s415, 128
        %s417 = scalar_lea.vmem [#allocation8], %s416
        %p418 = pneg %p164
        %p419 = pneg %p161
        %p420 = scmp.lt.s32.totalorder %s32, 1
        %s421 = scalar_select %p420, %s32, 1
        %s422 = smul.addr %s421, 2
        %s423 = scalar_lea.vmem %s5, %s422
        %p424 = pneg %p190
        %p425 = pneg %p187
        %p426 = scmp.lt.s32.totalorder %s32, 1
        %s427 = scalar_select %p426, %s32, 1
        %s428 = smul.addr %s427, 2
        %s429 = smul.addr %s428, 8
        %s430 = scalar_lea.vmem %s6, %s429
        %p431 = pneg %p216
        %p432 = pneg %p213
        %p433 = pneg %p242
        %p434 = pneg %p239
        %s435 = sand.u32 %s229, 1
        %s436 = scalar_lea.sflag [#allocation5], %s435
        %s437 = sand.u32 %s229, 1
        %s438 = smul.addr %s437, 8
        %s439 = scalar_lea.vmem [#allocation9], %s438
        %p440 = scmp.lt.s32.totalorder %s31, 1
        %s441 = scalar_select %p440, %s31, 1
        %s442 = smul.addr %s441, 4
        %s443 = scalar_lea.vmem %s0, %s442
        %p444 = scmp.lt.s32.totalorder %s31, 1
        %s445 = scalar_select %p444, %s31, 1
        %s446 = smul.addr %s445, 4
        %s447 = scalar_lea.vmem %s1, %s446
        %p448 = scmp.lt.s32.totalorder %s32, 1
        %s449 = scalar_select %p448, %s32, 1
        %s450 = smul.addr %s449, 2
        %s451 = scalar_lea.vmem %s5, %s450
        %p452 = scmp.lt.s32.totalorder %s32, 1
        %s453 = scalar_select %p452, %s32, 1
        %s454 = smul.addr %s453, 2
        %s455 = smul.addr %s454, 8
        %s456 = scalar_lea.vmem %s6, %s455
        %p458 = scmp.eq.s32.totalorder %s32, 0
        // Predicated region
        $region61: #{tpu_custom_call.1} parent=47 // pred_check
          %p459 = pneg %p458
        $region62: #{tpu_custom_call.1} parent=47 // pred_check_branch
          %461 = sbr.rel (%p459) target = $region64
        $region63: #{tpu_custom_call.1} parent=47 // pred_region
          %v462 = vld [vmem:[%s443] sm:$0xf]
          %v463 = vunpack.c.l.bf16 %v462
          %464 = vst [vmem:[#allocation2] sm:$0xff] %v463
        $region64: #{tpu_custom_call.1} parent=47 // pred_fallthru
          _
        %v465 = vld [vmem:[#allocation2] sm:$0xff]
        %v466 = vld [vmem:[%s447] sm:$0xf]
        %v467 = vld [vmem:[%s364] sm:$0xff]
        %v468 = vld [vmem:[%s364 + $0x8] sm:$0xff]
        %v469 = vld [vmem:[%s364 + $0x10] sm:$0xff]
        %v470 = vld [vmem:[%s364 + $0x18] sm:$0xff]
        %v471 = vld [vmem:[%s364 + $0x20] sm:$0xff]
        %v472 = vld [vmem:[%s364 + $0x28] sm:$0xff]
        %v473 = vld [vmem:[%s364 + $0x30] sm:$0xff]
        %v474 = vld [vmem:[%s364 + $0x38] sm:$0xff]
        %v475 = vld [vmem:[%s364 + $0x40] sm:$0xff]
        %v476 = vld [vmem:[%s364 + $0x48] sm:$0xff]
        %v477 = vld [vmem:[%s364 + $0x50] sm:$0xff]
        %v478 = vld [vmem:[%s364 + $0x58] sm:$0xff]
        %v479 = vld [vmem:[%s364 + $0x60] sm:$0xff]
        %v480 = vld [vmem:[%s364 + $0x68] sm:$0xff]
        %v481 = vld [vmem:[%s364 + $0x70] sm:$0xff]
        %v482 = vld [vmem:[%s364 + $0x78] sm:$0xff]
        %v483 = vld [vmem:[%s364 + $0x80] sm:$0xff]
        %v484 = vld [vmem:[%s364 + $0x88] sm:$0xff]
        %v485 = vld [vmem:[%s364 + $0x90] sm:$0xff]
        %v486 = vld [vmem:[%s364 + $0x98] sm:$0xff]
        %v487 = vld [vmem:[%s364 + $0xa0] sm:$0xff]
        %v488 = vld [vmem:[%s364 + $0xa8] sm:$0xff]
        %v489 = vld [vmem:[%s364 + $0xb0] sm:$0xff]
        %v490 = vld [vmem:[%s364 + $0xb8] sm:$0xff]
        %v491 = vld [vmem:[%s364 + $0xc0] sm:$0xff]
        %v492 = vld [vmem:[%s364 + $0xc8] sm:$0xff]
        %v493 = vld [vmem:[%s364 + $0xd0] sm:$0xff]
        %v494 = vld [vmem:[%s364 + $0xd8] sm:$0xff]
        %v495 = vld [vmem:[%s364 + $0xe0] sm:$0xff]
        %v496 = vld [vmem:[%s364 + $0xe8] sm:$0xff]
        %v497 = vld [vmem:[%s364 + $0xf0] sm:$0xff]
        %v498 = vld [vmem:[%s364 + $0xf8] sm:$0xff]
        %v499 = vld [vmem:[%s364 + $0x100] sm:$0xff]
        %v500 = vld [vmem:[%s364 + $0x108] sm:$0xff]
        %v501 = vld [vmem:[%s364 + $0x110] sm:$0xff]
        %v502 = vld [vmem:[%s364 + $0x118] sm:$0xff]
        %v503 = vld [vmem:[%s364 + $0x120] sm:$0xff]
        %v504 = vld [vmem:[%s364 + $0x128] sm:$0xff]
        %v505 = vld [vmem:[%s364 + $0x130] sm:$0xff]
        %v506 = vld [vmem:[%s364 + $0x138] sm:$0xff]
        %v507 = vld [vmem:[%s364 + $0x140] sm:$0xff]
        %v508 = vld [vmem:[%s364 + $0x148] sm:$0xff]
        %v509 = vld [vmem:[%s364 + $0x150] sm:$0xff]
        %v510 = vld [vmem:[%s364 + $0x158] sm:$0xff]
        %v511 = vld [vmem:[%s364 + $0x160] sm:$0xff]
        %v512 = vld [vmem:[%s364 + $0x168] sm:$0xff]
        %v513 = vld [vmem:[%s364 + $0x170] sm:$0xff]
        %v514 = vld [vmem:[%s364 + $0x178] sm:$0xff]
        %v515 = vld [vmem:[%s364 + $0x180] sm:$0xff]
        %v516 = vld [vmem:[%s364 + $0x188] sm:$0xff]
        %v517 = vld [vmem:[%s364 + $0x190] sm:$0xff]
        %v518 = vld [vmem:[%s364 + $0x198] sm:$0xff]
        %v519 = vld [vmem:[%s364 + $0x1a0] sm:$0xff]
        %v520 = vld [vmem:[%s364 + $0x1a8] sm:$0xff]
        %v521 = vld [vmem:[%s364 + $0x1b0] sm:$0xff]
        %v522 = vld [vmem:[%s364 + $0x1b8] sm:$0xff]
        %v523 = vld [vmem:[%s364 + $0x1c0] sm:$0xff]
        %v524 = vld [vmem:[%s364 + $0x1c8] sm:$0xff]
        %v525 = vld [vmem:[%s364 + $0x1d0] sm:$0xff]
        %v526 = vld [vmem:[%s364 + $0x1d8] sm:$0xff]
        %v527 = vld [vmem:[%s364 + $0x1e0] sm:$0xff]
        %v528 = vld [vmem:[%s364 + $0x1e8] sm:$0xff]
        %v529 = vld [vmem:[%s364 + $0x1f0] sm:$0xff]
        %v530 = vld [vmem:[%s364 + $0x1f8] sm:$0xff]
        %v531 = vld [vmem:[%s373] sm:$0xff]
        %v532 = vld [vmem:[%s373 + $0x8] sm:$0xff]
        %v533 = vld [vmem:[%s373 + $0x10] sm:$0xff]
        %v534 = vld [vmem:[%s373 + $0x18] sm:$0xff]
        %v535 = vld [vmem:[%s373 + $0x20] sm:$0xff]
        %v536 = vld [vmem:[%s373 + $0x28] sm:$0xff]
        %v537 = vld [vmem:[%s373 + $0x30] sm:$0xff]
        %v538 = vld [vmem:[%s373 + $0x38] sm:$0xff]
        %v539 = vld [vmem:[%s373 + $0x40] sm:$0xff]
        %v540 = vld [vmem:[%s373 + $0x48] sm:$0xff]
        %v541 = vld [vmem:[%s373 + $0x50] sm:$0xff]
        %v542 = vld [vmem:[%s373 + $0x58] sm:$0xff]
        %v543 = vld [vmem:[%s373 + $0x60] sm:$0xff]
        %v544 = vld [vmem:[%s373 + $0x68] sm:$0xff]
        %v545 = vld [vmem:[%s373 + $0x70] sm:$0xff]
        %v546 = vld [vmem:[%s373 + $0x78] sm:$0xff]
        %v547 = vld [vmem:[%s382] sm:$0xf]
        %v548 = vld [vmem:[%s382 + $0x4] sm:$0xf]
        %v549 = vld [vmem:[%s382 + $0x8] sm:$0xf]
        %v550 = vld [vmem:[%s382 + $0xc] sm:$0xf]
        %v551 = vld [vmem:[%s382 + $0x10] sm:$0xf]
        %v552 = vld [vmem:[%s382 + $0x14] sm:$0xf]
        %v553 = vld [vmem:[%s382 + $0x18] sm:$0xf]
        %v554 = vld [vmem:[%s382 + $0x1c] sm:$0xf]
        %v555 = vld [vmem:[%s382 + $0x20] sm:$0xf]
        %v556 = vld [vmem:[%s382 + $0x24] sm:$0xf]
        %v557 = vld [vmem:[%s382 + $0x28] sm:$0xf]
        %v558 = vld [vmem:[%s382 + $0x2c] sm:$0xf]
        %v559 = vld [vmem:[%s382 + $0x30] sm:$0xf]
        %v560 = vld [vmem:[%s382 + $0x34] sm:$0xf]
        %v561 = vld [vmem:[%s382 + $0x38] sm:$0xf]
        %v562 = vld [vmem:[%s382 + $0x3c] sm:$0xf]
        %v563 = vld [vmem:[%s382 + $0x40] sm:$0xf]
        %v564 = vld [vmem:[%s382 + $0x44] sm:$0xf]
        %v565 = vld [vmem:[%s382 + $0x48] sm:$0xf]
        %v566 = vld [vmem:[%s382 + $0x4c] sm:$0xf]
        %v567 = vld [vmem:[%s382 + $0x50] sm:$0xf]
        %v568 = vld [vmem:[%s382 + $0x54] sm:$0xf]
        %v569 = vld [vmem:[%s382 + $0x58] sm:$0xf]
        %v570 = vld [vmem:[%s382 + $0x5c] sm:$0xf]
        %v571 = vld [vmem:[%s382 + $0x60] sm:$0xf]
        %v572 = vld [vmem:[%s382 + $0x64] sm:$0xf]
        %v573 = vld [vmem:[%s382 + $0x68] sm:$0xf]
        %v574 = vld [vmem:[%s382 + $0x6c] sm:$0xf]
        %v575 = vld [vmem:[%s382 + $0x70] sm:$0xf]
        %v576 = vld [vmem:[%s382 + $0x74] sm:$0xf]
        %v577 = vld [vmem:[%s382 + $0x78] sm:$0xf]
        %v578 = vld [vmem:[%s382 + $0x7c] sm:$0xf]
        %v579 = vld [vmem:[%s451] sm:$0x3]
        %v580 = vld [vmem:[%s456] sm:$0xff]
        %v581 = vld [vmem:[%s456 + $0x8] sm:$0x1]
        %v582 = vpack.c.bf16 %v465, %v465
        %v615 = vunpack.c.l.b16 %v467
        %v616 = vunpack.c.h.b16 %v467
        %v617 = vunpack.c.l.b16 %v468
        %v618 = vunpack.c.l.b16 %v469
        %v619 = vunpack.c.h.b16 %v469
        %v620 = vunpack.c.l.b16 %v470
        %v621 = vunpack.c.l.b16 %v471
        %v622 = vunpack.c.h.b16 %v471
        %v623 = vunpack.c.l.b16 %v472
        %v624 = vunpack.c.l.b16 %v473
        %v625 = vunpack.c.h.b16 %v473
        %v626 = vunpack.c.l.b16 %v474
        %v627 = vunpack.c.l.b16 %v475
        %v628 = vunpack.c.h.b16 %v475
        %v629 = vunpack.c.l.b16 %v476
        %v630 = vunpack.c.l.b16 %v477
        %v631 = vunpack.c.h.b16 %v477
        %v632 = vunpack.c.l.b16 %v478
        %v633 = vunpack.c.l.b16 %v479
        %v634 = vunpack.c.h.b16 %v479
        %v635 = vunpack.c.l.b16 %v480
        %v636 = vunpack.c.l.b16 %v481
        %v637 = vunpack.c.h.b16 %v481
        %v638 = vunpack.c.l.b16 %v482
        %v639 = vunpack.c.l.b16 %v483
        %v640 = vunpack.c.h.b16 %v483
        %v641 = vunpack.c.l.b16 %v484
        %v642 = vunpack.c.l.b16 %v485
        %v643 = vunpack.c.h.b16 %v485
        %v644 = vunpack.c.l.b16 %v486
        %v645 = vunpack.c.l.b16 %v487
        %v646 = vunpack.c.h.b16 %v487
        %v647 = vunpack.c.l.b16 %v488
        %v648 = vunpack.c.l.b16 %v489
        %v649 = vunpack.c.h.b16 %v489
        %v650 = vunpack.c.l.b16 %v490
        %v651 = vunpack.c.l.b16 %v491
        %v652 = vunpack.c.h.b16 %v491
        %v653 = vunpack.c.l.b16 %v492
        %v654 = vunpack.c.l.b16 %v493
        %v655 = vunpack.c.h.b16 %v493
        %v656 = vunpack.c.l.b16 %v494
        %v657 = vunpack.c.l.b16 %v495
        %v658 = vunpack.c.h.b16 %v495
        %v659 = vunpack.c.l.b16 %v496
        %v660 = vunpack.c.l.b16 %v497
        %v661 = vunpack.c.h.b16 %v497
        %v662 = vunpack.c.l.b16 %v498
        %v663 = vpack.c.b16 %v618, %v615
        %v664 = vpack.c.b16 %v619, %v616
        %v665 = vpack.c.b16 %v620, %v617
        %v666 = vpack.c.b16 %v624, %v621
        %v667 = vpack.c.b16 %v625, %v622
        %v668 = vpack.c.b16 %v626, %v623
        %v669 = vpack.c.b16 %v630, %v627
        %v670 = vpack.c.b16 %v631, %v628
        %v671 = vpack.c.b16 %v632, %v629
        %v672 = vpack.c.b16 %v636, %v633
        %v673 = vpack.c.b16 %v637, %v634
        %v674 = vpack.c.b16 %v638, %v635
        %v675 = vpack.c.b16 %v642, %v639
        %v676 = vpack.c.b16 %v643, %v640
        %v677 = vpack.c.b16 %v644, %v641
        %v678 = vpack.c.b16 %v648, %v645
        %v679 = vpack.c.b16 %v649, %v646
        %v680 = vpack.c.b16 %v650, %v647
        %v681 = vpack.c.b16 %v654, %v651
        %v682 = vpack.c.b16 %v655, %v652
        %v683 = vpack.c.b16 %v656, %v653
        %v684 = vpack.c.b16 %v660, %v657
        %v685 = vpack.c.b16 %v661, %v658
        %v686 = vpack.c.b16 %v662, %v659
        %711 = vmatprep.subr.bf16.mxu0 %v664
        %712 = vmatpush1.bf16.msra.mxu0 %v663
        %713 = vmatprep.subr.bf16.mxu0 %v667
        %714 = vmatpush1.bf16.msra.mxu0 %v666
        %715 = vmatprep.subr.bf16.mxu0 %v670
        %716 = vmatpush1.bf16.msra.mxu0 %v669
        %717 = vmatprep.subr.bf16.mxu0 %v673
        %718 = vmatpush1.bf16.msra.mxu0 %v672
        %719 = vmatprep.subr.bf16.mxu0 %v676
        %720 = vmatpush1.bf16.msra.mxu0 %v675
        %721 = vmatprep.subr.bf16.mxu0 %v679
        %722 = vmatpush1.bf16.msra.mxu0 %v678
        %723 = vmatprep.subr.bf16.mxu0 %v682
        %724 = vmatpush1.bf16.msra.mxu0 %v681
        %725 = vmatprep.subr.bf16.mxu0 %v685
        %726 = vmatpush1.bf16.msra.mxu0 %v684
        %727 = vmatprep.subr.bf16.mxu0 0
        %728 = vmatpush1.bf16.msra.mxu0 0
        %729 = vmatprep.subr.bf16.mxu0 0
        %730 = vmatpush1.bf16.msra.mxu0 0
        %731 = vmatprep.subr.bf16.mxu0 0
        %732 = vmatpush1.bf16.msra.mxu0 0
        %733 = vmatprep.subr.bf16.mxu0 0
        %734 = vmatpush1.bf16.msra.mxu0 0
        %735 = vmatprep.subr.bf16.mxu0 0
        %736 = vmatpush1.bf16.msra.mxu0 0
        %737 = vmatprep.subr.bf16.mxu0 0
        %738 = vmatpush1.bf16.msra.mxu0 0
        %739 = vmatprep.subr.bf16.mxu0 0
        %740 = vmatpush1.bf16.msra.mxu0 0
        %741 = vmatprep.subr.bf16.mxu0 0
        %742 = vmatpush1.bf16.msra.mxu0 0
        %743 = vmatprep.mubr.bf16.mxu0 0
        %744 = vmatmul.mubr.bf16.gmra.mrb[0].mxu0 %v582
        %v745 = vpop.f32.mrb[0].mxu0
        %v746 = vadd.f32 0.0, %v745
        %v747 = vpop.f32.mrb[0].mxu0
        %v748 = vadd.f32 0.0, %v747
        %v749 = vpop.f32.mrb[0].mxu0
        %v750 = vpop.f32.mrb[0].mxu0
        %751 = vdwg.mxu0
        %752 = vmatprep.subr.bf16.mxu0 0
        %753 = vmatpush1.bf16.msra.mxu0 %v665
        %754 = vmatprep.subr.bf16.mxu0 0
        %755 = vmatpush1.bf16.msra.mxu0 %v668
        %756 = vmatprep.subr.bf16.mxu0 0
        %757 = vmatpush1.bf16.msra.mxu0 %v671
        %758 = vmatprep.subr.bf16.mxu0 0
        %759 = vmatpush1.bf16.msra.mxu0 %v674
        %760 = vmatprep.subr.bf16.mxu0 0
        %761 = vmatpush1.bf16.msra.mxu0 %v677
        %762 = vmatprep.subr.bf16.mxu0 0
        %763 = vmatpush1.bf16.msra.mxu0 %v680
        %764 = vmatprep.subr.bf16.mxu0 0
        %765 = vmatpush1.bf16.msra.mxu0 %v683
        %766 = vmatprep.subr.bf16.mxu0 0
        %767 = vmatpush1.bf16.msra.mxu0 %v686
        %768 = vmatprep.subr.bf16.mxu0 0
        %769 = vmatpush1.bf16.msra.mxu0 0
        %770 = vmatprep.subr.bf16.mxu0 0
        %771 = vmatpush1.bf16.msra.mxu0 0
        %772 = vmatprep.subr.bf16.mxu0 0
        %773 = vmatpush1.bf16.msra.mxu0 0
        %774 = vmatprep.subr.bf16.mxu0 0
        %775 = vmatpush1.bf16.msra.mxu0 0
        %776 = vmatprep.subr.bf16.mxu0 0
        %777 = vmatpush1.bf16.msra.mxu0 0
        %778 = vmatprep.subr.bf16.mxu0 0
        %779 = vmatpush1.bf16.msra.mxu0 0
        %780 = vmatprep.subr.bf16.mxu0 0
        %781 = vmatpush1.bf16.msra.mxu0 0
        %782 = vmatprep.subr.bf16.mxu0 0
        %783 = vmatpush1.bf16.msra.mxu0 0
        %784 = vmatprep.mubr.bf16.mxu0 0
        %785 = vmatmul.mubr.bf16.gmra.mrb[0].mxu0 %v582
        %v786 = vpop.f32.mrb[0].mxu0
        %v787 = vadd.f32 0.0, %v786
        %v788 = vpop.f32.mrb[0].mxu0
        %v789 = vpop.f32.mrb[0].mxu0
        %v790 = vpop.f32.mrb[0].mxu0
        %791 = vdwg.mxu0
        %v792 = vpack.c.bf16 %v746, %v746
        %v793 = vpack.c.bf16 %v748, %v748
        %v794 = vpack.c.bf16 %v787, %v787
        %v795 = vlaneseq
        %v796 = vshrl.u32 %v795, 7
        %v797 = vlaneseq
        %v798 = vand.u32 %v797, 127
        %vm799 = vcmp.gt.s32.totalorder %v798, %v796
        %v800 = vsel %vm799, -1e+30, 0.0
        %vm801 = vcmask 261120
        %v803 = vsel %vm801, %v792, 0
        %v806 = vsel %vm801, %v793, 0
        %808 = vmatprep.subr.bf16.mxu0 0
        %809 = vmatpush1.bf16.xpose.msra.mxu0 %v806
        %810 = vmatprep.subr.bf16.mxu0 0
        %811 = vmatpush1.bf16.xpose.msra.mxu0 0
        %812 = vmatprep.subr.bf16.mxu0 0
        %813 = vmatpush1.bf16.xpose.msra.mxu0 0
        %814 = vmatprep.subr.bf16.mxu0 0
        %815 = vmatpush1.bf16.xpose.msra.mxu0 0
        %816 = vmatprep.subr.bf16.mxu0 0
        %817 = vmatpush1.bf16.xpose.msra.mxu0 0
        %818 = vmatprep.subr.bf16.mxu0 0
        %819 = vmatpush1.bf16.xpose.msra.mxu0 0
        %820 = vmatprep.subr.bf16.mxu0 0
        %821 = vmatpush1.bf16.xpose.msra.mxu0 0
        %822 = vmatprep.subr.bf16.mxu0 0
        %823 = vmatpush1.bf16.xpose.msra.mxu0 0
        %824 = vmatprep.subr.bf16.mxu0 0
        %825 = vmatpush1.bf16.xpose.msra.mxu0 0
        %826 = vmatprep.subr.bf16.mxu0 0
        %827 = vmatpush1.bf16.xpose.msra.mxu0 0
        %828 = vmatprep.subr.bf16.mxu0 0
        %829 = vmatpush1.bf16.xpose.msra.mxu0 0
        %830 = vmatprep.subr.bf16.mxu0 0
        %831 = vmatpush1.bf16.xpose.msra.mxu0 0
        %832 = vmatprep.subr.bf16.mxu0 0
        %833 = vmatpush1.bf16.xpose.msra.mxu0 0
        %834 = vmatprep.subr.bf16.mxu0 0
        %835 = vmatpush1.bf16.xpose.msra.mxu0 0
        %836 = vmatprep.subr.bf16.mxu0 0
        %837 = vmatpush1.bf16.xpose.msra.mxu0 0
        %838 = vmatprep.subr.bf16.mxu0 0
        %839 = vmatpush1.bf16.xpose.msra.mxu0 0
        %840 = vmatprep.mubr.bf16.mxu0 0
        %841 = vmatmul.mubr.bf16.gmra.mrb[0].mxu0 %v803
        %v842 = vpop.f32.mrb[0].mxu0
        %v843 = vadd.f32 0.0, %v842
        %v844 = vpop.f32.mrb[0].mxu0
        %v845 = vpop.f32.mrb[0].mxu0
        %v846 = vpop.f32.mrb[0].mxu0
        %847 = vdwg.mxu0
        %v848 = vmul.f32 %v843, 0.17677669
        %v849 = vadd.f32 %v848, %v800
        %vm850 = vcmask 64512
        %v851 = vsel %vm850, %v849, -inf
        %852 = vmax.xlane.f32.xlu0 %v851
        %v853 = vpop.xlane.xlu0 %852
        %v854 = vsub.f32 %v849, %v853
        %v855 = vmul.f32 %v854, 1.442695
        %v856 = vpow.pop %v855
        %v857 = vsel %vm850, %v856, 0.0
        %858 = vadd.xlane.f32.xlu0 %v857
        %v859 = vpop.xlane.xlu0 %858
        %v860 = vrcp.pop %v859
        %v861 = vmul.f32 %v856, %v860
        %v862 = vpack.c.bf16 %v861, %v861
        %v864 = vsel %vm850, %v862, 0
        %vm866 = vcmask 1043456
        %v868 = vsel %vm866, %v794, 0
        %870 = vmatprep.subr.bf16.mxu0 0
        %871 = vmatpush1.bf16.msra.mxu0 %v868
        %872 = vmatprep.subr.bf16.mxu0 0
        %873 = vmatpush1.bf16.msra.mxu0 0
        %874 = vmatprep.subr.bf16.mxu0 0
        %875 = vmatpush1.bf16.msra.mxu0 0
        %876 = vmatprep.subr.bf16.mxu0 0
        %877 = vmatpush1.bf16.msra.mxu0 0
        %878 = vmatprep.subr.bf16.mxu0 0
        %879 = vmatpush1.bf16.msra.mxu0 0
        %880 = vmatprep.subr.bf16.mxu0 0
        %881 = vmatpush1.bf16.msra.mxu0 0
        %882 = vmatprep.subr.bf16.mxu0 0
        %883 = vmatpush1.bf16.msra.mxu0 0
        %884 = vmatprep.subr.bf16.mxu0 0
        %885 = vmatpush1.bf16.msra.mxu0 0
        %886 = vmatprep.subr.bf16.mxu0 0
        %887 = vmatpush1.bf16.msra.mxu0 0
        %888 = vmatprep.subr.bf16.mxu0 0
        %889 = vmatpush1.bf16.msra.mxu0 0
        %890 = vmatprep.subr.bf16.mxu0 0
        %891 = vmatpush1.bf16.msra.mxu0 0
        %892 = vmatprep.subr.bf16.mxu0 0
        %893 = vmatpush1.bf16.msra.mxu0 0
        %894 = vmatprep.subr.bf16.mxu0 0
        %895 = vmatpush1.bf16.msra.mxu0 0
        %896 = vmatprep.subr.bf16.mxu0 0
        %897 = vmatpush1.bf16.msra.mxu0 0
        %898 = vmatprep.subr.bf16.mxu0 0
        %899 = vmatpush1.bf16.msra.mxu0 0
        %900 = vmatprep.subr.bf16.mxu0 0
        %901 = vmatpush1.bf16.msra.mxu0 0
        %902 = vmatprep.mubr.bf16.mxu0 0
        %903 = vmatmul.mubr.bf16.gmra.mrb[0].mxu0 %v864
        %v904 = vpop.f32.mrb[0].mxu0
        %v905 = vadd.f32 0.0, %v904
        %v906 = vpop.f32.mrb[0].mxu0
        %v907 = vpop.f32.mrb[0].mxu0
        %v908 = vpop.f32.mrb[0].mxu0
        %909 = vdwg.mxu0
        %911 = vrot.lane.b32.xlu0 %v792, 96
        %v912 = vpop.permute.xlu0 %911
        %914 = vrot.lane.b32.xlu0 %v793, 96
        %v915 = vpop.permute.xlu0 %914
        %v917 = vsel %vm801, %v912, 0
        %v920 = vsel %vm801, %v915, 0
        %922 = vmatprep.subr.bf16.mxu0 0
        %923 = vmatpush1.bf16.xpose.msra.mxu0 %v920
        %924 = vmatprep.subr.bf16.mxu0 0
        %925 = vmatpush1.bf16.xpose.msra.mxu0 0
        %926 = vmatprep.subr.bf16.mxu0 0
        %927 = vmatpush1.bf16.xpose.msra.mxu0 0
        %928 = vmatprep.subr.bf16.mxu0 0
        %929 = vmatpush1.bf16.xpose.msra.mxu0 0
        %930 = vmatprep.subr.bf16.mxu0 0
        %931 = vmatpush1.bf16.xpose.msra.mxu0 0
        %932 = vmatprep.subr.bf16.mxu0 0
        %933 = vmatpush1.bf16.xpose.msra.mxu0 0
        %934 = vmatprep.subr.bf16.mxu0 0
        %935 = vmatpush1.bf16.xpose.msra.mxu0 0
        %936 = vmatprep.subr.bf16.mxu0 0
        %937 = vmatpush1.bf16.xpose.msra.mxu0 0
        %938 = vmatprep.subr.bf16.mxu0 0
        %939 = vmatpush1.bf16.xpose.msra.mxu0 0
        %940 = vmatprep.subr.bf16.mxu0 0
        %941 = vmatpush1.bf16.xpose.msra.mxu0 0
        %942 = vmatprep.subr.bf16.mxu0 0
        %943 = vmatpush1.bf16.xpose.msra.mxu0 0
        %944 = vmatprep.subr.bf16.mxu0 0
        %945 = vmatpush1.bf16.xpose.msra.mxu0 0
        %946 = vmatprep.subr.bf16.mxu0 0
        %947 = vmatpush1.bf16.xpose.msra.mxu0 0
        %948 = vmatprep.subr.bf16.mxu0 0
        %949 = vmatpush1.bf16.xpose.msra.mxu0 0
        %950 = vmatprep.subr.bf16.mxu0 0
        %951 = vmatpush1.bf16.xpose.msra.mxu0 0
        %952 = vmatprep.subr.bf16.mxu0 0
        %953 = vmatpush1.bf16.xpose.msra.mxu0 0
        %954 = vmatprep.mubr.bf16.mxu0 0
        %955 = vmatmul.mubr.bf16.gmra.mrb[0].mxu0 %v917
        %v956 = vpop.f32.mrb[0].mxu0
        %v957 = vadd.f32 0.0, %v956
        %v958 = vpop.f32.mrb[0].mxu0
        %v959 = vpop.f32.mrb[0].mxu0
        %v960 = vpop.f32.mrb[0].mxu0
        %961 = vdwg.mxu0
        %v962 = vmul.f32 %v957, 0.17677669
        %v963 = vadd.f32 %v962, %v800
        %v964 = vsel %vm850, %v963, -inf
        %965 = vmax.xlane.f32.xlu0 %v964
        %v966 = vpop.xlane.xlu0 %965
        %v967 = vsub.f32 %v963, %v966
        %v968 = vmul.f32 %v967, 1.442695
        %v969 = vpow.pop %v968
        %v970 = vsel %vm850, %v969, 0.0
        %971 = vadd.xlane.f32.xlu0 %v970
        %v972 = vpop.xlane.xlu0 %971
        %v973 = vrcp.pop %v972
        %v974 = vmul.f32 %v969, %v973
        %v975 = vpack.c.bf16 %v974, %v974
        %977 = vrot.lane.b32.xlu0 %v794, 96
        %v978 = vpop.permute.xlu0 %977
        %v980 = vsel %vm850, %v975, 0
        %v983 = vsel %vm866, %v978, 0
        %985 = vmatprep.subr.bf16.mxu0 0
        %986 = vmatpush1.bf16.msra.mxu0 %v983
        %987 = vmatprep.subr.bf16.mxu0 0
        %988 = vmatpush1.bf16.msra.mxu0 0
        %989 = vmatprep.subr.bf16.mxu0 0
        %990 = vmatpush1.bf16.msra.mxu0 0
        %991 = vmatprep.subr.bf16.mxu0 0
        %992 = vmatpush1.bf16.msra.mxu0 0
        %993 = vmatprep.subr.bf16.mxu0 0
        %994 = vmatpush1.bf16.msra.mxu0 0
        %995 = vmatprep.subr.bf16.mxu0 0
        %996 = vmatpush1.bf16.msra.mxu0 0
        %997 = vmatprep.subr.bf16.mxu0 0
        %998 = vmatpush1.bf16.msra.mxu0 0
        %999 = vmatprep.subr.bf16.mxu0 0
        %1000 = vmatpush1.bf16.msra.mxu0 0
        %1001 = vmatprep.subr.bf16.mxu0 0
        %1002 = vmatpush1.bf16.msra.mxu0 0
        %1003 = vmatprep.subr.bf16.mxu0 0
        %1004 = vmatpush1.bf16.msra.mxu0 0
        %1005 = vmatprep.subr.bf16.mxu0 0
        %1006 = vmatpush1.bf16.msra.mxu0 0
        %1007 = vmatprep.subr.bf16.mxu0 0
        %1008 = vmatpush1.bf16.msra.mxu0 0
        %1009 = vmatprep.subr.bf16.mxu0 0
        %1010 = vmatpush1.bf16.msra.mxu0 0
        %1011 = vmatprep.subr.bf16.mxu0 0
        %1012 = vmatpush1.bf16.msra.mxu0 0
        %1013 = vmatprep.subr.bf16.mxu0 0
        %1014 = vmatpush1.bf16.msra.mxu0 0
        %1015 = vmatprep.subr.bf16.mxu0 0
        %1016 = vmatpush1.bf16.msra.mxu0 0
        %1017 = vmatprep.mubr.bf16.mxu0 0
        %1018 = vmatmul.mubr.bf16.gmra.mrb[0].mxu0 %v980
        %v1019 = vpop.f32.mrb[0].mxu0
        %v1020 = vadd.f32 0.0, %v1019
        %v1021 = vpop.f32.mrb[0].mxu0
        %v1022 = vpop.f32.mrb[0].mxu0
        %v1023 = vpop.f32.mrb[0].mxu0
        %1024 = vdwg.mxu0
        %1025 = vrot.lane.b32.xlu0 %v792, 64
        %v1026 = vpop.permute.xlu0 %1025
        %1027 = vrot.lane.b32.xlu0 %v793, 64
        %v1028 = vpop.permute.xlu0 %1027
        %v1030 = vsel %vm801, %v1026, 0
        %v1033 = vsel %vm801, %v1028, 0
        %1035 = vmatprep.subr.bf16.mxu0 0
        %1036 = vmatpush1.bf16.xpose.msra.mxu0 %v1033
        %1037 = vmatprep.subr.bf16.mxu0 0
        %1038 = vmatpush1.bf16.xpose.msra.mxu0 0
        %1039 = vmatprep.subr.bf16.mxu0 0
        %1040 = vmatpush1.bf16.xpose.msra.mxu0 0
        %1041 = vmatprep.subr.bf16.mxu0 0
        %1042 = vmatpush1.bf16.xpose.msra.mxu0 0
        %1043 = vmatprep.subr.bf16.mxu0 0
        %1044 = vmatpush1.bf16.xpose.msra.mxu0 0
        %1045 = vmatprep.subr.bf16.mxu0 0
        %1046 = vmatpush1.bf16.xpose.msra.mxu0 0
        %1047 = vmatprep.subr.bf16.mxu0 0
        %1048 = vmatpush1.bf16.xpose.msra.mxu0 0
        %1049 = vmatprep.subr.bf16.mxu0 0
        %1050 = vmatpush1.bf16.xpose.msra.mxu0 0
        %1051 = vmatprep.subr.bf16.mxu0 0
        %1052 = vmatpush1.bf16.xpose.msra.mxu0 0
        %1053 = vmatprep.subr.bf16.mxu0 0
        %1054 = vmatpush1.bf16.xpose.msra.mxu0 0
        %1055 = vmatprep.subr.bf16.mxu0 0
        %1056 = vmatpush1.bf16.xpose.msra.mxu0 0
        %1057 = vmatprep.subr.bf16.mxu0 0
        %1058 = vmatpush1.bf16.xpose.msra.mxu0 0
        %1059 = vmatprep.subr.bf16.mxu0 0
        %1060 = vmatpush1.bf16.xpose.msra.mxu0 0
        %1061 = vmatprep.subr.bf16.mxu0 0
        %1062 = vmatpush1.bf16.xpose.msra.mxu0 0
        %1063 = vmatprep.subr.bf16.mxu0 0
        %1064 = vmatpush1.bf16.xpose.msra.mxu0 0
        %1065 = vmatprep.subr.bf16.mxu0 0
        %1066 = vmatpush1.bf16.xpose.msra.mxu0 0
        %1067 = vmatprep.mubr.bf16.mxu0 0
        %1068 = vmatmul.mubr.bf16.gmra.mrb[0].mxu0 %v1030
        %v1069 = vpop.f32.mrb[0].mxu0
        %v1070 = vadd.f32 0.0, %v1069
        %v1071 = vpop.f32.mrb[0].mxu0
        %v1072 = vpop.f32.mrb[0].mxu0
        %v1073 = vpop.f32.mrb[0].mxu0
        %1074 = vdwg.mxu0
        %v1075 = vmul.f32 %v1070, 0.17677669
        %v1076 = vadd.f32 %v1075, %v800
        %v1077 = vsel %vm850, %v1076, -inf
        %1078 = vmax.xlane.f32.xlu0 %v1077
        %v1079 = vpop.xlane.xlu0 %1078
        %v1080 = vsub.f32 %v1076, %v1079
        %v1081 = vmul.f32 %v1080, 1.442695
        %v1082 = vpow.pop %v1081
        %v1083 = vsel %vm850, %v1082, 0.0
        %1084 = vadd.xlane.f32.xlu0 %v1083
        %v1085 = vpop.xlane.xlu0 %1084
        %v1086 = vrcp.pop %v1085
        %v1087 = vmul.f32 %v1082, %v1086
        %v1088 = vpack.c.bf16 %v1087, %v1087
        %1089 = vrot.lane.b32.xlu0 %v794, 64
        %v1090 = vpop.permute.xlu0 %1089
        %v1092 = vsel %vm850, %v1088, 0
        %v1095 = vsel %vm866, %v1090, 0
        %1097 = vmatprep.subr.bf16.mxu0 0
        %1098 = vmatpush1.bf16.msra.mxu0 %v1095
        %1099 = vmatprep.subr.bf16.mxu0 0
        %1100 = vmatpush1.bf16.msra.mxu0 0
        %1101 = vmatprep.subr.bf16.mxu0 0
        %1102 = vmatpush1.bf16.msra.mxu0 0
        %1103 = vmatprep.subr.bf16.mxu0 0
        %1104 = vmatpush1.bf16.msra.mxu0 0
        %1105 = vmatprep.subr.bf16.mxu0 0
        %1106 = vmatpush1.bf16.msra.mxu0 0
        %1107 = vmatprep.subr.bf16.mxu0 0
        %1108 = vmatpush1.bf16.msra.mxu0 0
        %1109 = vmatprep.subr.bf16.mxu0 0
        %1110 = vmatpush1.bf16.msra.mxu0 0
        %1111 = vmatprep.subr.bf16.mxu0 0
        %1112 = vmatpush1.bf16.msra.mxu0 0
        %1113 = vmatprep.subr.bf16.mxu0 0
        %1114 = vmatpush1.bf16.msra.mxu0 0
        %1115 = vmatprep.subr.bf16.mxu0 0
        %1116 = vmatpush1.bf16.msra.mxu0 0
        %1117 = vmatprep.subr.bf16.mxu0 0
        %1118 = vmatpush1.bf16.msra.mxu0 0
        %1119 = vmatprep.subr.bf16.mxu0 0
        %1120 = vmatpush1.bf16.msra.mxu0 0
        %1121 = vmatprep.subr.bf16.mxu0 0
        %1122 = vmatpush1.bf16.msra.mxu0 0
        %1123 = vmatprep.subr.bf16.mxu0 0
        %1124 = vmatpush1.bf16.msra.mxu0 0
        %1125 = vmatprep.subr.bf16.mxu0 0
        %1126 = vmatpush1.bf16.msra.mxu0 0
        %1127 = vmatprep.subr.bf16.mxu0 0
        %1128 = vmatpush1.bf16.msra.mxu0 0
        %1129 = vmatprep.mubr.bf16.mxu0 0
        %1130 = vmatmul.mubr.bf16.gmra.mrb[0].mxu0 %v1092
        %v1131 = vpop.f32.mrb[0].mxu0
        %v1132 = vadd.f32 0.0, %v1131
        %v1133 = vpop.f32.mrb[0].mxu0
        %v1134 = vpop.f32.mrb[0].mxu0
        %v1135 = vpop.f32.mrb[0].mxu0
        %1136 = vdwg.mxu0
        %1137 = vrot.lane.b32.xlu0 %v792, 32
        %v1138 = vpop.permute.xlu0 %1137
        %1139 = vrot.lane.b32.xlu0 %v793, 32
        %v1140 = vpop.permute.xlu0 %1139
        %v1142 = vsel %vm801, %v1138, 0
        %v1145 = vsel %vm801, %v1140, 0
        %1147 = vmatprep.subr.bf16.mxu0 0
        %1148 = vmatpush1.bf16.xpose.msra.mxu0 %v1145
        %1149 = vmatprep.subr.bf16.mxu0 0
        %1150 = vmatpush1.bf16.xpose.msra.mxu0 0
        %1151 = vmatprep.subr.bf16.mxu0 0
        %1152 = vmatpush1.bf16.xpose.msra.mxu0 0
        %1153 = vmatprep.subr.bf16.mxu0 0
        %1154 = vmatpush1.bf16.xpose.msra.mxu0 0
        %1155 = vmatprep.subr.bf16.mxu0 0
        %1156 = vmatpush1.bf16.xpose.msra.mxu0 0
        %1157 = vmatprep.subr.bf16.mxu0 0
        %1158 = vmatpush1.bf16.xpose.msra.mxu0 0
        %1159 = vmatprep.subr.bf16.mxu0 0
        %1160 = vmatpush1.bf16.xpose.msra.mxu0 0
        %1161 = vmatprep.subr.bf16.mxu0 0
        %1162 = vmatpush1.bf16.xpose.msra.mxu0 0
        %1163 = vmatprep.subr.bf16.mxu0 0
        %1164 = vmatpush1.bf16.xpose.msra.mxu0 0
        %1165 = vmatprep.subr.bf16.mxu0 0
        %1166 = vmatpush1.bf16.xpose.msra.mxu0 0
        %1167 = vmatprep.subr.bf16.mxu0 0
        %1168 = vmatpush1.bf16.xpose.msra.mxu0 0
        %1169 = vmatprep.subr.bf16.mxu0 0
        %1170 = vmatpush1.bf16.xpose.msra.mxu0 0
        %1171 = vmatprep.subr.bf16.mxu0 0
        %1172 = vmatpush1.bf16.xpose.msra.mxu0 0
        %1173 = vmatprep.subr.bf16.mxu0 0
        %1174 = vmatpush1.bf16.xpose.msra.mxu0 0
        %1175 = vmatprep.subr.bf16.mxu0 0
        %1176 = vmatpush1.bf16.xpose.msra.mxu0 0
        %1177 = vmatprep.subr.bf16.mxu0 0
        %1178 = vmatpush1.bf16.xpose.msra.mxu0 0
        %1179 = vmatprep.mubr.bf16.mxu0 0
        %1180 = vmatmul.mubr.bf16.gmra.mrb[0].mxu0 %v1142
        %v1181 = vpop.f32.mrb[0].mxu0
        %v1182 = vadd.f32 0.0, %v1181
        %v1183 = vpop.f32.mrb[0].mxu0
        %v1184 = vpop.f32.mrb[0].mxu0
        %v1185 = vpop.f32.mrb[0].mxu0
        %1186 = vdwg.mxu0
        %v1187 = vmul.f32 %v1182, 0.17677669
        %v1188 = vadd.f32 %v1187, %v800
        %v1189 = vsel %vm850, %v1188, -inf
        %1190 = vmax.xlane.f32.xlu0 %v1189
        %v1191 = vpop.xlane.xlu0 %1190
        %v1192 = vsub.f32 %v1188, %v1191
        %v1193 = vmul.f32 %v1192, 1.442695
        %v1194 = vpow.pop %v1193
        %v1195 = vsel %vm850, %v1194, 0.0
        %1196 = vadd.xlane.f32.xlu0 %v1195
        %v1197 = vpop.xlane.xlu0 %1196
        %v1198 = vrcp.pop %v1197
        %v1199 = vmul.f32 %v1194, %v1198
        %v1200 = vpack.c.bf16 %v1199, %v1199
        %1201 = vrot.lane.b32.xlu0 %v794, 32
        %v1202 = vpop.permute.xlu0 %1201
        %v1204 = vsel %vm850, %v1200, 0
        %v1207 = vsel %vm866, %v1202, 0
        %1209 = vmatprep.subr.bf16.mxu0 0
        %1210 = vmatpush1.bf16.msra.mxu0 %v1207
        %1211 = vmatprep.subr.bf16.mxu0 0
        %1212 = vmatpush1.bf16.msra.mxu0 0
        %1213 = vmatprep.subr.bf16.mxu0 0
        %1214 = vmatpush1.bf16.msra.mxu0 0
        %1215 = vmatprep.subr.bf16.mxu0 0
        %1216 = vmatpush1.bf16.msra.mxu0 0
        %1217 = vmatprep.subr.bf16.mxu0 0
        %1218 = vmatpush1.bf16.msra.mxu0 0
        %1219 = vmatprep.subr.bf16.mxu0 0
        %1220 = vmatpush1.bf16.msra.mxu0 0
        %1221 = vmatprep.subr.bf16.mxu0 0
        %1222 = vmatpush1.bf16.msra.mxu0 0
        %1223 = vmatprep.subr.bf16.mxu0 0
        %1224 = vmatpush1.bf16.msra.mxu0 0
        %1225 = vmatprep.subr.bf16.mxu0 0
        %1226 = vmatpush1.bf16.msra.mxu0 0
        %1227 = vmatprep.subr.bf16.mxu0 0
        %1228 = vmatpush1.bf16.msra.mxu0 0
        %1229 = vmatprep.subr.bf16.mxu0 0
        %1230 = vmatpush1.bf16.msra.mxu0 0
        %1231 = vmatprep.subr.bf16.mxu0 0
        %1232 = vmatpush1.bf16.msra.mxu0 0
        %1233 = vmatprep.subr.bf16.mxu0 0
        %1234 = vmatpush1.bf16.msra.mxu0 0
        %1235 = vmatprep.subr.bf16.mxu0 0
        %1236 = vmatpush1.bf16.msra.mxu0 0
        %1237 = vmatprep.subr.bf16.mxu0 0
        %1238 = vmatpush1.bf16.msra.mxu0 0
        %1239 = vmatprep.subr.bf16.mxu0 0
        %1240 = vmatpush1.bf16.msra.mxu0 0
        %1241 = vmatprep.mubr.bf16.mxu0 0
        %1242 = vmatmul.mubr.bf16.gmra.mrb[0].mxu0 %v1204
        %v1243 = vpop.f32.mrb[0].mxu0
        %v1244 = vadd.f32 0.0, %v1243
        %v1245 = vpop.f32.mrb[0].mxu0
        %v1246 = vpop.f32.mrb[0].mxu0
        %v1247 = vpop.f32.mrb[0].mxu0
        %1248 = vdwg.mxu0
        %1250 = vrot.lane.b32.xlu0 %v1020, 32
        %v1251 = vpop.permute.xlu0 %1250
        %1254 = vrot.lane.b32.xlu0 %v1132, 64
        %v1255 = vpop.permute.xlu0 %1254
        %1258 = vrot.lane.b32.xlu0 %v1244, 96
        %v1259 = vpop.permute.xlu0 %1258
        %v1261 = vsel %vm801, %v905, %v1251
        %vm1262 = vcmask 523264
        %v1263 = vsel %vm1262, %v1261, %v1255
        %vm1264 = vcmask 785408
        %v1265 = vsel %vm1264, %v1263, %v1259
        %v1266 = vpack.c.bf16 %v1265, %v1265
        %v1267 = vlaneseq
        %v1268 = vshrl.u32 %v1267, 7
        %v1269 = vsub.s32 0, %v1268
        %v1270 = vrot.slane %v580, %v1269
        %v1271 = vunpack.c.h.b16 %v468
        %v1272 = vunpack.c.h.b16 %v470
        %v1273 = vunpack.c.h.b16 %v472
        %v1274 = vunpack.c.h.b16 %v474
        %v1275 = vunpack.c.h.b16 %v476
        %v1276 = vunpack.c.h.b16 %v478
        %v1277 = vunpack.c.h.b16 %v480
        %v1278 = vunpack.c.h.b16 %v482
        %v1279 = vunpack.c.h.b16 %v484
        %v1280 = vunpack.c.h.b16 %v486
        %v1281 = vunpack.c.h.b16 %v488
        %v1282 = vunpack.c.h.b16 %v490
        %v1283 = vunpack.c.h.b16 %v492
        %v1284 = vunpack.c.h.b16 %v494
        %v1285 = vunpack.c.h.b16 %v496
        %v1286 = vunpack.c.h.b16 %v498
        %v1287 = vpack.c.b16 %v1272, %v1271
        %v1288 = vpack.c.b16 %v1274, %v1273
        %v1289 = vpack.c.b16 %v1276, %v1275
        %v1290 = vpack.c.b16 %v1278, %v1277
        %v1291 = vpack.c.b16 %v1280, %v1279
        %v1292 = vpack.c.b16 %v1282, %v1281
        %v1293 = vpack.c.b16 %v1284, %v1283
        %v1294 = vpack.c.b16 %v1286, %v1285
        %1303 = vmatprep.subr.bf16.mxu0 0
        %1304 = vmatpush1.bf16.msra.mxu0 %v1287
        %1305 = vmatprep.subr.bf16.mxu0 0
        %1306 = vmatpush1.bf16.msra.mxu0 %v1288
        %1307 = vmatprep.subr.bf16.mxu0 0
        %1308 = vmatpush1.bf16.msra.mxu0 %v1289
        %1309 = vmatprep.subr.bf16.mxu0 0
        %1310 = vmatpush1.bf16.msra.mxu0 %v1290
        %1311 = vmatprep.subr.bf16.mxu0 0
        %1312 = vmatpush1.bf16.msra.mxu0 %v1291
        %1313 = vmatprep.subr.bf16.mxu0 0
        %1314 = vmatpush1.bf16.msra.mxu0 %v1292
        %1315 = vmatprep.subr.bf16.mxu0 0
        %1316 = vmatpush1.bf16.msra.mxu0 %v1293
        %1317 = vmatprep.subr.bf16.mxu0 0
        %1318 = vmatpush1.bf16.msra.mxu0 %v1294
        %1319 = vmatprep.subr.bf16.mxu0 0
        %1320 = vmatpush1.bf16.msra.mxu0 0
        %1321 = vmatprep.subr.bf16.mxu0 0
        %1322 = vmatpush1.bf16.msra.mxu0 0
        %1323 = vmatprep.subr.bf16.mxu0 0
        %1324 = vmatpush1.bf16.msra.mxu0 0
        %1325 = vmatprep.subr.bf16.mxu0 0
        %1326 = vmatpush1.bf16.msra.mxu0 0
        %1327 = vmatprep.subr.bf16.mxu0 0
        %1328 = vmatpush1.bf16.msra.mxu0 0
        %1329 = vmatprep.subr.bf16.mxu0 0
        %1330 = vmatpush1.bf16.msra.mxu0 0
        %1331 = vmatprep.subr.bf16.mxu0 0
        %1332 = vmatpush1.bf16.msra.mxu0 0
        %1333 = vmatprep.subr.bf16.mxu0 0
        %1334 = vmatpush1.bf16.msra.mxu0 0
        %1335 = vmatprep.mubr.bf16.mxu0 0
        %1336 = vmatmul.mubr.bf16.gmra.mrb[0].mxu0 %v1266
        %v1337 = vpop.f32.mrb[0].mxu0
        %v1338 = vadd.f32 %v1270, %v1337
        %v1339 = vpop.f32.mrb[0].mxu0
        %v1340 = vpop.f32.mrb[0].mxu0
        %v1341 = vpop.f32.mrb[0].mxu0
        %1342 = vdwg.mxu0
        %v1343 = vadd.f32 %v1338, %v465
        %1344 = vadd.xlane.f32.xlu0 %v1343
        %v1345 = vpop.xlane.xlu0 %1344
        %v1346 = vrcp.pop 128.0
        %v1347 = vmul.f32 %v1345, %v1346
        %v1348 = vsub.f32 %v1343, %v1347
        %v1349 = vmul.f32 %v1348, %v1348
        %1350 = vadd.xlane.f32.xlu0 %v1349
        %v1351 = vpop.xlane.xlu0 %1350
        %v1352 = vmul.f32 %v1351, %v1346
        %v1353 = vadd.f32 %v1352, 1e-05
        %v1354 = vrsqrt.pop %v1353
        %v1355 = vmul.f32 %v1348, %v1354
        %v1356 = vlaneseq
        %v1357 = vshrl.u32 %v1356, 7
        %v1358 = vsub.s32 3, %v1357
        %v1359 = vrot.slane %v580, %v1358
        %v1360 = vmul.f32 %v1355, %v1359
        %v1361 = vlaneseq
        %v1362 = vshrl.u32 %v1361, 7
        %v1363 = vsub.s32 4, %v1362
        %v1364 = vrot.slane %v580, %v1363
        %v1365 = vadd.f32 %v1360, %v1364
        %v1366 = vpack.c.bf16 %v1365, %v1365
        %v1383 = vunpack.c.l.b16 %v499
        %v1384 = vunpack.c.l.b16 %v501
        %v1385 = vunpack.c.l.b16 %v503
        %v1386 = vunpack.c.l.b16 %v505
        %v1387 = vunpack.c.l.b16 %v507
        %v1388 = vunpack.c.l.b16 %v509
        %v1389 = vunpack.c.l.b16 %v511
        %v1390 = vunpack.c.l.b16 %v513
        %v1391 = vunpack.c.l.b16 %v515
        %v1392 = vunpack.c.l.b16 %v517
        %v1393 = vunpack.c.l.b16 %v519
        %v1394 = vunpack.c.l.b16 %v521
        %v1395 = vunpack.c.l.b16 %v523
        %v1396 = vunpack.c.l.b16 %v525
        %v1397 = vunpack.c.l.b16 %v527
        %v1398 = vunpack.c.l.b16 %v529
        %v1399 = vpack.c.b16 %v1384, %v1383
        %v1400 = vpack.c.b16 %v1386, %v1385
        %v1401 = vpack.c.b16 %v1388, %v1387
        %v1402 = vpack.c.b16 %v1390, %v1389
        %v1403 = vpack.c.b16 %v1392, %v1391
        %v1404 = vpack.c.b16 %v1394, %v1393
        %v1405 = vpack.c.b16 %v1396, %v1395
        %v1406 = vpack.c.b16 %v1398, %v1397
        %1415 = vmatprep.subr.bf16.mxu0 0
        %1416 = vmatpush1.bf16.msra.mxu0 %v1399
        %1417 = vmatprep.subr.bf16.mxu0 0
        %1418 = vmatpush1.bf16.msra.mxu0 %v1400
        %1419 = vmatprep.subr.bf16.mxu0 0
        %1420 = vmatpush1.bf16.msra.mxu0 %v1401
        %1421 = vmatprep.subr.bf16.mxu0 0
        %1422 = vmatpush1.bf16.msra.mxu0 %v1402
        %1423 = vmatprep.subr.bf16.mxu0 0
        %1424 = vmatpush1.bf16.msra.mxu0 %v1403
        %1425 = vmatprep.subr.bf16.mxu0 0
        %1426 = vmatpush1.bf16.msra.mxu0 %v1404
        %1427 = vmatprep.subr.bf16.mxu0 0
        %1428 = vmatpush1.bf16.msra.mxu0 %v1405
        %1429 = vmatprep.subr.bf16.mxu0 0
        %1430 = vmatpush1.bf16.msra.mxu0 %v1406
        %1431 = vmatprep.subr.bf16.mxu0 0
        %1432 = vmatpush1.bf16.msra.mxu0 0
        %1433 = vmatprep.subr.bf16.mxu0 0
        %1434 = vmatpush1.bf16.msra.mxu0 0
        %1435 = vmatprep.subr.bf16.mxu0 0
        %1436 = vmatpush1.bf16.msra.mxu0 0
        %1437 = vmatprep.subr.bf16.mxu0 0
        %1438 = vmatpush1.bf16.msra.mxu0 0
        %1439 = vmatprep.subr.bf16.mxu0 0
        %1440 = vmatpush1.bf16.msra.mxu0 0
        %1441 = vmatprep.subr.bf16.mxu0 0
        %1442 = vmatpush1.bf16.msra.mxu0 0
        %1443 = vmatprep.subr.bf16.mxu0 0
        %1444 = vmatpush1.bf16.msra.mxu0 0
        %1445 = vmatprep.subr.bf16.mxu0 0
        %1446 = vmatpush1.bf16.msra.mxu0 0
        %1447 = vmatprep.mubr.bf16.mxu0 0
        %1448 = vmatmul.mubr.bf16.gmra.mrb[0].mxu0 %v1366
        %v1449 = vpop.f32.mrb[0].mxu0
        %v1450 = vadd.f32 0.0, %v1449
        %v1451 = vpop.f32.mrb[0].mxu0
        %v1452 = vpop.f32.mrb[0].mxu0
        %v1453 = vpop.f32.mrb[0].mxu0
        %1454 = vdwg.mxu0
        %v1471 = vunpack.c.h.b16 %v499
        %v1472 = vunpack.c.l.b16 %v500
        %v1473 = vunpack.c.h.b16 %v501
        %v1474 = vunpack.c.l.b16 %v502
        %v1475 = vunpack.c.h.b16 %v503
        %v1476 = vunpack.c.l.b16 %v504
        %v1477 = vunpack.c.h.b16 %v505
        %v1478 = vunpack.c.l.b16 %v506
        %v1479 = vunpack.c.h.b16 %v507
        %v1480 = vunpack.c.l.b16 %v508
        %v1481 = vunpack.c.h.b16 %v509
        %v1482 = vunpack.c.l.b16 %v510
        %v1483 = vunpack.c.h.b16 %v511
        %v1484 = vunpack.c.l.b16 %v512
        %v1485 = vunpack.c.h.b16 %v513
        %v1486 = vunpack.c.l.b16 %v514
        %v1487 = vunpack.c.h.b16 %v515
        %v1488 = vunpack.c.l.b16 %v516
        %v1489 = vunpack.c.h.b16 %v517
        %v1490 = vunpack.c.l.b16 %v518
        %v1491 = vunpack.c.h.b16 %v519
        %v1492 = vunpack.c.l.b16 %v520
        %v1493 = vunpack.c.h.b16 %v521
        %v1494 = vunpack.c.l.b16 %v522
        %v1495 = vunpack.c.h.b16 %v523
        %v1496 = vunpack.c.l.b16 %v524
        %v1497 = vunpack.c.h.b16 %v525
        %v1498 = vunpack.c.l.b16 %v526
        %v1499 = vunpack.c.h.b16 %v527
        %v1500 = vunpack.c.l.b16 %v528
        %v1501 = vunpack.c.h.b16 %v529
        %v1502 = vunpack.c.l.b16 %v530
        %v1503 = vpack.c.b16 %v1473, %v1471
        %v1504 = vpack.c.b16 %v1474, %v1472
        %v1505 = vpack.c.b16 %v1477, %v1475
        %v1506 = vpack.c.b16 %v1478, %v1476
        %v1507 = vpack.c.b16 %v1481, %v1479
        %v1508 = vpack.c.b16 %v1482, %v1480
        %v1509 = vpack.c.b16 %v1485, %v1483
        %v1510 = vpack.c.b16 %v1486, %v1484
        %v1511 = vpack.c.b16 %v1489, %v1487
        %v1512 = vpack.c.b16 %v1490, %v1488
        %v1513 = vpack.c.b16 %v1493, %v1491
        %v1514 = vpack.c.b16 %v1494, %v1492
        %v1515 = vpack.c.b16 %v1497, %v1495
        %v1516 = vpack.c.b16 %v1498, %v1496
        %v1517 = vpack.c.b16 %v1501, %v1499
        %v1518 = vpack.c.b16 %v1502, %v1500
        %1535 = vmatprep.subr.bf16.mxu0 %v1504
        %1536 = vmatpush1.bf16.msra.mxu0 %v1503
        %1537 = vmatprep.subr.bf16.mxu0 %v1506
        %1538 = vmatpush1.bf16.msra.mxu0 %v1505
        %1539 = vmatprep.subr.bf16.mxu0 %v1508
        %1540 = vmatpush1.bf16.msra.mxu0 %v1507
        %1541 = vmatprep.subr.bf16.mxu0 %v1510
        %1542 = vmatpush1.bf16.msra.mxu0 %v1509
        %1543 = vmatprep.subr.bf16.mxu0 %v1512
        %1544 = vmatpush1.bf16.msra.mxu0 %v1511
        %1545 = vmatprep.subr.bf16.mxu0 %v1514
        %1546 = vmatpush1.bf16.msra.mxu0 %v1513
        %1547 = vmatprep.subr.bf16.mxu0 %v1516
        %1548 = vmatpush1.bf16.msra.mxu0 %v1515
        %1549 = vmatprep.subr.bf16.mxu0 %v1518
        %1550 = vmatpush1.bf16.msra.mxu0 %v1517
        %1551 = vmatprep.subr.bf16.mxu0 0
        %1552 = vmatpush1.bf16.msra.mxu0 0
        %1553 = vmatprep.subr.bf16.mxu0 0
        %1554 = vmatpush1.bf16.msra.mxu0 0
        %1555 = vmatprep.subr.bf16.mxu0 0
        %1556 = vmatpush1.bf16.msra.mxu0 0
        %1557 = vmatprep.subr.bf16.mxu0 0
        %1558 = vmatpush1.bf16.msra.mxu0 0
        %1559 = vmatprep.subr.bf16.mxu0 0
        %1560 = vmatpush1.bf16.msra.mxu0 0
        %1561 = vmatprep.subr.bf16.mxu0 0
        %1562 = vmatpush1.bf16.msra.mxu0 0
        %1563 = vmatprep.subr.bf16.mxu0 0
        %1564 = vmatpush1.bf16.msra.mxu0 0
        %1565 = vmatprep.subr.bf16.mxu0 0
        %1566 = vmatpush1.bf16.msra.mxu0 0
        %1567 = vmatprep.mubr.bf16.mxu0 0
        %1568 = vmatmul.mubr.bf16.gmra.mrb[0].mxu0 %v466
        %v1569 = vpop.f32.mrb[0].mxu0
        %v1570 = vadd.f32 0.0, %v1569
        %v1571 = vpop.f32.mrb[0].mxu0
        %v1572 = vadd.f32 0.0, %v1571
        %v1573 = vpop.f32.mrb[0].mxu0
        %v1574 = vpop.f32.mrb[0].mxu0
        %1575 = vdwg.mxu0
        %v1576 = vpack.c.bf16 %v1450, %v1450
        %v1577 = vpack.c.bf16 %v1570, %v1570
        %v1578 = vpack.c.bf16 %v1572, %v1572
        %v1580 = vsel %vm801, %v1576, 0
        %v1583 = vsel %vm801, %v1577, 0
        %1585 = vmatprep.subr.bf16.mxu0 0
        %1586 = vmatpush1.bf16.xpose.msra.mxu0 %v1583
        %1587 = vmatprep.subr.bf16.mxu0 0
        %1588 = vmatpush1.bf16.xpose.msra.mxu0 0
        %1589 = vmatprep.subr.bf16.mxu0 0
        %1590 = vmatpush1.bf16.xpose.msra.mxu0 0
        %1591 = vmatprep.subr.bf16.mxu0 0
        %1592 = vmatpush1.bf16.xpose.msra.mxu0 0
        %1593 = vmatprep.subr.bf16.mxu0 0
        %1594 = vmatpush1.bf16.xpose.msra.mxu0 0
        %1595 = vmatprep.subr.bf16.mxu0 0
        %1596 = vmatpush1.bf16.xpose.msra.mxu0 0
        %1597 = vmatprep.subr.bf16.mxu0 0
        %1598 = vmatpush1.bf16.xpose.msra.mxu0 0
        %1599 = vmatprep.subr.bf16.mxu0 0
        %1600 = vmatpush1.bf16.xpose.msra.mxu0 0
        %1601 = vmatprep.subr.bf16.mxu0 0
        %1602 = vmatpush1.bf16.xpose.msra.mxu0 0
        %1603 = vmatprep.subr.bf16.mxu0 0
        %1604 = vmatpush1.bf16.xpose.msra.mxu0 0
        %1605 = vmatprep.subr.bf16.mxu0 0
        %1606 = vmatpush1.bf16.xpose.msra.mxu0 0
        %1607 = vmatprep.subr.bf16.mxu0 0
        %1608 = vmatpush1.bf16.xpose.msra.mxu0 0
        %1609 = vmatprep.subr.bf16.mxu0 0
        %1610 = vmatpush1.bf16.xpose.msra.mxu0 0
        %1611 = vmatprep.subr.bf16.mxu0 0
        %1612 = vmatpush1.bf16.xpose.msra.mxu0 0
        %1613 = vmatprep.subr.bf16.mxu0 0
        %1614 = vmatpush1.bf16.xpose.msra.mxu0 0
        %1615 = vmatprep.subr.bf16.mxu0 0
        %1616 = vmatpush1.bf16.xpose.msra.mxu0 0
        %1617 = vmatprep.mubr.bf16.mxu0 0
        %1618 = vmatmul.mubr.bf16.gmra.mrb[0].mxu0 %v1580
        %v1619 = vpop.f32.mrb[0].mxu0
        %v1620 = vadd.f32 0.0, %v1619
        %v1621 = vpop.f32.mrb[0].mxu0
        %v1622 = vpop.f32.mrb[0].mxu0
        %v1623 = vpop.f32.mrb[0].mxu0
        %1624 = vdwg.mxu0
        %v1625 = vmul.f32 %v1620, 0.17677669
        %v1626 = vsel %vm850, %v1625, -inf
        %1627 = vmax.xlane.f32.xlu0 %v1626
        %v1628 = vpop.xlane.xlu0 %1627
        %v1629 = vsub.f32 %v1625, %v1628
        %v1630 = vmul.f32 %v1629, 1.442695
        %v1631 = vpow.pop %v1630
        %v1632 = vsel %vm850, %v1631, 0.0
        %1633 = vadd.xlane.f32.xlu0 %v1632
        %v1634 = vpop.xlane.xlu0 %1633
        %v1635 = vrcp.pop %v1634
        %v1636 = vmul.f32 %v1631, %v1635
        %v1637 = vpack.c.bf16 %v1636, %v1636
        %v1639 = vsel %vm850, %v1637, 0
        %v1642 = vsel %vm866, %v1578, 0
        %1644 = vmatprep.subr.bf16.mxu0 0
        %1645 = vmatpush1.bf16.msra.mxu0 %v1642
        %1646 = vmatprep.subr.bf16.mxu0 0
        %1647 = vmatpush1.bf16.msra.mxu0 0
        %1648 = vmatprep.subr.bf16.mxu0 0
        %1649 = vmatpush1.bf16.msra.mxu0 0
        %1650 = vmatprep.subr.bf16.mxu0 0
        %1651 = vmatpush1.bf16.msra.mxu0 0
        %1652 = vmatprep.subr.bf16.mxu0 0
        %1653 = vmatpush1.bf16.msra.mxu0 0
        %1654 = vmatprep.subr.bf16.mxu0 0
        %1655 = vmatpush1.bf16.msra.mxu0 0
        %1656 = vmatprep.subr.bf16.mxu0 0
        %1657 = vmatpush1.bf16.msra.mxu0 0
        %1658 = vmatprep.subr.bf16.mxu0 0
        %1659 = vmatpush1.bf16.msra.mxu0 0
        %1660 = vmatprep.subr.bf16.mxu0 0
        %1661 = vmatpush1.bf16.msra.mxu0 0
        %1662 = vmatprep.subr.bf16.mxu0 0
        %1663 = vmatpush1.bf16.msra.mxu0 0
        %1664 = vmatprep.subr.bf16.mxu0 0
        %1665 = vmatpush1.bf16.msra.mxu0 0
        %1666 = vmatprep.subr.bf16.mxu0 0
        %1667 = vmatpush1.bf16.msra.mxu0 0
        %1668 = vmatprep.subr.bf16.mxu0 0
        %1669 = vmatpush1.bf16.msra.mxu0 0
        %1670 = vmatprep.subr.bf16.mxu0 0
        %1671 = vmatpush1.bf16.msra.mxu0 0
        %1672 = vmatprep.subr.bf16.mxu0 0
        %1673 = vmatpush1.bf16.msra.mxu0 0
        %1674 = vmatprep.subr.bf16.mxu0 0
        %1675 = vmatpush1.bf16.msra.mxu0 0
        %1676 = vmatprep.mubr.bf16.mxu0 0
        %1677 = vmatmul.mubr.bf16.gmra.mrb[0].mxu0 %v1639
        %v1678 = vpop.f32.mrb[0].mxu0
        %v1679 = vadd.f32 0.0, %v1678
        %v1680 = vpop.f32.mrb[0].mxu0
        %v1681 = vpop.f32.mrb[0].mxu0
        %v1682 = vpop.f32.mrb[0].mxu0
        %1683 = vdwg.mxu0
        %1685 = vrot.lane.b32.xlu0 %v1576, 96
        %v1686 = vpop.permute.xlu0 %1685
        %1688 = vrot.lane.b32.xlu0 %v1577, 96
        %v1689 = vpop.permute.xlu0 %1688
        %v1691 = vsel %vm801, %v1686, 0
        %v1694 = vsel %vm801, %v1689, 0
        %1696 = vmatprep.subr.bf16.mxu0 0
        %1697 = vmatpush1.bf16.xpose.msra.mxu0 %v1694
        %1698 = vmatprep.subr.bf16.mxu0 0
        %1699 = vmatpush1.bf16.xpose.msra.mxu0 0
        %1700 = vmatprep.subr.bf16.mxu0 0
        %1701 = vmatpush1.bf16.xpose.msra.mxu0 0
        %1702 = vmatprep.subr.bf16.mxu0 0
        %1703 = vmatpush1.bf16.xpose.msra.mxu0 0
        %1704 = vmatprep.subr.bf16.mxu0 0
        %1705 = vmatpush1.bf16.xpose.msra.mxu0 0
        %1706 = vmatprep.subr.bf16.mxu0 0
        %1707 = vmatpush1.bf16.xpose.msra.mxu0 0
        %1708 = vmatprep.subr.bf16.mxu0 0
        %1709 = vmatpush1.bf16.xpose.msra.mxu0 0
        %1710 = vmatprep.subr.bf16.mxu0 0
        %1711 = vmatpush1.bf16.xpose.msra.mxu0 0
        %1712 = vmatprep.subr.bf16.mxu0 0
        %1713 = vmatpush1.bf16.xpose.msra.mxu0 0
        %1714 = vmatprep.subr.bf16.mxu0 0
        %1715 = vmatpush1.bf16.xpose.msra.mxu0 0
        %1716 = vmatprep.subr.bf16.mxu0 0
        %1717 = vmatpush1.bf16.xpose.msra.mxu0 0
        %1718 = vmatprep.subr.bf16.mxu0 0
        %1719 = vmatpush1.bf16.xpose.msra.mxu0 0
        %1720 = vmatprep.subr.bf16.mxu0 0
        %1721 = vmatpush1.bf16.xpose.msra.mxu0 0
        %1722 = vmatprep.subr.bf16.mxu0 0
        %1723 = vmatpush1.bf16.xpose.msra.mxu0 0
        %1724 = vmatprep.subr.bf16.mxu0 0
        %1725 = vmatpush1.bf16.xpose.msra.mxu0 0
        %1726 = vmatprep.subr.bf16.mxu0 0
        %1727 = vmatpush1.bf16.xpose.msra.mxu0 0
        %1728 = vmatprep.mubr.bf16.mxu0 0
        %1729 = vmatmul.mubr.bf16.gmra.mrb[0].mxu0 %v1691
        %v1730 = vpop.f32.mrb[0].mxu0
        %v1731 = vadd.f32 0.0, %v1730
        %v1732 = vpop.f32.mrb[0].mxu0
        %v1733 = vpop.f32.mrb[0].mxu0
        %v1734 = vpop.f32.mrb[0].mxu0
        %1735 = vdwg.mxu0
        %v1736 = vmul.f32 %v1731, 0.17677669
        %v1737 = vsel %vm850, %v1736, -inf
        %1738 = vmax.xlane.f32.xlu0 %v1737
        %v1739 = vpop.xlane.xlu0 %1738
        %v1740 = vsub.f32 %v1736, %v1739
        %v1741 = vmul.f32 %v1740, 1.442695
        %v1742 = vpow.pop %v1741
        %v1743 = vsel %vm850, %v1742, 0.0
        %1744 = vadd.xlane.f32.xlu0 %v1743
        %v1745 = vpop.xlane.xlu0 %1744
        %v1746 = vrcp.pop %v1745
        %v1747 = vmul.f32 %v1742, %v1746
        %v1748 = vpack.c.bf16 %v1747, %v1747
        %1750 = vrot.lane.b32.xlu0 %v1578, 96
        %v1751 = vpop.permute.xlu0 %1750
        %v1753 = vsel %vm850, %v1748, 0
        %v1756 = vsel %vm866, %v1751, 0
        %1758 = vmatprep.subr.bf16.mxu0 0
        %1759 = vmatpush1.bf16.msra.mxu0 %v1756
        %1760 = vmatprep.subr.bf16.mxu0 0
        %1761 = vmatpush1.bf16.msra.mxu0 0
        %1762 = vmatprep.subr.bf16.mxu0 0
        %1763 = vmatpush1.bf16.msra.mxu0 0
        %1764 = vmatprep.subr.bf16.mxu0 0
        %1765 = vmatpush1.bf16.msra.mxu0 0
        %1766 = vmatprep.subr.bf16.mxu0 0
        %1767 = vmatpush1.bf16.msra.mxu0 0
        %1768 = vmatprep.subr.bf16.mxu0 0
        %1769 = vmatpush1.bf16.msra.mxu0 0
        %1770 = vmatprep.subr.bf16.mxu0 0
        %1771 = vmatpush1.bf16.msra.mxu0 0
        %1772 = vmatprep.subr.bf16.mxu0 0
        %1773 = vmatpush1.bf16.msra.mxu0 0
        %1774 = vmatprep.subr.bf16.mxu0 0
        %1775 = vmatpush1.bf16.msra.mxu0 0
        %1776 = vmatprep.subr.bf16.mxu0 0
        %1777 = vmatpush1.bf16.msra.mxu0 0
        %1778 = vmatprep.subr.bf16.mxu0 0
        %1779 = vmatpush1.bf16.msra.mxu0 0
        %1780 = vmatprep.subr.bf16.mxu0 0
        %1781 = vmatpush1.bf16.msra.mxu0 0
        %1782 = vmatprep.subr.bf16.mxu0 0
        %1783 = vmatpush1.bf16.msra.mxu0 0
        %1784 = vmatprep.subr.bf16.mxu0 0
        %1785 = vmatpush1.bf16.msra.mxu0 0
        %1786 = vmatprep.subr.bf16.mxu0 0
        %1787 = vmatpush1.bf16.msra.mxu0 0
        %1788 = vmatprep.subr.bf16.mxu0 0
        %1789 = vmatpush1.bf16.msra.mxu0 0
        %1790 = vmatprep.mubr.bf16.mxu0 0
        %1791 = vmatmul.mubr.bf16.gmra.mrb[0].mxu0 %v1753
        %v1792 = vpop.f32.mrb[0].mxu0
        %v1793 = vadd.f32 0.0, %v1792
        %v1794 = vpop.f32.mrb[0].mxu0
        %v1795 = vpop.f32.mrb[0].mxu0
        %v1796 = vpop.f32.mrb[0].mxu0
        %1797 = vdwg.mxu0
        %1798 = vrot.lane.b32.xlu0 %v1576, 64
        %v1799 = vpop.permute.xlu0 %1798
        %1800 = vrot.lane.b32.xlu0 %v1577, 64
        %v1801 = vpop.permute.xlu0 %1800
        %v1803 = vsel %vm801, %v1799, 0
        %v1806 = vsel %vm801, %v1801, 0
        %1808 = vmatprep.subr.bf16.mxu0 0
        %1809 = vmatpush1.bf16.xpose.msra.mxu0 %v1806
        %1810 = vmatprep.subr.bf16.mxu0 0
        %1811 = vmatpush1.bf16.xpose.msra.mxu0 0
        %1812 = vmatprep.subr.bf16.mxu0 0
        %1813 = vmatpush1.bf16.xpose.msra.mxu0 0
        %1814 = vmatprep.subr.bf16.mxu0 0
        %1815 = vmatpush1.bf16.xpose.msra.mxu0 0
        %1816 = vmatprep.subr.bf16.mxu0 0
        %1817 = vmatpush1.bf16.xpose.msra.mxu0 0
        %1818 = vmatprep.subr.bf16.mxu0 0
        %1819 = vmatpush1.bf16.xpose.msra.mxu0 0
        %1820 = vmatprep.subr.bf16.mxu0 0
        %1821 = vmatpush1.bf16.xpose.msra.mxu0 0
        %1822 = vmatprep.subr.bf16.mxu0 0
        %1823 = vmatpush1.bf16.xpose.msra.mxu0 0
        %1824 = vmatprep.subr.bf16.mxu0 0
        %1825 = vmatpush1.bf16.xpose.msra.mxu0 0
        %1826 = vmatprep.subr.bf16.mxu0 0
        %1827 = vmatpush1.bf16.xpose.msra.mxu0 0
        %1828 = vmatprep.subr.bf16.mxu0 0
        %1829 = vmatpush1.bf16.xpose.msra.mxu0 0
        %1830 = vmatprep.subr.bf16.mxu0 0
        %1831 = vmatpush1.bf16.xpose.msra.mxu0 0
        %1832 = vmatprep.subr.bf16.mxu0 0
        %1833 = vmatpush1.bf16.xpose.msra.mxu0 0
        %1834 = vmatprep.subr.bf16.mxu0 0
        %1835 = vmatpush1.bf16.xpose.msra.mxu0 0
        %1836 = vmatprep.subr.bf16.mxu0 0
        %1837 = vmatpush1.bf16.xpose.msra.mxu0 0
        %1838 = vmatprep.subr.bf16.mxu0 0
        %1839 = vmatpush1.bf16.xpose.msra.mxu0 0
        %1840 = vmatprep.mubr.bf16.mxu0 0
        %1841 = vmatmul.mubr.bf16.gmra.mrb[0].mxu0 %v1803
        %v1842 = vpop.f32.mrb[0].mxu0
        %v1843 = vadd.f32 0.0, %v1842
        %v1844 = vpop.f32.mrb[0].mxu0
        %v1845 = vpop.f32.mrb[0].mxu0
        %v1846 = vpop.f32.mrb[0].mxu0
        %1847 = vdwg.mxu0
        %v1848 = vmul.f32 %v1843, 0.17677669
        %v1849 = vsel %vm850, %v1848, -inf
        %1850 = vmax.xlane.f32.xlu0 %v1849
        %v1851 = vpop.xlane.xlu0 %1850
        %v1852 = vsub.f32 %v1848, %v1851
        %v1853 = vmul.f32 %v1852, 1.442695
        %v1854 = vpow.pop %v1853
        %v1855 = vsel %vm850, %v1854, 0.0
        %1856 = vadd.xlane.f32.xlu0 %v1855
        %v1857 = vpop.xlane.xlu0 %1856
        %v1858 = vrcp.pop %v1857
        %v1859 = vmul.f32 %v1854, %v1858
        %v1860 = vpack.c.bf16 %v1859, %v1859
        %1861 = vrot.lane.b32.xlu0 %v1578, 64
        %v1862 = vpop.permute.xlu0 %1861
        %v1864 = vsel %vm850, %v1860, 0
        %v1867 = vsel %vm866, %v1862, 0
        %1869 = vmatprep.subr.bf16.mxu0 0
        %1870 = vmatpush1.bf16.msra.mxu0 %v1867
        %1871 = vmatprep.subr.bf16.mxu0 0
        %1872 = vmatpush1.bf16.msra.mxu0 0
        %1873 = vmatprep.subr.bf16.mxu0 0
        %1874 = vmatpush1.bf16.msra.mxu0 0
        %1875 = vmatprep.subr.bf16.mxu0 0
        %1876 = vmatpush1.bf16.msra.mxu0 0
        %1877 = vmatprep.subr.bf16.mxu0 0
        %1878 = vmatpush1.bf16.msra.mxu0 0
        %1879 = vmatprep.subr.bf16.mxu0 0
        %1880 = vmatpush1.bf16.msra.mxu0 0
        %1881 = vmatprep.subr.bf16.mxu0 0
        %1882 = vmatpush1.bf16.msra.mxu0 0
        %1883 = vmatprep.subr.bf16.mxu0 0
        %1884 = vmatpush1.bf16.msra.mxu0 0
        %1885 = vmatprep.subr.bf16.mxu0 0
        %1886 = vmatpush1.bf16.msra.mxu0 0
        %1887 = vmatprep.subr.bf16.mxu0 0
        %1888 = vmatpush1.bf16.msra.mxu0 0
        %1889 = vmatprep.subr.bf16.mxu0 0
        %1890 = vmatpush1.bf16.msra.mxu0 0
        %1891 = vmatprep.subr.bf16.mxu0 0
        %1892 = vmatpush1.bf16.msra.mxu0 0
        %1893 = vmatprep.subr.bf16.mxu0 0
        %1894 = vmatpush1.bf16.msra.mxu0 0
        %1895 = vmatprep.subr.bf16.mxu0 0
        %1896 = vmatpush1.bf16.msra.mxu0 0
        %1897 = vmatprep.subr.bf16.mxu0 0
        %1898 = vmatpush1.bf16.msra.mxu0 0
        %1899 = vmatprep.subr.bf16.mxu0 0
        %1900 = vmatpush1.bf16.msra.mxu0 0
        %1901 = vmatprep.mubr.bf16.mxu0 0
        %1902 = vmatmul.mubr.bf16.gmra.mrb[0].mxu0 %v1864
        %v1903 = vpop.f32.mrb[0].mxu0
        %v1904 = vadd.f32 0.0, %v1903
        %v1905 = vpop.f32.mrb[0].mxu0
        %v1906 = vpop.f32.mrb[0].mxu0
        %v1907 = vpop.f32.mrb[0].mxu0
        %1908 = vdwg.mxu0
        %1909 = vrot.lane.b32.xlu0 %v1576, 32
        %v1910 = vpop.permute.xlu0 %1909
        %1911 = vrot.lane.b32.xlu0 %v1577, 32
        %v1912 = vpop.permute.xlu0 %1911
        %v1914 = vsel %vm801, %v1910, 0
        %v1917 = vsel %vm801, %v1912, 0
        %1919 = vmatprep.subr.bf16.mxu0 0
        %1920 = vmatpush1.bf16.xpose.msra.mxu0 %v1917
        %1921 = vmatprep.subr.bf16.mxu0 0
        %1922 = vmatpush1.bf16.xpose.msra.mxu0 0
        %1923 = vmatprep.subr.bf16.mxu0 0
        %1924 = vmatpush1.bf16.xpose.msra.mxu0 0
        %1925 = vmatprep.subr.bf16.mxu0 0
        %1926 = vmatpush1.bf16.xpose.msra.mxu0 0
        %1927 = vmatprep.subr.bf16.mxu0 0
        %1928 = vmatpush1.bf16.xpose.msra.mxu0 0
        %1929 = vmatprep.subr.bf16.mxu0 0
        %1930 = vmatpush1.bf16.xpose.msra.mxu0 0
        %1931 = vmatprep.subr.bf16.mxu0 0
        %1932 = vmatpush1.bf16.xpose.msra.mxu0 0
        %1933 = vmatprep.subr.bf16.mxu0 0
        %1934 = vmatpush1.bf16.xpose.msra.mxu0 0
        %1935 = vmatprep.subr.bf16.mxu0 0
        %1936 = vmatpush1.bf16.xpose.msra.mxu0 0
        %1937 = vmatprep.subr.bf16.mxu0 0
        %1938 = vmatpush1.bf16.xpose.msra.mxu0 0
        %1939 = vmatprep.subr.bf16.mxu0 0
        %1940 = vmatpush1.bf16.xpose.msra.mxu0 0
        %1941 = vmatprep.subr.bf16.mxu0 0
        %1942 = vmatpush1.bf16.xpose.msra.mxu0 0
        %1943 = vmatprep.subr.bf16.mxu0 0
        %1944 = vmatpush1.bf16.xpose.msra.mxu0 0
        %1945 = vmatprep.subr.bf16.mxu0 0
        %1946 = vmatpush1.bf16.xpose.msra.mxu0 0
        %1947 = vmatprep.subr.bf16.mxu0 0
        %1948 = vmatpush1.bf16.xpose.msra.mxu0 0
        %1949 = vmatprep.subr.bf16.mxu0 0
        %1950 = vmatpush1.bf16.xpose.msra.mxu0 0
        %1951 = vmatprep.mubr.bf16.mxu0 0
        %1952 = vmatmul.mubr.bf16.gmra.mrb[0].mxu0 %v1914
        %v1953 = vpop.f32.mrb[0].mxu0
        %v1954 = vadd.f32 0.0, %v1953
        %v1955 = vpop.f32.mrb[0].mxu0
        %v1956 = vpop.f32.mrb[0].mxu0
        %v1957 = vpop.f32.mrb[0].mxu0
        %1958 = vdwg.mxu0
        %v1959 = vmul.f32 %v1954, 0.17677669
        %v1960 = vsel %vm850, %v1959, -inf
        %1961 = vmax.xlane.f32.xlu0 %v1960
        %v1962 = vpop.xlane.xlu0 %1961
        %v1963 = vsub.f32 %v1959, %v1962
        %v1964 = vmul.f32 %v1963, 1.442695
        %v1965 = vpow.pop %v1964
        %v1966 = vsel %vm850, %v1965, 0.0
        %1967 = vadd.xlane.f32.xlu0 %v1966
        %v1968 = vpop.xlane.xlu0 %1967
        %v1969 = vrcp.pop %v1968
        %v1970 = vmul.f32 %v1965, %v1969
        %v1971 = vpack.c.bf16 %v1970, %v1970
        %1972 = vrot.lane.b32.xlu0 %v1578, 32
        %v1973 = vpop.permute.xlu0 %1972
        %v1975 = vsel %vm850, %v1971, 0
        %v1978 = vsel %vm866, %v1973, 0
        %1980 = vmatprep.subr.bf16.mxu0 0
        %1981 = vmatpush1.bf16.msra.mxu0 %v1978
        %1982 = vmatprep.subr.bf16.mxu0 0
        %1983 = vmatpush1.bf16.msra.mxu0 0
        %1984 = vmatprep.subr.bf16.mxu0 0
        %1985 = vmatpush1.bf16.msra.mxu0 0
        %1986 = vmatprep.subr.bf16.mxu0 0
        %1987 = vmatpush1.bf16.msra.mxu0 0
        %1988 = vmatprep.subr.bf16.mxu0 0
        %1989 = vmatpush1.bf16.msra.mxu0 0
        %1990 = vmatprep.subr.bf16.mxu0 0
        %1991 = vmatpush1.bf16.msra.mxu0 0
        %1992 = vmatprep.subr.bf16.mxu0 0
        %1993 = vmatpush1.bf16.msra.mxu0 0
        %1994 = vmatprep.subr.bf16.mxu0 0
        %1995 = vmatpush1.bf16.msra.mxu0 0
        %1996 = vmatprep.subr.bf16.mxu0 0
        %1997 = vmatpush1.bf16.msra.mxu0 0
        %1998 = vmatprep.subr.bf16.mxu0 0
        %1999 = vmatpush1.bf16.msra.mxu0 0
        %2000 = vmatprep.subr.bf16.mxu0 0
        %2001 = vmatpush1.bf16.msra.mxu0 0
        %2002 = vmatprep.subr.bf16.mxu0 0
        %2003 = vmatpush1.bf16.msra.mxu0 0
        %2004 = vmatprep.subr.bf16.mxu0 0
        %2005 = vmatpush1.bf16.msra.mxu0 0
        %2006 = vmatprep.subr.bf16.mxu0 0
        %2007 = vmatpush1.bf16.msra.mxu0 0
        %2008 = vmatprep.subr.bf16.mxu0 0
        %2009 = vmatpush1.bf16.msra.mxu0 0
        %2010 = vmatprep.subr.bf16.mxu0 0
        %2011 = vmatpush1.bf16.msra.mxu0 0
        %2012 = vmatprep.mubr.bf16.mxu0 0
        %2013 = vmatmul.mubr.bf16.gmra.mrb[0].mxu0 %v1975
        %v2014 = vpop.f32.mrb[0].mxu0
        %v2015 = vadd.f32 0.0, %v2014
        %v2016 = vpop.f32.mrb[0].mxu0
        %v2017 = vpop.f32.mrb[0].mxu0
        %v2018 = vpop.f32.mrb[0].mxu0
        %2019 = vdwg.mxu0
        %2021 = vrot.lane.b32.xlu0 %v1793, 32
        %v2022 = vpop.permute.xlu0 %2021
        %2025 = vrot.lane.b32.xlu0 %v1904, 64
        %v2026 = vpop.permute.xlu0 %2025
        %2029 = vrot.lane.b32.xlu0 %v2015, 96
        %v2030 = vpop.permute.xlu0 %2029
        %v2032 = vsel %vm801, %v1679, %v2022
        %v2033 = vsel %vm1262, %v2032, %v2026
        %v2034 = vsel %vm1264, %v2033, %v2030
        %v2035 = vpack.c.bf16 %v2034, %v2034
        %v2036 = vlaneseq
        %v2037 = vshrl.u32 %v2036, 7
        %v2038 = vsub.s32 1, %v2037
        %v2039 = vrot.slane %v580, %v2038
        %v2040 = vunpack.c.h.b16 %v500
        %v2041 = vunpack.c.h.b16 %v502
        %v2042 = vunpack.c.h.b16 %v504
        %v2043 = vunpack.c.h.b16 %v506
        %v2044 = vunpack.c.h.b16 %v508
        %v2045 = vunpack.c.h.b16 %v510
        %v2046 = vunpack.c.h.b16 %v512
        %v2047 = vunpack.c.h.b16 %v514
        %v2048 = vunpack.c.h.b16 %v516
        %v2049 = vunpack.c.h.b16 %v518
        %v2050 = vunpack.c.h.b16 %v520
        %v2051 = vunpack.c.h.b16 %v522
        %v2052 = vunpack.c.h.b16 %v524
        %v2053 = vunpack.c.h.b16 %v526
        %v2054 = vunpack.c.h.b16 %v528
        %v2055 = vunpack.c.h.b16 %v530
        %v2056 = vpack.c.b16 %v2041, %v2040
        %v2057 = vpack.c.b16 %v2043, %v2042
        %v2058 = vpack.c.b16 %v2045, %v2044
        %v2059 = vpack.c.b16 %v2047, %v2046
        %v2060 = vpack.c.b16 %v2049, %v2048
        %v2061 = vpack.c.b16 %v2051, %v2050
        %v2062 = vpack.c.b16 %v2053, %v2052
        %v2063 = vpack.c.b16 %v2055, %v2054
        %2072 = vmatprep.subr.bf16.mxu0 0
        %2073 = vmatpush1.bf16.msra.mxu0 %v2056
        %2074 = vmatprep.subr.bf16.mxu0 0
        %2075 = vmatpush1.bf16.msra.mxu0 %v2057
        %2076 = vmatprep.subr.bf16.mxu0 0
        %2077 = vmatpush1.bf16.msra.mxu0 %v2058
        %2078 = vmatprep.subr.bf16.mxu0 0
        %2079 = vmatpush1.bf16.msra.mxu0 %v2059
        %2080 = vmatprep.subr.bf16.mxu0 0
        %2081 = vmatpush1.bf16.msra.mxu0 %v2060
        %2082 = vmatprep.subr.bf16.mxu0 0
        %2083 = vmatpush1.bf16.msra.mxu0 %v2061
        %2084 = vmatprep.subr.bf16.mxu0 0
        %2085 = vmatpush1.bf16.msra.mxu0 %v2062
        %2086 = vmatprep.subr.bf16.mxu0 0
        %2087 = vmatpush1.bf16.msra.mxu0 %v2063
        %2088 = vmatprep.subr.bf16.mxu0 0
        %2089 = vmatpush1.bf16.msra.mxu0 0
        %2090 = vmatprep.subr.bf16.mxu0 0
        %2091 = vmatpush1.bf16.msra.mxu0 0
        %2092 = vmatprep.subr.bf16.mxu0 0
        %2093 = vmatpush1.bf16.msra.mxu0 0
        %2094 = vmatprep.subr.bf16.mxu0 0
        %2095 = vmatpush1.bf16.msra.mxu0 0
        %2096 = vmatprep.subr.bf16.mxu0 0
        %2097 = vmatpush1.bf16.msra.mxu0 0
        %2098 = vmatprep.subr.bf16.mxu0 0
        %2099 = vmatpush1.bf16.msra.mxu0 0
        %2100 = vmatprep.subr.bf16.mxu0 0
        %2101 = vmatpush1.bf16.msra.mxu0 0
        %2102 = vmatprep.subr.bf16.mxu0 0
        %2103 = vmatpush1.bf16.msra.mxu0 0
        %2104 = vmatprep.mubr.bf16.mxu0 0
        %2105 = vmatmul.mubr.bf16.gmra.mrb[0].mxu0 %v2035
        %v2106 = vpop.f32.mrb[0].mxu0
        %v2107 = vadd.f32 %v2039, %v2106
        %v2108 = vpop.f32.mrb[0].mxu0
        %v2109 = vpop.f32.mrb[0].mxu0
        %v2110 = vpop.f32.mrb[0].mxu0
        %2111 = vdwg.mxu0
        %v2112 = vadd.f32 %v2107, %v1365
        %2113 = vadd.xlane.f32.xlu0 %v2112
        %v2114 = vpop.xlane.xlu0 %2113
        %v2115 = vmul.f32 %v2114, %v1346
        %v2116 = vsub.f32 %v2112, %v2115
        %v2117 = vmul.f32 %v2116, %v2116
        %2118 = vadd.xlane.f32.xlu0 %v2117
        %v2119 = vpop.xlane.xlu0 %2118
        %v2120 = vmul.f32 %v2119, %v1346
        %v2121 = vadd.f32 %v2120, 1e-05
        %v2122 = vrsqrt.pop %v2121
        %v2123 = vmul.f32 %v2116, %v2122
        %v2124 = vlaneseq
        %v2125 = vshrl.u32 %v2124, 7
        %v2126 = vsub.s32 5, %v2125
        %v2127 = vrot.slane %v580, %v2126
        %v2128 = vmul.f32 %v2123, %v2127
        %v2129 = vlaneseq
        %v2130 = vshrl.u32 %v2129, 7
        %v2131 = vsub.s32 6, %v2130
        %v2132 = vrot.slane %v580, %v2131
        %v2133 = vadd.f32 %v2128, %v2132
        %v2134 = vpack.c.bf16 %v2133, %v2133
        %v2136 = vlaneseq
        %v2137 = vshrl.u32 %v2136, 7
        %v2138 = vsub.s32 0, %v2137
        %v2139 = vrot.slane %v579, %v2138
        %v2140 = vlaneseq
        %v2141 = vshrl.u32 %v2140, 7
        %v2142 = vsub.s32 1, %v2141
        %v2143 = vrot.slane %v579, %v2142
        %v2162 = vunpack.c.l.b16 %v531
        %v2163 = vunpack.c.h.b16 %v531
        %v2164 = vunpack.c.l.b16 %v532
        %v2165 = vunpack.c.h.b16 %v532
        %v2166 = vunpack.c.l.b16 %v533
        %v2167 = vunpack.c.h.b16 %v533
        %v2168 = vunpack.c.l.b16 %v534
        %v2169 = vunpack.c.h.b16 %v534
        %v2170 = vunpack.c.l.b16 %v535
        %v2171 = vunpack.c.h.b16 %v535
        %v2172 = vunpack.c.l.b16 %v536
        %v2173 = vunpack.c.h.b16 %v536
        %v2174 = vunpack.c.l.b16 %v537
        %v2175 = vunpack.c.h.b16 %v537
        %v2176 = vunpack.c.l.b16 %v538
        %v2177 = vunpack.c.h.b16 %v538
        %v2178 = vunpack.c.l.b16 %v539
        %v2179 = vunpack.c.h.b16 %v539
        %v2180 = vunpack.c.l.b16 %v540
        %v2181 = vunpack.c.h.b16 %v540
        %v2182 = vunpack.c.l.b16 %v541
        %v2183 = vunpack.c.h.b16 %v541
        %v2184 = vunpack.c.l.b16 %v542
        %v2185 = vunpack.c.h.b16 %v542
        %v2186 = vunpack.c.l.b16 %v543
        %v2187 = vunpack.c.h.b16 %v543
        %v2188 = vunpack.c.l.b16 %v544
        %v2189 = vunpack.c.h.b16 %v544
        %v2190 = vunpack.c.l.b16 %v545
        %v2191 = vunpack.c.h.b16 %v545
        %v2192 = vunpack.c.l.b16 %v546
        %v2193 = vunpack.c.h.b16 %v546
        %v2194 = vpack.c.b16 %v2164, %v2162
        %v2195 = vpack.c.b16 %v2165, %v2163
        %v2196 = vpack.c.b16 %v2168, %v2166
        %v2197 = vpack.c.b16 %v2169, %v2167
        %v2198 = vpack.c.b16 %v2172, %v2170
        %v2199 = vpack.c.b16 %v2173, %v2171
        %v2200 = vpack.c.b16 %v2176, %v2174
        %v2201 = vpack.c.b16 %v2177, %v2175
        %v2202 = vpack.c.b16 %v2180, %v2178
        %v2203 = vpack.c.b16 %v2181, %v2179
        %v2204 = vpack.c.b16 %v2184, %v2182
        %v2205 = vpack.c.b16 %v2185, %v2183
        %v2206 = vpack.c.b16 %v2188, %v2186
        %v2207 = vpack.c.b16 %v2189, %v2187
        %v2208 = vpack.c.b16 %v2192, %v2190
        %v2209 = vpack.c.b16 %v2193, %v2191
        %2226 = vmatprep.subr.bf16.mxu0 %v2195
        %2227 = vmatpush1.bf16.msra.mxu0 %v2194
        %2228 = vmatprep.subr.bf16.mxu0 %v2197
        %2229 = vmatpush1.bf16.msra.mxu0 %v2196
        %2230 = vmatprep.subr.bf16.mxu0 %v2199
        %2231 = vmatpush1.bf16.msra.mxu0 %v2198
        %2232 = vmatprep.subr.bf16.mxu0 %v2201
        %2233 = vmatpush1.bf16.msra.mxu0 %v2200
        %2234 = vmatprep.subr.bf16.mxu0 %v2203
        %2235 = vmatpush1.bf16.msra.mxu0 %v2202
        %2236 = vmatprep.subr.bf16.mxu0 %v2205
        %2237 = vmatpush1.bf16.msra.mxu0 %v2204
        %2238 = vmatprep.subr.bf16.mxu0 %v2207
        %2239 = vmatpush1.bf16.msra.mxu0 %v2206
        %2240 = vmatprep.subr.bf16.mxu0 %v2209
        %2241 = vmatpush1.bf16.msra.mxu0 %v2208
        %2242 = vmatprep.subr.bf16.mxu0 0
        %2243 = vmatpush1.bf16.msra.mxu0 0
        %2244 = vmatprep.subr.bf16.mxu0 0
        %2245 = vmatpush1.bf16.msra.mxu0 0
        %2246 = vmatprep.subr.bf16.mxu0 0
        %2247 = vmatpush1.bf16.msra.mxu0 0
        %2248 = vmatprep.subr.bf16.mxu0 0
        %2249 = vmatpush1.bf16.msra.mxu0 0
        %2250 = vmatprep.subr.bf16.mxu0 0
        %2251 = vmatpush1.bf16.msra.mxu0 0
        %2252 = vmatprep.subr.bf16.mxu0 0
        %2253 = vmatpush1.bf16.msra.mxu0 0
        %2254 = vmatprep.subr.bf16.mxu0 0
        %2255 = vmatpush1.bf16.msra.mxu0 0
        %2256 = vmatprep.subr.bf16.mxu0 0
        %2257 = vmatpush1.bf16.msra.mxu0 0
        %2258 = vmatprep.mubr.bf16.mxu0 0
        %2259 = vmatmul.mubr.bf16.gmra.mrb[0].mxu0 %v2134
        %v2260 = vpop.f32.mrb[0].mxu0
        %v2261 = vadd.f32 %v2139, %v2260
        %v2262 = vpop.f32.mrb[0].mxu0
        %v2263 = vadd.f32 %v2143, %v2262
        %v2264 = vpop.f32.mrb[0].mxu0
        %v2265 = vpop.f32.mrb[0].mxu0
        %2266 = vdwg.mxu0
        %v2267 = vmax.f32 %v2261, 0.0
        %v2268 = vmax.f32 %v2263, 0.0
        %v2269 = vpack.c.bf16 %v2267, %v2267
        %v2270 = vpack.c.bf16 %v2268, %v2268
        %v2271 = vlaneseq
        %v2272 = vshrl.u32 %v2271, 7
        %v2273 = vsub.s32 2, %v2272
        %v2274 = vrot.slane %v580, %v2273
        %v2307 = vunpack.c.l.b16 %v547
        %v2308 = vunpack.c.l.b16 %v548
        %v2309 = vunpack.c.l.b16 %v549
        %v2310 = vunpack.c.l.b16 %v550
        %v2311 = vunpack.c.l.b16 %v551
        %v2312 = vunpack.c.l.b16 %v552
        %v2313 = vunpack.c.l.b16 %v553
        %v2314 = vunpack.c.l.b16 %v554
        %v2315 = vunpack.c.l.b16 %v555
        %v2316 = vunpack.c.l.b16 %v556
        %v2317 = vunpack.c.l.b16 %v557
        %v2318 = vunpack.c.l.b16 %v558
        %v2319 = vunpack.c.l.b16 %v559
        %v2320 = vunpack.c.l.b16 %v560
        %v2321 = vunpack.c.l.b16 %v561
        %v2322 = vunpack.c.l.b16 %v562
        %v2323 = vunpack.c.l.b16 %v563
        %v2324 = vunpack.c.l.b16 %v564
        %v2325 = vunpack.c.l.b16 %v565
        %v2326 = vunpack.c.l.b16 %v566
        %v2327 = vunpack.c.l.b16 %v567
        %v2328 = vunpack.c.l.b16 %v568
        %v2329 = vunpack.c.l.b16 %v569
        %v2330 = vunpack.c.l.b16 %v570
        %v2331 = vunpack.c.l.b16 %v571
        %v2332 = vunpack.c.l.b16 %v572
        %v2333 = vunpack.c.l.b16 %v573
        %v2334 = vunpack.c.l.b16 %v574
        %v2335 = vunpack.c.l.b16 %v575
        %v2336 = vunpack.c.l.b16 %v576
        %v2337 = vunpack.c.l.b16 %v577
        %v2338 = vunpack.c.l.b16 %v578
        %v2339 = vpack.c.b16 %v2308, %v2307
        %v2340 = vpack.c.b16 %v2310, %v2309
        %v2341 = vpack.c.b16 %v2312, %v2311
        %v2342 = vpack.c.b16 %v2314, %v2313
        %v2343 = vpack.c.b16 %v2316, %v2315
        %v2344 = vpack.c.b16 %v2318, %v2317
        %v2345 = vpack.c.b16 %v2320, %v2319
        %v2346 = vpack.c.b16 %v2322, %v2321
        %v2347 = vpack.c.b16 %v2324, %v2323
        %v2348 = vpack.c.b16 %v2326, %v2325
        %v2349 = vpack.c.b16 %v2328, %v2327
        %v2350 = vpack.c.b16 %v2330, %v2329
        %v2351 = vpack.c.b16 %v2332, %v2331
        %v2352 = vpack.c.b16 %v2334, %v2333
        %v2353 = vpack.c.b16 %v2336, %v2335
        %v2354 = vpack.c.b16 %v2338, %v2337
        %2371 = vmatprep.subr.bf16.mxu0 0
        %2372 = vmatpush1.bf16.msra.mxu0 %v2339
        %2373 = vmatprep.subr.bf16.mxu0 0
        %2374 = vmatpush1.bf16.msra.mxu0 %v2340
        %2375 = vmatprep.subr.bf16.mxu0 0
        %2376 = vmatpush1.bf16.msra.mxu0 %v2341
        %2377 = vmatprep.subr.bf16.mxu0 0
        %2378 = vmatpush1.bf16.msra.mxu0 %v2342
        %2379 = vmatprep.subr.bf16.mxu0 0
        %2380 = vmatpush1.bf16.msra.mxu0 %v2343
        %2381 = vmatprep.subr.bf16.mxu0 0
        %2382 = vmatpush1.bf16.msra.mxu0 %v2344
        %2383 = vmatprep.subr.bf16.mxu0 0
        %2384 = vmatpush1.bf16.msra.mxu0 %v2345
        %2385 = vmatprep.subr.bf16.mxu0 0
        %2386 = vmatpush1.bf16.msra.mxu0 %v2346
        %2387 = vmatprep.subr.bf16.mxu0 0
        %2388 = vmatpush1.bf16.msra.mxu0 %v2347
        %2389 = vmatprep.subr.bf16.mxu0 0
        %2390 = vmatpush1.bf16.msra.mxu0 %v2348
        %2391 = vmatprep.subr.bf16.mxu0 0
        %2392 = vmatpush1.bf16.msra.mxu0 %v2349
        %2393 = vmatprep.subr.bf16.mxu0 0
        %2394 = vmatpush1.bf16.msra.mxu0 %v2350
        %2395 = vmatprep.subr.bf16.mxu0 0
        %2396 = vmatpush1.bf16.msra.mxu0 %v2351
        %2397 = vmatprep.subr.bf16.mxu0 0
        %2398 = vmatpush1.bf16.msra.mxu0 %v2352
        %2399 = vmatprep.subr.bf16.mxu0 0
        %2400 = vmatpush1.bf16.msra.mxu0 %v2353
        %2401 = vmatprep.subr.bf16.mxu0 0
        %2402 = vmatpush1.bf16.msra.mxu0 %v2354
        %2403 = vmatprep.mubr.bf16.mxu0 %v2270
        %2404 = vmatmul.mubr.bf16.gmra.mrb[0].mxu0 %v2269
        %v2405 = vpop.f32.mrb[0].mxu0
        %v2406 = vadd.f32 %v2274, %v2405
        %v2407 = vpop.f32.mrb[0].mxu0
        %v2408 = vpop.f32.mrb[0].mxu0
        %v2409 = vpop.f32.mrb[0].mxu0
        %2410 = vdwg.mxu0
        %v2411 = vadd.f32 %v2406, %v2133
        %2412 = vadd.xlane.f32.xlu0 %v2411
        %v2413 = vpop.xlane.xlu0 %2412
        %v2414 = vmul.f32 %v2413, %v1346
        %v2415 = vsub.f32 %v2411, %v2414
        %v2416 = vmul.f32 %v2415, %v2415
        %2417 = vadd.xlane.f32.xlu0 %v2416
        %v2418 = vpop.xlane.xlu0 %2417
        %v2419 = vmul.f32 %v2418, %v1346
        %v2420 = vadd.f32 %v2419, 1e-05
        %v2421 = vrsqrt.pop %v2420
        %v2422 = vmul.f32 %v2415, %v2421
        %v2423 = vlaneseq
        %v2424 = vshrl.u32 %v2423, 7
        %v2425 = vsub.s32 7, %v2424
        %v2426 = vrot.slane %v580, %v2425
        %v2427 = vmul.f32 %v2422, %v2426
        %v2428 = vlaneseq
        %v2429 = vshrl.u32 %v2428, 7
        %v2430 = vsub.s32 0, %v2429
        %v2431 = vrot.slane %v581, %v2430
        %v2432 = vadd.f32 %v2427, %v2431
        %2433 = vst [vmem:[#allocation2] sm:$0xff] %v2432
        %p2434 = scmp.eq.s32.totalorder %s32, 1
        // Predicated region
        $region65: #{tpu_custom_call.1} parent=47 // pred_check
          %p2435 = pneg %p2434
        $region66: #{tpu_custom_call.1} parent=47 // pred_check_branch
          %2437 = sbr.rel (%p2435) target = $region68
        $region67: #{tpu_custom_call.1} parent=47 // pred_region
          %2438 = vst [vmem:[%s439] sm:$0xff] %v2432
        $region68: #{tpu_custom_call.1} parent=47 // pred_fallthru
          _
        %s2439 = sand.u32 %s229, 1
        %s2440 = scalar_lea.sflag [#allocation5], %s2439
        %s2441 = sand.u32 %s229, 1
        %s2442 = smul.addr %s2441, 8
        %s2443 = scalar_lea.vmem [#allocation9], %s2442
        // Predicated region
        $region69: #{tpu_custom_call.1} parent=47 // pred_check
          %p2444 = pneg %p239
        $region70: #{tpu_custom_call.1} parent=47 // pred_check_branch
          %2446 = sbr.rel (%p2444) target = $region72
        $region71: #{tpu_custom_call.1} parent=47 // pred_region
          %s2448 = ssub.s32 128, 128
          %2449 = vsyncadd %s2440, %s2448
          %s2450 = smul.addr %s31, 128
          %s2451 = scalar_lea.hbm %s7, %s2450
          %s2453 = sshll.u32 %s2443, 4
          %s2454 = int_to_ptr.vmem [resolvable:$true] %s2453
          %2456 = dma.vmem_to_hbm [thread:$0]  %s2454, 128, %s2451, %s2440
        $region72: #{tpu_custom_call.1} parent=47 // pred_fallthru
          _
      $region48: #{tpu_custom_call.1} parent=5 // pred_fallthru
        _
      %p2457 = scmp.le.s32.totalorder 2, %s22
      // Predicated region
      $region73: #{tpu_custom_call.1} parent=5 // pred_check
        %p2458 = pneg %p2457
      $region74: #{tpu_custom_call.1} parent=5 // pred_check_branch
        %2460 = sbr.rel (%p2458) target = $region76
      $region75: #{tpu_custom_call.1} parent=5 // pred_region
        %s2461 = ssub.s32 %s22, 2
        // Predicated region
        $region77: #{tpu_custom_call.1} parent=75 // pred_check
          %p2462 = pneg %p245
        $region78: #{tpu_custom_call.1} parent=75 // pred_check_branch
          %2464 = sbr.rel (%p2462) target = $region80
        $region79: #{tpu_custom_call.1} parent=75 // pred_region
          %s2465 = sand.u32 %s230, 1
          %s2466 = scalar_lea.sflag [#allocation5], %s2465
          %s2467 = sand.u32 %s230, 1
          %s2468 = smul.addr %s2467, 8
          %s2469 = scalar_lea.vmem [#allocation9], %s2468
          %2470 = dma.done %s2466, 128
        $region80: #{tpu_custom_call.1} parent=75 // pred_fallthru
          _
      $region76: #{tpu_custom_call.1} parent=5 // pred_fallthru
        _
    $region6: #{tpu_custom_call.1} parent=1 // loop_footer
      %s26 = sadd.s32 1, %s22
    $region7: #{tpu_custom_call.1} parent=1 // loop_footer_branch
      %21 = sbr.rel target = $region3
    $region8: #{tpu_custom_call.1} parent=1 // loop_exit
      _
    %2471 = vsyncpa [#allocation4], 1
    %s2472 = scalar_lea.sflag [#allocation4], 1
    %2473 = vsyncpa %s2472, 1
    %2474 = vsyncpa [#allocation7], 1
    %s2475 = scalar_lea.sflag [#allocation7], 1
    %2476 = vsyncpa %s2475, 1
    %2477 = vsyncpa [#allocation5], 1
    %s2478 = scalar_lea.sflag [#allocation5], 1
    %2479 = vsyncpa %s2478, 1

</llo_original>
